<compile_context>
chip_gen: v7x
topology: tpu7x:2x2x1
jax: 0.10.0
libtpu: 0.0.40
codegen_flags: <defaults>
</compile_context>

<pallas_src>
import jax
import jax.numpy as jnp
from jax.experimental import pallas as pl
from jax.experimental.pallas import tpu as pltpu

EPS = 1e-5


def resnet_block_kernel(x_ref, w1_ref, b1_ref, w2_ref, b2_ref, o_ref):
    # x_ref : (1, H, W, C)  one sample per grid step, f32
    # w*_ref: (9*C, C)      bf16, (kh, kw, cin)-major rows
    # b*_ref: (1, C)        f32
    H, W, C = x_ref.shape[1], x_ref.shape[2], x_ref.shape[3]
    x = x_ref[0].astype(jnp.float32)  # (H, W, C)

    def reflect_pad1(t):
        # ReflectionPad2d(1): top pad = row 1, bottom pad = row H-2 (same for cols).
        t = jnp.concatenate([t[1:2], t, t[H - 2:H - 1]], axis=0)
        t = jnp.concatenate([t[:, 1:2], t, t[:, W - 2:W - 1]], axis=1)
        return t  # (H+2, W+2, C)

    def conv3x3(t_hwc, w_ref, b_ref):
        # im2col: one (H*W, 9C) x (9C, C) matmul on the MXU, bf16 in / f32 acc.
        p = reflect_pad1(t_hwc)
        slab = jnp.concatenate(
            [p[kh:kh + H, kw:kw + W, :] for kh in range(3) for kw in range(3)],
            axis=-1,
        ).reshape(H * W, 9 * C).astype(jnp.bfloat16)
        y = jnp.dot(slab, w_ref[...], preferred_element_type=jnp.float32)
        return y + b_ref[0][None, :]  # (H*W, C), f32

    def instance_norm(t_flat):
        # InstanceNorm2d: per-channel stats over spatial dims, biased variance.
        # Fused: center once, reuse for variance and normalization.
        mu = jnp.mean(t_flat, axis=0, keepdims=True)
        centered = t_flat - mu
        var = jnp.mean(centered * centered, axis=0, keepdims=True)
        return centered * jax.lax.rsqrt(var + EPS)

    h = instance_norm(conv3x3(x, w1_ref, b1_ref))
    h = jnp.maximum(h, 0.0)                       # ReLU
    # TODO(synk): use_dropout=False configuration; Dropout(0.5) branch omitted.
    h = instance_norm(conv3x3(h.reshape(H, W, C), w2_ref, b2_ref))

    out = x.reshape(H * W, C) + h                 # residual add (f32 skip path)
    o_ref[0] = out.reshape(H, W, C).astype(o_ref.dtype)


def resnet_block_pallas(x_nchw, w1_oihw, b1, w2_oihw, b2):
    B, C, H, W = x_nchw.shape
    x_nhwc = jnp.transpose(x_nchw, (0, 2, 3, 1))             # NCHW -> NHWC
    # OIHW -> HWIO -> (9*Cin, Cout), bf16 so the MXU runs native.
    w1 = jnp.transpose(w1_oihw, (2, 3, 1, 0)).reshape(9 * C, C).astype(jnp.bfloat16)
    w2 = jnp.transpose(w2_oihw, (2, 3, 1, 0)).reshape(9 * C, C).astype(jnp.bfloat16)
    b1_2d = b1.reshape(1, C).astype(jnp.float32)
    b2_2d = b2.reshape(1, C).astype(jnp.float32)

    # Rough per-grid-step VMEM footprint (double-buffered I/O, padded tensor,
    # f32 + bf16 im2col slabs, f32 temporaries, weights) with 2x headroom.
    per_step = (
        4 * H * W * C * 4                 # in/out blocks, double-buffered
        + 4 * (H + 2) * (W + 2) * C       # reflect-padded tensor
        + (4 + 2) * H * W * 9 * C         # im2col slab (f32 build + bf16 copy)
        + 4 * H * W * C * 4               # conv out / IN temporaries
        + 2 * 2 * 9 * C * C + 4 * 2 * C   # weights + biases (double-buffered)
    )
    vmem_limit = int(min(96 * 2**20, max(2 * per_step, 8 * 2**20)))

    out_nhwc = pl.pallas_call(
        resnet_block_kernel,
        out_shape=jax.ShapeDtypeStruct((B, H, W, C), x_nhwc.dtype),
        grid=(B,),
        in_specs=[
            pl.BlockSpec((1, H, W, C), lambda b: (b, 0, 0, 0)),
            pl.BlockSpec((9 * C, C), lambda b: (0, 0)),
            pl.BlockSpec((1, C), lambda b: (0, 0)),
            pl.BlockSpec((9 * C, C), lambda b: (0, 0)),
            pl.BlockSpec((1, C), lambda b: (0, 0)),
        ],
        out_specs=pl.BlockSpec((1, H, W, C), lambda b: (b, 0, 0, 0)),
        compiler_params=pltpu.CompilerParams(
            dimension_semantics=("parallel",),
            vmem_limit_bytes=vmem_limit,
        ),
    )(x_nhwc, w1, b1_2d, w2, b2_2d)

    return jnp.transpose(out_nhwc, (0, 3, 1, 2))              # NHWC -> NCHW


def ref_forward_nchw(x_nchw, w1_oihw, b1, w2_oihw, b2):
    # Pure-JAX f32 reference (NHWC internally) matching the PyTorch module.
    x = jnp.transpose(x_nchw, (0, 2, 3, 1))
    w1 = jnp.transpose(w1_oihw, (2, 3, 1, 0))
    w2 = jnp.transpose(w2_oihw, (2, 3, 1, 0))

    def conv(t, w, b):
        t = jnp.pad(t, ((0, 0), (1, 1), (1, 1), (0, 0)), mode="reflect")
        y = jax.lax.conv_general_dilated(
            t, w, window_strides=(1, 1), padding="VALID",
            dimension_numbers=("NHWC", "HWIO", "NHWC"))
        return y + b[None, None, None, :]

    def inorm(t):
        mu = jnp.mean(t, axis=(1, 2), keepdims=True)
        var = jnp.mean((t - mu) ** 2, axis=(1, 2), keepdims=True)
        return (t - mu) / jnp.sqrt(var + EPS)

    h = jnp.maximum(inorm(conv(x, w1, b1)), 0.0)
    h = inorm(conv(h, w2, b2))
    out = x + h
    return jnp.transpose(out, (0, 3, 1, 2))


if __name__ == "__main__":
    B, C, H, W = 2, 4, 16, 16  # dim = 4
    key = jax.random.PRNGKey(0)
    kx, kw1, kb1, kw2, kb2 = jax.random.split(key, 5)

    x = jax.random.normal(kx, (B, C, H, W), dtype=jnp.float32)
    # Conv2d(dim, dim, kernel_size=3, bias=True) parameter shapes: (C, C, 3, 3), (C,)
    w1 = jax.random.normal(kw1, (C, C, 3, 3), dtype=jnp.float32) * 0.1
    b1 = jax.random.normal(kb1, (C,), dtype=jnp.float32) * 0.1
    w2 = jax.random.normal(kw2, (C, C, 3, 3), dtype=jnp.float32) * 0.1
    b2 = jax.random.normal(kb2, (C,), dtype=jnp.float32) * 0.1

    out = resnet_block_pallas(x, w1, b1, w2, b2)
    out = jax.block_until_ready(out)

    ref = jax.block_until_ready(ref_forward_nchw(x, w1, b1, w2, b2))

    assert out.shape == (B, C, H, W)
    # bf16 matmul inputs (f32 accumulation) -> loosened tolerance vs f32 reference.
    assert jnp.allclose(out, ref, rtol=5e-2, atol=5e-2), (
        f"max abs err = {jnp.max(jnp.abs(out - ref))}")

    print("KERNEL_OK")
</pallas_src>

<mosaic_0001>
module attributes {stable_mosaic.version = 11 : i64} {
  func.func @resnet_block_kernel(%arg0: i32, %arg1: memref<1x16x16x4xf32, #tpu.memory_space<vmem>>, %arg2: memref<36x4xbf16, #tpu.memory_space<vmem>>, %arg3: memref<1x4xf32, #tpu.memory_space<vmem>>, %arg4: memref<36x4xbf16, #tpu.memory_space<vmem>>, %arg5: memref<1x4xf32, #tpu.memory_space<vmem>>, %arg6: memref<1x16x16x4xf32, #tpu.memory_space<vmem>>) attributes {dimension_semantics = [#tpu.dimension_semantics<parallel>], iteration_bounds = array<i64: 2>, scalar_prefetch = 0 : i64, scratch_operands = 0 : i64, tpu.core_type = #tpu.core_type<tc>, window_params = [{transform_indices = @transform_0, window_bounds = array<i64: 1, 16, 16, 4>}, {pipeline_mode = #tpu.pipeline_mode<synchronous>, transform_indices = @transform_1, window_bounds = array<i64: 36, 4>}, {pipeline_mode = #tpu.pipeline_mode<synchronous>, transform_indices = @transform_2, window_bounds = array<i64: 1, 4>}, {pipeline_mode = #tpu.pipeline_mode<synchronous>, transform_indices = @transform_3, window_bounds = array<i64: 36, 4>}, {pipeline_mode = #tpu.pipeline_mode<synchronous>, transform_indices = @transform_4, window_bounds = array<i64: 1, 4>}, {transform_indices = @transform_5, window_bounds = array<i64: 1, 16, 16, 4>}]} {
    %c0 = arith.constant 0 : index
    %c0_0 = arith.constant 0 : index
    %c0_1 = arith.constant 0 : index
    %c0_2 = arith.constant 0 : index
    %0 = vector.load %arg1[%c0, %c0_0, %c0_1, %c0_2] : memref<1x16x16x4xf32, #tpu.memory_space<vmem>>, vector<1x16x16x4xf32>
    %1 = vector.shape_cast %0 : vector<1x16x16x4xf32> to vector<16x16x4xf32>
    %2 = vector.extract_strided_slice %1 {offsets = [1, 0, 0], sizes = [1, 16, 4], strides = [1, 1, 1]} : vector<16x16x4xf32> to vector<1x16x4xf32>
    %3 = vector.extract_strided_slice %1 {offsets = [14, 0, 0], sizes = [1, 16, 4], strides = [1, 1, 1]} : vector<16x16x4xf32> to vector<1x16x4xf32>
    %4 = tpu.concatenate %2, %1, %3 in 0 : vector<1x16x4xf32>, vector<16x16x4xf32>, vector<1x16x4xf32> -> vector<18x16x4xf32>
    %5 = vector.extract_strided_slice %4 {offsets = [0, 1, 0], sizes = [18, 1, 4], strides = [1, 1, 1]} : vector<18x16x4xf32> to vector<18x1x4xf32>
    %6 = vector.extract_strided_slice %4 {offsets = [0, 14, 0], sizes = [18, 1, 4], strides = [1, 1, 1]} : vector<18x16x4xf32> to vector<18x1x4xf32>
    %7 = tpu.concatenate %5, %4, %6 in 1 : vector<18x1x4xf32>, vector<18x16x4xf32>, vector<18x1x4xf32> -> vector<18x18x4xf32>
    %8 = vector.extract_strided_slice %7 {offsets = [0, 0, 0], sizes = [16, 16, 4], strides = [1, 1, 1]} : vector<18x18x4xf32> to vector<16x16x4xf32>
    %9 = vector.extract_strided_slice %7 {offsets = [0, 1, 0], sizes = [16, 16, 4], strides = [1, 1, 1]} : vector<18x18x4xf32> to vector<16x16x4xf32>
    %10 = vector.extract_strided_slice %7 {offsets = [0, 2, 0], sizes = [16, 16, 4], strides = [1, 1, 1]} : vector<18x18x4xf32> to vector<16x16x4xf32>
    %11 = vector.extract_strided_slice %7 {offsets = [1, 0, 0], sizes = [16, 16, 4], strides = [1, 1, 1]} : vector<18x18x4xf32> to vector<16x16x4xf32>
    %12 = vector.extract_strided_slice %7 {offsets = [1, 1, 0], sizes = [16, 16, 4], strides = [1, 1, 1]} : vector<18x18x4xf32> to vector<16x16x4xf32>
    %13 = vector.extract_strided_slice %7 {offsets = [1, 2, 0], sizes = [16, 16, 4], strides = [1, 1, 1]} : vector<18x18x4xf32> to vector<16x16x4xf32>
    %14 = vector.extract_strided_slice %7 {offsets = [2, 0, 0], sizes = [16, 16, 4], strides = [1, 1, 1]} : vector<18x18x4xf32> to vector<16x16x4xf32>
    %15 = vector.extract_strided_slice %7 {offsets = [2, 1, 0], sizes = [16, 16, 4], strides = [1, 1, 1]} : vector<18x18x4xf32> to vector<16x16x4xf32>
    %16 = vector.extract_strided_slice %7 {offsets = [2, 2, 0], sizes = [16, 16, 4], strides = [1, 1, 1]} : vector<18x18x4xf32> to vector<16x16x4xf32>
    %17 = tpu.concatenate %8, %9, %10, %11, %12, %13, %14, %15, %16 in 2 : vector<16x16x4xf32>, vector<16x16x4xf32>, vector<16x16x4xf32>, vector<16x16x4xf32>, vector<16x16x4xf32>, vector<16x16x4xf32>, vector<16x16x4xf32>, vector<16x16x4xf32>, vector<16x16x4xf32> -> vector<16x16x36xf32>
    %18 = vector.shape_cast %17 : vector<16x16x36xf32> to vector<256x36xf32>
    %19 = arith.truncf %18 : vector<256x36xf32> to vector<256x36xbf16>
    %c0_3 = arith.constant 0 : index
    %c0_4 = arith.constant 0 : index
    %20 = vector.load %arg2[%c0_3, %c0_4] : memref<36x4xbf16, #tpu.memory_space<vmem>>, vector<36x4xbf16>
    %cst = arith.constant dense<0.000000e+00> : vector<256x4xf32>
    %21 = tpu.matmul %19, %20, %cst {dimension_numbers = #tpu.dot_dimension_numbers<[1], [0], [0], [1], [0, 0, 1, 1], [], []>} : vector<256x36xbf16>, vector<36x4xbf16>, vector<256x4xf32> -> vector<256x4xf32>
    %c0_5 = arith.constant 0 : index
    %c0_6 = arith.constant 0 : index
    %22 = vector.load %arg3[%c0_5, %c0_6] : memref<1x4xf32, #tpu.memory_space<vmem>>, vector<1x4xf32>
    %23 = vector.shape_cast %22 : vector<1x4xf32> to vector<4xf32>
    %24 = vector.shape_cast %23 : vector<4xf32> to vector<1x4xf32>
    %25 = vector.broadcast %24 : vector<1x4xf32> to vector<256x4xf32>
    %26 = arith.addf %21, %25 : vector<256x4xf32>
    %cst_7 = arith.constant dense<0.000000e+00> : vector<4xf32>
    %27 = vector.multi_reduction <add>, %26, %cst_7 [0] : vector<256x4xf32> to vector<4xf32>
    %28 = vector.shape_cast %27 : vector<4xf32> to vector<1x4xf32>
    %cst_8 = arith.constant 2.560000e+02 : f32
    %29 = vector.broadcast %cst_8 : f32 to vector<1x4xf32>
    %30 = arith.divf %28, %29 : vector<1x4xf32>
    %31 = vector.broadcast %30 : vector<1x4xf32> to vector<256x4xf32>
    %32 = arith.subf %26, %31 : vector<256x4xf32>
    %33 = arith.mulf %32, %32 : vector<256x4xf32>
    %cst_9 = arith.constant dense<0.000000e+00> : vector<4xf32>
    %34 = vector.multi_reduction <add>, %33, %cst_9 [0] : vector<256x4xf32> to vector<4xf32>
    %35 = vector.shape_cast %34 : vector<4xf32> to vector<1x4xf32>
    %cst_10 = arith.constant 2.560000e+02 : f32
    %36 = vector.broadcast %cst_10 : f32 to vector<1x4xf32>
    %37 = arith.divf %35, %36 : vector<1x4xf32>
    %cst_11 = arith.constant 9.99999974E-6 : f32
    %38 = vector.broadcast %cst_11 : f32 to vector<1x4xf32>
    %39 = arith.addf %37, %38 : vector<1x4xf32>
    %40 = math.rsqrt %39 : vector<1x4xf32>
    %41 = vector.broadcast %40 : vector<1x4xf32> to vector<256x4xf32>
    %42 = arith.mulf %32, %41 : vector<256x4xf32>
    %cst_12 = arith.constant 0.000000e+00 : f32
    %43 = vector.broadcast %cst_12 : f32 to vector<256x4xf32>
    %44 = arith.maximumf %42, %43 : vector<256x4xf32>
    %45 = vector.shape_cast %44 : vector<256x4xf32> to vector<16x16x4xf32>
    %46 = vector.extract_strided_slice %45 {offsets = [1, 0, 0], sizes = [1, 16, 4], strides = [1, 1, 1]} : vector<16x16x4xf32> to vector<1x16x4xf32>
    %47 = vector.extract_strided_slice %45 {offsets = [14, 0, 0], sizes = [1, 16, 4], strides = [1, 1, 1]} : vector<16x16x4xf32> to vector<1x16x4xf32>
    %48 = tpu.concatenate %46, %45, %47 in 0 : vector<1x16x4xf32>, vector<16x16x4xf32>, vector<1x16x4xf32> -> vector<18x16x4xf32>
    %49 = vector.extract_strided_slice %48 {offsets = [0, 1, 0], sizes = [18, 1, 4], strides = [1, 1, 1]} : vector<18x16x4xf32> to vector<18x1x4xf32>
    %50 = vector.extract_strided_slice %48 {offsets = [0, 14, 0], sizes = [18, 1, 4], strides = [1, 1, 1]} : vector<18x16x4xf32> to vector<18x1x4xf32>
    %51 = tpu.concatenate %49, %48, %50 in 1 : vector<18x1x4xf32>, vector<18x16x4xf32>, vector<18x1x4xf32> -> vector<18x18x4xf32>
    %52 = vector.extract_strided_slice %51 {offsets = [0, 0, 0], sizes = [16, 16, 4], strides = [1, 1, 1]} : vector<18x18x4xf32> to vector<16x16x4xf32>
    %53 = vector.extract_strided_slice %51 {offsets = [0, 1, 0], sizes = [16, 16, 4], strides = [1, 1, 1]} : vector<18x18x4xf32> to vector<16x16x4xf32>
    %54 = vector.extract_strided_slice %51 {offsets = [0, 2, 0], sizes = [16, 16, 4], strides = [1, 1, 1]} : vector<18x18x4xf32> to vector<16x16x4xf32>
    %55 = vector.extract_strided_slice %51 {offsets = [1, 0, 0], sizes = [16, 16, 4], strides = [1, 1, 1]} : vector<18x18x4xf32> to vector<16x16x4xf32>
    %56 = vector.extract_strided_slice %51 {offsets = [1, 1, 0], sizes = [16, 16, 4], strides = [1, 1, 1]} : vector<18x18x4xf32> to vector<16x16x4xf32>
    %57 = vector.extract_strided_slice %51 {offsets = [1, 2, 0], sizes = [16, 16, 4], strides = [1, 1, 1]} : vector<18x18x4xf32> to vector<16x16x4xf32>
    %58 = vector.extract_strided_slice %51 {offsets = [2, 0, 0], sizes = [16, 16, 4], strides = [1, 1, 1]} : vector<18x18x4xf32> to vector<16x16x4xf32>
    %59 = vector.extract_strided_slice %51 {offsets = [2, 1, 0], sizes = [16, 16, 4], strides = [1, 1, 1]} : vector<18x18x4xf32> to vector<16x16x4xf32>
    %60 = vector.extract_strided_slice %51 {offsets = [2, 2, 0], sizes = [16, 16, 4], strides = [1, 1, 1]} : vector<18x18x4xf32> to vector<16x16x4xf32>
    %61 = tpu.concatenate %52, %53, %54, %55, %56, %57, %58, %59, %60 in 2 : vector<16x16x4xf32>, vector<16x16x4xf32>, vector<16x16x4xf32>, vector<16x16x4xf32>, vector<16x16x4xf32>, vector<16x16x4xf32>, vector<16x16x4xf32>, vector<16x16x4xf32>, vector<16x16x4xf32> -> vector<16x16x36xf32>
    %62 = vector.shape_cast %61 : vector<16x16x36xf32> to vector<256x36xf32>
    %63 = arith.truncf %62 : vector<256x36xf32> to vector<256x36xbf16>
    %c0_13 = arith.constant 0 : index
    %c0_14 = arith.constant 0 : index
    %64 = vector.load %arg4[%c0_13, %c0_14] : memref<36x4xbf16, #tpu.memory_space<vmem>>, vector<36x4xbf16>
    %cst_15 = arith.constant dense<0.000000e+00> : vector<256x4xf32>
    %65 = tpu.matmul %63, %64, %cst_15 {dimension_numbers = #tpu.dot_dimension_numbers<[1], [0], [0], [1], [0, 0, 1, 1], [], []>} : vector<256x36xbf16>, vector<36x4xbf16>, vector<256x4xf32> -> vector<256x4xf32>
    %c0_16 = arith.constant 0 : index
    %c0_17 = arith.constant 0 : index
    %66 = vector.load %arg5[%c0_16, %c0_17] : memref<1x4xf32, #tpu.memory_space<vmem>>, vector<1x4xf32>
    %67 = vector.shape_cast %66 : vector<1x4xf32> to vector<4xf32>
    %68 = vector.shape_cast %67 : vector<4xf32> to vector<1x4xf32>
    %69 = vector.broadcast %68 : vector<1x4xf32> to vector<256x4xf32>
    %70 = arith.addf %65, %69 : vector<256x4xf32>
    %cst_18 = arith.constant dense<0.000000e+00> : vector<4xf32>
    %71 = vector.multi_reduction <add>, %70, %cst_18 [0] : vector<256x4xf32> to vector<4xf32>
    %72 = vector.shape_cast %71 : vector<4xf32> to vector<1x4xf32>
    %cst_19 = arith.constant 2.560000e+02 : f32
    %73 = vector.broadcast %cst_19 : f32 to vector<1x4xf32>
    %74 = arith.divf %72, %73 : vector<1x4xf32>
    %75 = vector.broadcast %74 : vector<1x4xf32> to vector<256x4xf32>
    %76 = arith.subf %70, %75 : vector<256x4xf32>
    %77 = arith.mulf %76, %76 : vector<256x4xf32>
    %cst_20 = arith.constant dense<0.000000e+00> : vector<4xf32>
    %78 = vector.multi_reduction <add>, %77, %cst_20 [0] : vector<256x4xf32> to vector<4xf32>
    %79 = vector.shape_cast %78 : vector<4xf32> to vector<1x4xf32>
    %cst_21 = arith.constant 2.560000e+02 : f32
    %80 = vector.broadcast %cst_21 : f32 to vector<1x4xf32>
    %81 = arith.divf %79, %80 : vector<1x4xf32>
    %cst_22 = arith.constant 9.99999974E-6 : f32
    %82 = vector.broadcast %cst_22 : f32 to vector<1x4xf32>
    %83 = arith.addf %81, %82 : vector<1x4xf32>
    %84 = math.rsqrt %83 : vector<1x4xf32>
    %85 = vector.broadcast %84 : vector<1x4xf32> to vector<256x4xf32>
    %86 = arith.mulf %76, %85 : vector<256x4xf32>
    %87 = vector.shape_cast %1 : vector<16x16x4xf32> to vector<256x4xf32>
    %88 = arith.addf %87, %86 : vector<256x4xf32>
    %89 = vector.shape_cast %88 : vector<256x4xf32> to vector<16x16x4xf32>
    %c0_23 = arith.constant 0 : index
    %c0_24 = arith.constant 0 : index
    %c0_25 = arith.constant 0 : index
    %c0_26 = arith.constant 0 : index
    %90 = vector.load %arg6[%c0_23, %c0_24, %c0_25, %c0_26] : memref<1x16x16x4xf32, #tpu.memory_space<vmem>>, vector<1x16x16x4xf32>
    %91 = vector.shape_cast %90 : vector<1x16x16x4xf32> to vector<16x16x4xf32>
    %92 = vector.shape_cast %89 : vector<16x16x4xf32> to vector<1x16x16x4xf32>
    tpu.vector_store %arg6[%c0_23, %c0_24, %c0_25, %c0_26], %92 {strides = array<i32>} : memref<1x16x16x4xf32, #tpu.memory_space<vmem>>, vector<1x16x16x4xf32>,
    return
  }
  func.func @transform_0(%arg0: i32) -> (i32, i32, i32, i32) {
    %c0_i32 = arith.constant 0 : i32
    %c0_i32_0 = arith.constant 0 : i32
    %c0_i32_1 = arith.constant 0 : i32
    %c0_i32_2 = arith.constant 0 : i32
    return %arg0, %c0_i32, %c0_i32_0, %c0_i32_1 : i32, i32, i32, i32
  }
  func.func @transform_1(%arg0: i32) -> (i32, i32) {
    %c0_i32 = arith.constant 0 : i32
    %c0_i32_0 = arith.constant 0 : i32
    %c0_i32_1 = arith.constant 0 : i32
    return %c0_i32, %c0_i32_0 : i32, i32
  }
  func.func @transform_2(%arg0: i32) -> (i32, i32) {
    %c0_i32 = arith.constant 0 : i32
    %c0_i32_0 = arith.constant 0 : i32
    %c0_i32_1 = arith.constant 0 : i32
    return %c0_i32, %c0_i32_0 : i32, i32
  }
  func.func @transform_3(%arg0: i32) -> (i32, i32) {
    %c0_i32 = arith.constant 0 : i32
    %c0_i32_0 = arith.constant 0 : i32
    %c0_i32_1 = arith.constant 0 : i32
    return %c0_i32, %c0_i32_0 : i32, i32
  }
  func.func @transform_4(%arg0: i32) -> (i32, i32) {
    %c0_i32 = arith.constant 0 : i32
    %c0_i32_0 = arith.constant 0 : i32
    %c0_i32_1 = arith.constant 0 : i32
    return %c0_i32, %c0_i32_0 : i32, i32
  }
  func.func @transform_5(%arg0: i32) -> (i32, i32, i32, i32) {
    %c0_i32 = arith.constant 0 : i32
    %c0_i32_0 = arith.constant 0 : i32
    %c0_i32_1 = arith.constant 0 : i32
    %c0_i32_2 = arith.constant 0 : i32
    return %arg0, %c0_i32, %c0_i32_0, %c0_i32_1 : i32, i32, i32, i32
  }
}

</mosaic_0001>

<llo_original>
// kernel: tpu_custom_call.1
$region0: #{tpu_custom_call.1}
  #allocation0 [shape = 'u32[]', space=smem, size = 0x4, offset = 0x4, fixed_abs, tag = 'smem constant byte address 0x4 - core index']
  #allocation1 [shape = 'u32[144,128]{1,0:T(1,128)}', space=vmem, size = 0x12000, scoped, tag = 'internal scratch']
  %s0 = inlined_call_operand.vmem [shape: f32[2,16,16,4], index: 0, kind: input, shape index: {}]
  %s1 = inlined_call_operand.vmem [shape: bf16[36,4], index: 1, kind: input, shape index: {}]
  %s2 = inlined_call_operand.vmem [shape: f32[1,4], index: 2, kind: input, shape index: {}]
  %s3 = inlined_call_operand.vmem [shape: bf16[36,4], index: 3, kind: input, shape index: {}]
  %s4 = inlined_call_operand.vmem [shape: f32[1,4], index: 4, kind: input, shape index: {}]
  %s5 = inlined_call_operand.vmem [shape: f32[2,16,16,4], index: 5, kind: output, shape index: {}]
  %s6 = sld [smem:[#allocation0]]
  $region53: #{tpu_custom_call.1} parent=0
    _
  %s8 = ssub.s32 1, %s6
  %s9 = scalar_select 0, %s8, %s6
  loop: start=0, step=1, limit=4
  $region2: #{tpu_custom_call.1} parent=0 // loop_pre_header
    _
  $region3: #{tpu_custom_call.1} parent=0 // loop_header
    %s11 = sphi 0, %s15
    %p12 = scmp.ge.s32.totalorder %s11, 4
    %s21 = sphi 0, %s23
    %s24 = sphi 0, %s21
    %s25 = sphi 0, %s24
    %s41 = sphi 0, %s25
    %s45 = sphi 0, %s45
    %s47 = sphi 0, %s45
    %s48 = sphi 0, %s47
    %s62 = sphi 0, %s48
    %s66 = sphi 0, %s66
    %s68 = sphi 0, %s66
    %s69 = sphi 0, %s68
    %s83 = sphi 0, %s69
    %s87 = sphi 0, %s87
    %s89 = sphi 0, %s87
    %s90 = sphi 0, %s89
    %s104 = sphi 0, %s90
    %s108 = sphi 0, %s108
    %s110 = sphi 0, %s108
    %s111 = sphi 0, %s110
    %s125 = sphi 0, %s111
    %s131 = sphi 0, %s133
    %s134 = sphi 0, %s131
    %s135 = sphi 0, %s134
    %s151 = sphi 0, %s135
  $region4: #{tpu_custom_call.1} parent=0 // loop_header_branch
    %14 = sbr.rel (%p12) target = $region8
  $region5: #{tpu_custom_call.1} parent=0 // loop_body
    %s16 = ssub.s32 %s11, 1
    %s17 = ssub.s32 %s11, 2
    %s18 = sadd.s32 %s11, 1
    %s19 = ssub.s32 %s11, %s18
    %p20 = scmp.eq.s32.totalorder %s19, 0
    %s22 = sadd.s32 %s21, 1
    %s23 = scalar_select %p20, %s21, %s22
    %p26 = pneg %p20
    %p27 = scmp.eq.s32.totalorder %s11, 1
    %p28 = por %p26, %p27
    %p29 = scmp.ne.s32.totalorder %s21, %s24
    %p30 = scmp.eq.s32.totalorder %s11, 0
    %p31 = por %p29, %p30
    %p32 = scmp.ne.s32.totalorder %s21, %s24
    %p33 = scmp.eq.s32.totalorder %s16, 1
    %p34 = por %p32, %p33
    %p35 = scmp.ne.s32.totalorder %s24, %s25
    %p36 = scmp.eq.s32.totalorder %s16, 0
    %p37 = por %p35, %p36
    %p38 = scmp.ne.s32.totalorder %s24, %s25
    %p39 = scmp.eq.s32.totalorder %s17, 1
    %p40 = por %p38, %p39
    %p42 = scmp.ne.s32.totalorder %s25, %s41
    %p43 = scmp.eq.s32.totalorder %s17, 0
    %p44 = por %p42, %p43
    %s46 = sadd.s32 %s45, 1
    %p49 = scmp.eq.s32.totalorder %s11, 1
    %p50 = scmp.ne.s32.totalorder %s45, %s47
    %p51 = scmp.eq.s32.totalorder %s11, 0
    %p52 = por %p50, %p51
    %p53 = scmp.ne.s32.totalorder %s45, %s47
    %p54 = scmp.eq.s32.totalorder %s16, 1
    %p55 = por %p53, %p54
    %p56 = scmp.ne.s32.totalorder %s47, %s48
    %p57 = scmp.eq.s32.totalorder %s16, 0
    %p58 = por %p56, %p57
    %p59 = scmp.ne.s32.totalorder %s47, %s48
    %p60 = scmp.eq.s32.totalorder %s17, 1
    %p61 = por %p59, %p60
    %p63 = scmp.ne.s32.totalorder %s48, %s62
    %p64 = scmp.eq.s32.totalorder %s17, 0
    %p65 = por %p63, %p64
    %s67 = sadd.s32 %s66, 1
    %p70 = scmp.eq.s32.totalorder %s11, 1
    %p71 = scmp.ne.s32.totalorder %s66, %s68
    %p72 = scmp.eq.s32.totalorder %s11, 0
    %p73 = por %p71, %p72
    %p74 = scmp.ne.s32.totalorder %s66, %s68
    %p75 = scmp.eq.s32.totalorder %s16, 1
    %p76 = por %p74, %p75
    %p77 = scmp.ne.s32.totalorder %s68, %s69
    %p78 = scmp.eq.s32.totalorder %s16, 0
    %p79 = por %p77, %p78
    %p80 = scmp.ne.s32.totalorder %s68, %s69
    %p81 = scmp.eq.s32.totalorder %s17, 1
    %p82 = por %p80, %p81
    %p84 = scmp.ne.s32.totalorder %s69, %s83
    %p85 = scmp.eq.s32.totalorder %s17, 0
    %p86 = por %p84, %p85
    %s88 = sadd.s32 %s87, 1
    %p91 = scmp.eq.s32.totalorder %s11, 1
    %p92 = scmp.ne.s32.totalorder %s87, %s89
    %p93 = scmp.eq.s32.totalorder %s11, 0
    %p94 = por %p92, %p93
    %p95 = scmp.ne.s32.totalorder %s87, %s89
    %p96 = scmp.eq.s32.totalorder %s16, 1
    %p97 = por %p95, %p96
    %p98 = scmp.ne.s32.totalorder %s89, %s90
    %p99 = scmp.eq.s32.totalorder %s16, 0
    %p100 = por %p98, %p99
    %p101 = scmp.ne.s32.totalorder %s89, %s90
    %p102 = scmp.eq.s32.totalorder %s17, 1
    %p103 = por %p101, %p102
    %p105 = scmp.ne.s32.totalorder %s90, %s104
    %p106 = scmp.eq.s32.totalorder %s17, 0
    %p107 = por %p105, %p106
    %s109 = sadd.s32 %s108, 1
    %p112 = scmp.eq.s32.totalorder %s11, 1
    %p113 = scmp.ne.s32.totalorder %s108, %s110
    %p114 = scmp.eq.s32.totalorder %s11, 0
    %p115 = por %p113, %p114
    %p116 = scmp.ne.s32.totalorder %s108, %s110
    %p117 = scmp.eq.s32.totalorder %s16, 1
    %p118 = por %p116, %p117
    %p119 = scmp.ne.s32.totalorder %s110, %s111
    %p120 = scmp.eq.s32.totalorder %s16, 0
    %p121 = por %p119, %p120
    %p122 = scmp.ne.s32.totalorder %s110, %s111
    %p123 = scmp.eq.s32.totalorder %s17, 1
    %p124 = por %p122, %p123
    %p126 = scmp.ne.s32.totalorder %s111, %s125
    %p127 = scmp.eq.s32.totalorder %s17, 0
    %p128 = por %p126, %p127
    %s129 = ssub.s32 %s11, %s18
    %p130 = scmp.eq.s32.totalorder %s129, 0
    %s132 = sadd.s32 %s131, 1
    %s133 = scalar_select %p130, %s131, %s132
    %p136 = pneg %p130
    %p137 = scmp.eq.s32.totalorder %s11, 1
    %p138 = por %p136, %p137
    %p139 = scmp.ne.s32.totalorder %s131, %s134
    %p140 = scmp.eq.s32.totalorder %s11, 0
    %p141 = por %p139, %p140
    %p142 = scmp.ne.s32.totalorder %s131, %s134
    %p143 = scmp.eq.s32.totalorder %s16, 1
    %p144 = por %p142, %p143
    %p145 = scmp.ne.s32.totalorder %s134, %s135
    %p146 = scmp.eq.s32.totalorder %s16, 0
    %p147 = por %p145, %p146
    %p148 = scmp.ne.s32.totalorder %s134, %s135
    %p149 = scmp.eq.s32.totalorder %s17, 1
    %p150 = por %p148, %p149
    %p152 = scmp.ne.s32.totalorder %s135, %s151
    %p153 = scmp.eq.s32.totalorder %s17, 0
    %p154 = por %p152, %p153
    %p155 = scmp.le.s32.totalorder 1, %s11
    %p156 = scmp.lt.s32.totalorder %s11, 3
    %p157 = pnand %p155, %p156
    %p158 = pneg %p157
    // Predicated region
    $region9: #{tpu_custom_call.1} parent=5 // pred_check
      _
    $region10: #{tpu_custom_call.1} parent=5 // pred_check_branch
      %160 = sbr.rel (%p157) target = $region12
    $region11: #{tpu_custom_call.1} parent=5 // pred_region
      %s161 = ssub.s32 %s11, 1
      // Predicated region
      $region13: #{tpu_custom_call.1} parent=11 // pred_check
        %p162 = pneg %p58
      $region14: #{tpu_custom_call.1} parent=11 // pred_check_branch
        %164 = sbr.rel (%p162) target = $region16
      $region15: #{tpu_custom_call.1} parent=11 // pred_region
        _
      $region16: #{tpu_custom_call.1} parent=11 // pred_fallthru
        _
      // Predicated region
      $region17: #{tpu_custom_call.1} parent=11 // pred_check
        %p165 = pneg %p79
      $region18: #{tpu_custom_call.1} parent=11 // pred_check_branch
        %167 = sbr.rel (%p165) target = $region20
      $region19: #{tpu_custom_call.1} parent=11 // pred_region
        _
      $region20: #{tpu_custom_call.1} parent=11 // pred_fallthru
        _
      // Predicated region
      $region21: #{tpu_custom_call.1} parent=11 // pred_check
        %p168 = pneg %p100
      $region22: #{tpu_custom_call.1} parent=11 // pred_check_branch
        %170 = sbr.rel (%p168) target = $region24
      $region23: #{tpu_custom_call.1} parent=11 // pred_region
        _
      $region24: #{tpu_custom_call.1} parent=11 // pred_fallthru
        _
      // Predicated region
      $region25: #{tpu_custom_call.1} parent=11 // pred_check
        %p171 = pneg %p121
      $region26: #{tpu_custom_call.1} parent=11 // pred_check_branch
        %173 = sbr.rel (%p171) target = $region28
      $region27: #{tpu_custom_call.1} parent=11 // pred_region
        _
      $region28: #{tpu_custom_call.1} parent=11 // pred_fallthru
        _
    $region12: #{tpu_custom_call.1} parent=5 // pred_fallthru
      _
    %p174 = scmp.lt.s32.totalorder %s11, 2
    // Predicated region
    $region29: #{tpu_custom_call.1} parent=5 // pred_check
      %p175 = pneg %p174
    $region30: #{tpu_custom_call.1} parent=5 // pred_check_branch
      %177 = sbr.rel (%p175) target = $region32
    $region31: #{tpu_custom_call.1} parent=5 // pred_region
      // Predicated region
      $region33: #{tpu_custom_call.1} parent=31 // pred_check
        %p178 = pneg %p31
      $region34: #{tpu_custom_call.1} parent=31 // pred_check_branch
        %180 = sbr.rel (%p178) target = $region36
      $region35: #{tpu_custom_call.1} parent=31 // pred_region
        %p181 = scmp.lt.s32.totalorder %s11, 1
        %s182 = scalar_select %p181, %s11, 1
        %s183 = smul.addr %s182, 32
        %s184 = smul.addr %s183, 8
        %s185 = scalar_lea.vmem %s0, %s184
      $region36: #{tpu_custom_call.1} parent=31 // pred_fallthru
        _
    $region32: #{tpu_custom_call.1} parent=5 // pred_fallthru
      _
    %p186 = scmp.le.s32.totalorder 1, %s11
    %p187 = scmp.lt.s32.totalorder %s11, 3
    %p188 = pnand %p186, %p187
    %p189 = pneg %p188
    // Predicated region
    $region37: #{tpu_custom_call.1} parent=5 // pred_check
      _
    $region38: #{tpu_custom_call.1} parent=5 // pred_check_branch
      %191 = sbr.rel (%p188) target = $region40
    $region39: #{tpu_custom_call.1} parent=5 // pred_region
      %s192 = ssub.s32 %s11, 1
      %p193 = scmp.lt.s32.totalorder %s16, 1
      %s194 = scalar_select %p193, %s16, 1
      %s195 = smul.addr %s194, 32
      %s196 = smul.addr %s195, 8
      %s197 = scalar_lea.vmem %s0, %s196
      %p198 = pneg %p37
      %p199 = pneg %p34
      %p200 = pneg %p58
      %p201 = pneg %p55
      %p202 = pneg %p79
      %p203 = pneg %p76
      %p204 = pneg %p100
      %p205 = pneg %p97
      %p206 = pneg %p121
      %p207 = pneg %p118
      %p208 = pneg %p147
      %p209 = pneg %p144
      %p210 = scmp.lt.s32.totalorder %s16, 1
      %s211 = scalar_select %p210, %s16, 1
      %s212 = smul.addr %s211, 32
      %s213 = smul.addr %s212, 8
      %s214 = scalar_lea.vmem %s5, %s213
      %p215 = scmp.lt.s32.totalorder %s16, 1
      %s216 = scalar_select %p215, %s16, 1
      %s217 = smul.addr %s216, 32
      %s218 = smul.addr %s217, 8
      %s219 = scalar_lea.vmem %s0, %s218
      %p220 = scmp.lt.s32.totalorder %s16, 1
      %s221 = scalar_select %p220, %s16, 1
      %s222 = smul.addr %s221, 32
      %s223 = smul.addr %s222, 8
      %s224 = scalar_lea.vmem %s5, %s223
      %v226 = vld [vmem:[%s219] sm:$0xff]
      %v227 = vld [vmem:[%s219 + $0x8] sm:$0xff]
      %v228 = vld [vmem:[%s219 + $0x10] sm:$0xff]
      %v229 = vld [vmem:[%s219 + $0x18] sm:$0xff]
      %v230 = vld [vmem:[%s219 + $0x20] sm:$0xff]
      %v231 = vld [vmem:[%s219 + $0x28] sm:$0xff]
      %v232 = vld [vmem:[%s219 + $0x30] sm:$0xff]
      %v233 = vld [vmem:[%s219 + $0x38] sm:$0xff]
      %v234 = vld [vmem:[%s219 + $0x40] sm:$0xff]
      %v235 = vld [vmem:[%s219 + $0x48] sm:$0xff]
      %v236 = vld [vmem:[%s219 + $0x50] sm:$0xff]
      %v237 = vld [vmem:[%s219 + $0x58] sm:$0xff]
      %v238 = vld [vmem:[%s219 + $0x60] sm:$0xff]
      %v239 = vld [vmem:[%s219 + $0x68] sm:$0xff]
      %v240 = vld [vmem:[%s219 + $0x70] sm:$0xff]
      %v241 = vld [vmem:[%s219 + $0x78] sm:$0xff]
      %v242 = vld [vmem:[%s219 + $0x80] sm:$0xff]
      %v243 = vld [vmem:[%s219 + $0x88] sm:$0xff]
      %v244 = vld [vmem:[%s219 + $0x90] sm:$0xff]
      %v245 = vld [vmem:[%s219 + $0x98] sm:$0xff]
      %v246 = vld [vmem:[%s219 + $0xa0] sm:$0xff]
      %v247 = vld [vmem:[%s219 + $0xa8] sm:$0xff]
      %v248 = vld [vmem:[%s219 + $0xb0] sm:$0xff]
      %v249 = vld [vmem:[%s219 + $0xb8] sm:$0xff]
      %v250 = vld [vmem:[%s219 + $0xc0] sm:$0xff]
      %v251 = vld [vmem:[%s219 + $0xc8] sm:$0xff]
      %v252 = vld [vmem:[%s219 + $0xd0] sm:$0xff]
      %v253 = vld [vmem:[%s219 + $0xd8] sm:$0xff]
      %v254 = vld [vmem:[%s219 + $0xe0] sm:$0xff]
      %v255 = vld [vmem:[%s219 + $0xe8] sm:$0xff]
      %v256 = vld [vmem:[%s219 + $0xf0] sm:$0xff]
      %v257 = vld [vmem:[%s219 + $0xf8] sm:$0xff]
      %v274 = vrot.slane %v228, 1
      %v275 = vrot.slane %v226, 1
      %v276 = vrot.slane %v230, 1
      %v277 = vrot.slane %v232, 1
      %v278 = vrot.slane %v234, 1
      %v279 = vrot.slane %v236, 1
      %v280 = vrot.slane %v238, 1
      %v281 = vrot.slane %v240, 1
      %v282 = vrot.slane %v242, 1
      %v283 = vrot.slane %v244, 1
      %v284 = vrot.slane %v246, 1
      %v285 = vrot.slane %v248, 1
      %v286 = vrot.slane %v250, 1
      %v287 = vrot.slane %v252, 1
      %v288 = vrot.slane %v254, 1
      %v289 = vrot.slane %v256, 1
      %vm322 = vcmask 1040384
      %v323 = vrot.slane %v228, 7
      %v324 = vrot.slane %v229, 7
      %v325 = vsel %vm322, %v323, %v324
      %v326 = vrot.slane %v226, 7
      %v327 = vrot.slane %v227, 7
      %v328 = vsel %vm322, %v326, %v327
      %v329 = vrot.slane %v230, 7
      %v330 = vrot.slane %v231, 7
      %v331 = vsel %vm322, %v329, %v330
      %v332 = vrot.slane %v232, 7
      %v333 = vrot.slane %v233, 7
      %v334 = vsel %vm322, %v332, %v333
      %v335 = vrot.slane %v234, 7
      %v336 = vrot.slane %v235, 7
      %v337 = vsel %vm322, %v335, %v336
      %v338 = vrot.slane %v236, 7
      %v339 = vrot.slane %v237, 7
      %v340 = vsel %vm322, %v338, %v339
      %v341 = vrot.slane %v238, 7
      %v342 = vrot.slane %v239, 7
      %v343 = vsel %vm322, %v341, %v342
      %v344 = vrot.slane %v240, 7
      %v345 = vrot.slane %v241, 7
      %v346 = vsel %vm322, %v344, %v345
      %v347 = vrot.slane %v242, 7
      %v348 = vrot.slane %v243, 7
      %v349 = vsel %vm322, %v347, %v348
      %v350 = vrot.slane %v244, 7
      %v351 = vrot.slane %v245, 7
      %v352 = vsel %vm322, %v350, %v351
      %v353 = vrot.slane %v246, 7
      %v354 = vrot.slane %v247, 7
      %v355 = vsel %vm322, %v353, %v354
      %v356 = vrot.slane %v248, 7
      %v357 = vrot.slane %v249, 7
      %v358 = vsel %vm322, %v356, %v357
      %v359 = vrot.slane %v250, 7
      %v360 = vrot.slane %v251, 7
      %v361 = vsel %vm322, %v359, %v360
      %v362 = vrot.slane %v252, 7
      %v363 = vrot.slane %v253, 7
      %v364 = vsel %vm322, %v362, %v363
      %v365 = vrot.slane %v254, 7
      %v366 = vrot.slane %v255, 7
      %v367 = vsel %vm322, %v365, %v366
      %v368 = vrot.slane %v256, 7
      %v369 = vrot.slane %v257, 7
      %v370 = vsel %vm322, %v368, %v369
      %v418 = vrot.slane %v229, 5
      %v419 = vrot.slane %v227, 5
      %v420 = vrot.slane %v231, 5
      %v421 = vrot.slane %v233, 5
      %v422 = vrot.slane %v235, 5
      %v423 = vrot.slane %v237, 5
      %v424 = vrot.slane %v239, 5
      %v425 = vrot.slane %v241, 5
      %v426 = vrot.slane %v243, 5
      %v427 = vrot.slane %v245, 5
      %v428 = vrot.slane %v247, 5
      %v429 = vrot.slane %v249, 5
      %v430 = vrot.slane %v251, 5
      %v431 = vrot.slane %v253, 5
      %v432 = vrot.slane %v255, 5
      %v433 = vrot.slane %v257, 5
      %v450 = vsel %vm322, %v274, %v323
      %v451 = vsel %vm322, %v275, %v326
      %v452 = vsel %vm322, %v276, %v329
      %v453 = vsel %vm322, %v277, %v332
      %v454 = vsel %vm322, %v278, %v335
      %v455 = vsel %vm322, %v279, %v338
      %v456 = vsel %vm322, %v280, %v341
      %v457 = vsel %vm322, %v281, %v344
      %v458 = vsel %vm322, %v282, %v347
      %v459 = vsel %vm322, %v283, %v350
      %v460 = vsel %vm322, %v284, %v353
      %v461 = vsel %vm322, %v285, %v356
      %v462 = vsel %vm322, %v286, %v359
      %v463 = vsel %vm322, %v287, %v362
      %v464 = vsel %vm322, %v288, %v365
      %v465 = vsel %vm322, %v289, %v368
      %v466 = vsel %vm322, %v324, %v418
      %v467 = vsel %vm322, %v327, %v419
      %v468 = vsel %vm322, %v330, %v420
      %v469 = vsel %vm322, %v333, %v421
      %v470 = vsel %vm322, %v336, %v422
      %v471 = vsel %vm322, %v339, %v423
      %v472 = vsel %vm322, %v342, %v424
      %v473 = vsel %vm322, %v345, %v425
      %v474 = vsel %vm322, %v348, %v426
      %v475 = vsel %vm322, %v351, %v427
      %v476 = vsel %vm322, %v354, %v428
      %v477 = vsel %vm322, %v357, %v429
      %v478 = vsel %vm322, %v360, %v430
      %v479 = vsel %vm322, %v363, %v431
      %v480 = vsel %vm322, %v366, %v432
      %v481 = vsel %vm322, %v369, %v433
      %vm512 = vcmask 1046528
      %v513 = vrot.slane %v450, 1
      %v514 = vrot.slane %v325, 1
      %v515 = vsel %vm512, %v513, %v514
      %v516 = vrot.slane %v466, 1
      %v517 = vsel %vm512, %v514, %v516
      %v518 = vrot.slane %v451, 1
      %v519 = vrot.slane %v328, 1
      %v520 = vsel %vm512, %v518, %v519
      %v521 = vrot.slane %v467, 1
      %v522 = vsel %vm512, %v519, %v521
      %v523 = vrot.slane %v452, 1
      %v524 = vrot.slane %v331, 1
      %v525 = vsel %vm512, %v523, %v524
      %v526 = vrot.slane %v468, 1
      %v527 = vsel %vm512, %v524, %v526
      %v528 = vrot.slane %v453, 1
      %v529 = vrot.slane %v334, 1
      %v530 = vsel %vm512, %v528, %v529
      %v531 = vrot.slane %v469, 1
      %v532 = vsel %vm512, %v529, %v531
      %v533 = vrot.slane %v454, 1
      %v534 = vrot.slane %v337, 1
      %v535 = vsel %vm512, %v533, %v534
      %v536 = vrot.slane %v470, 1
      %v537 = vsel %vm512, %v534, %v536
      %v538 = vrot.slane %v455, 1
      %v539 = vrot.slane %v340, 1
      %v540 = vsel %vm512, %v538, %v539
      %v541 = vrot.slane %v471, 1
      %v542 = vsel %vm512, %v539, %v541
      %v543 = vrot.slane %v456, 1
      %v544 = vrot.slane %v343, 1
      %v545 = vsel %vm512, %v543, %v544
      %v546 = vrot.slane %v472, 1
      %v547 = vsel %vm512, %v544, %v546
      %v548 = vrot.slane %v457, 1
      %v549 = vrot.slane %v346, 1
      %v550 = vsel %vm512, %v548, %v549
      %v551 = vrot.slane %v473, 1
      %v552 = vsel %vm512, %v549, %v551
      %v553 = vrot.slane %v458, 1
      %v554 = vrot.slane %v349, 1
      %v555 = vsel %vm512, %v553, %v554
      %v556 = vrot.slane %v474, 1
      %v557 = vsel %vm512, %v554, %v556
      %v558 = vrot.slane %v459, 1
      %v559 = vrot.slane %v352, 1
      %v560 = vsel %vm512, %v558, %v559
      %v561 = vrot.slane %v475, 1
      %v562 = vsel %vm512, %v559, %v561
      %v563 = vrot.slane %v460, 1
      %v564 = vrot.slane %v355, 1
      %v565 = vsel %vm512, %v563, %v564
      %v566 = vrot.slane %v476, 1
      %v567 = vsel %vm512, %v564, %v566
      %v568 = vrot.slane %v461, 1
      %v569 = vrot.slane %v358, 1
      %v570 = vsel %vm512, %v568, %v569
      %v571 = vrot.slane %v477, 1
      %v572 = vsel %vm512, %v569, %v571
      %v573 = vrot.slane %v462, 1
      %v574 = vrot.slane %v361, 1
      %v575 = vsel %vm512, %v573, %v574
      %v576 = vrot.slane %v478, 1
      %v577 = vsel %vm512, %v574, %v576
      %v578 = vrot.slane %v463, 1
      %v579 = vrot.slane %v364, 1
      %v580 = vsel %vm512, %v578, %v579
      %v581 = vrot.slane %v479, 1
      %v582 = vsel %vm512, %v579, %v581
      %v583 = vrot.slane %v464, 1
      %v584 = vrot.slane %v367, 1
      %v585 = vsel %vm512, %v583, %v584
      %v586 = vrot.slane %v480, 1
      %v587 = vsel %vm512, %v584, %v586
      %588 = vrot.lane.b32.xlu0 %v515, 4
      %v589 = vpop.permute.xlu0 %588
      %590 = vrot.lane.b32.xlu0 %v517, 4
      %v591 = vpop.permute.xlu0 %590
      %592 = vrot.lane.b32.xlu0 %v520, 4
      %v593 = vpop.permute.xlu0 %592
      %594 = vrot.lane.b32.xlu0 %v522, 4
      %v595 = vpop.permute.xlu0 %594
      %596 = vrot.lane.b32.xlu0 %v525, 4
      %v597 = vpop.permute.xlu0 %596
      %598 = vrot.lane.b32.xlu0 %v527, 4
      %v599 = vpop.permute.xlu0 %598
      %600 = vrot.lane.b32.xlu0 %v530, 4
      %v601 = vpop.permute.xlu0 %600
      %602 = vrot.lane.b32.xlu0 %v532, 4
      %v603 = vpop.permute.xlu0 %602
      %604 = vrot.lane.b32.xlu0 %v535, 4
      %v605 = vpop.permute.xlu0 %604
      %606 = vrot.lane.b32.xlu0 %v537, 4
      %v607 = vpop.permute.xlu0 %606
      %608 = vrot.lane.b32.xlu0 %v540, 4
      %v609 = vpop.permute.xlu0 %608
      %610 = vrot.lane.b32.xlu0 %v542, 4
      %v611 = vpop.permute.xlu0 %610
      %612 = vrot.lane.b32.xlu0 %v545, 4
      %v613 = vpop.permute.xlu0 %612
      %614 = vrot.lane.b32.xlu0 %v547, 4
      %v615 = vpop.permute.xlu0 %614
      %616 = vrot.lane.b32.xlu0 %v550, 4
      %v617 = vpop.permute.xlu0 %616
      %618 = vrot.lane.b32.xlu0 %v552, 4
      %v619 = vpop.permute.xlu0 %618
      %620 = vrot.lane.b32.xlu0 %v555, 4
      %v621 = vpop.permute.xlu0 %620
      %622 = vrot.lane.b32.xlu0 %v557, 4
      %v623 = vpop.permute.xlu0 %622
      %624 = vrot.lane.b32.xlu0 %v560, 4
      %v625 = vpop.permute.xlu0 %624
      %626 = vrot.lane.b32.xlu0 %v562, 4
      %v627 = vpop.permute.xlu0 %626
      %628 = vrot.lane.b32.xlu0 %v565, 4
      %v629 = vpop.permute.xlu0 %628
      %630 = vrot.lane.b32.xlu0 %v567, 4
      %v631 = vpop.permute.xlu0 %630
      %632 = vrot.lane.b32.xlu0 %v570, 4
      %v633 = vpop.permute.xlu0 %632
      %634 = vrot.lane.b32.xlu0 %v572, 4
      %v635 = vpop.permute.xlu0 %634
      %636 = vrot.lane.b32.xlu0 %v575, 4
      %v637 = vpop.permute.xlu0 %636
      %638 = vrot.lane.b32.xlu0 %v577, 4
      %v639 = vpop.permute.xlu0 %638
      %640 = vrot.lane.b32.xlu0 %v580, 4
      %v641 = vpop.permute.xlu0 %640
      %642 = vrot.lane.b32.xlu0 %v582, 4
      %v643 = vpop.permute.xlu0 %642
      %644 = vrot.lane.b32.xlu0 %v585, 4
      %v645 = vpop.permute.xlu0 %644
      %646 = vrot.lane.b32.xlu0 %v587, 4
      %v647 = vpop.permute.xlu0 %646
      %vm678 = vcmask 1045504
      %v679 = vrot.slane %v450, 2
      %v680 = vrot.slane %v325, 2
      %v681 = vsel %vm678, %v679, %v680
      %v682 = vrot.slane %v466, 2
      %v683 = vsel %vm678, %v680, %v682
      %v684 = vrot.slane %v451, 2
      %v685 = vrot.slane %v328, 2
      %v686 = vsel %vm678, %v684, %v685
      %v687 = vrot.slane %v467, 2
      %v688 = vsel %vm678, %v685, %v687
      %v689 = vrot.slane %v452, 2
      %v690 = vrot.slane %v331, 2
      %v691 = vsel %vm678, %v689, %v690
      %v692 = vrot.slane %v468, 2
      %v693 = vsel %vm678, %v690, %v692
      %v694 = vrot.slane %v453, 2
      %v695 = vrot.slane %v334, 2
      %v696 = vsel %vm678, %v694, %v695
      %v697 = vrot.slane %v469, 2
      %v698 = vsel %vm678, %v695, %v697
      %v699 = vrot.slane %v454, 2
      %v700 = vrot.slane %v337, 2
      %v701 = vsel %vm678, %v699, %v700
      %v702 = vrot.slane %v470, 2
      %v703 = vsel %vm678, %v700, %v702
      %v704 = vrot.slane %v455, 2
      %v705 = vrot.slane %v340, 2
      %v706 = vsel %vm678, %v704, %v705
      %v707 = vrot.slane %v471, 2
      %v708 = vsel %vm678, %v705, %v707
      %v709 = vrot.slane %v456, 2
      %v710 = vrot.slane %v343, 2
      %v711 = vsel %vm678, %v709, %v710
      %v712 = vrot.slane %v472, 2
      %v713 = vsel %vm678, %v710, %v712
      %v714 = vrot.slane %v457, 2
      %v715 = vrot.slane %v346, 2
      %v716 = vsel %vm678, %v714, %v715
      %v717 = vrot.slane %v473, 2
      %v718 = vsel %vm678, %v715, %v717
      %v719 = vrot.slane %v458, 2
      %v720 = vrot.slane %v349, 2
      %v721 = vsel %vm678, %v719, %v720
      %v722 = vrot.slane %v474, 2
      %v723 = vsel %vm678, %v720, %v722
      %v724 = vrot.slane %v459, 2
      %v725 = vrot.slane %v352, 2
      %v726 = vsel %vm678, %v724, %v725
      %v727 = vrot.slane %v475, 2
      %v728 = vsel %vm678, %v725, %v727
      %v729 = vrot.slane %v460, 2
      %v730 = vrot.slane %v355, 2
      %v731 = vsel %vm678, %v729, %v730
      %v732 = vrot.slane %v476, 2
      %v733 = vsel %vm678, %v730, %v732
      %v734 = vrot.slane %v461, 2
      %v735 = vrot.slane %v358, 2
      %v736 = vsel %vm678, %v734, %v735
      %v737 = vrot.slane %v477, 2
      %v738 = vsel %vm678, %v735, %v737
      %v739 = vrot.slane %v462, 2
      %v740 = vrot.slane %v361, 2
      %v741 = vsel %vm678, %v739, %v740
      %v742 = vrot.slane %v478, 2
      %v743 = vsel %vm678, %v740, %v742
      %v744 = vrot.slane %v463, 2
      %v745 = vrot.slane %v364, 2
      %v746 = vsel %vm678, %v744, %v745
      %v747 = vrot.slane %v479, 2
      %v748 = vsel %vm678, %v745, %v747
      %v749 = vrot.slane %v464, 2
      %v750 = vrot.slane %v367, 2
      %v751 = vsel %vm678, %v749, %v750
      %v752 = vrot.slane %v480, 2
      %v753 = vsel %vm678, %v750, %v752
      %754 = vrot.lane.b32.xlu0 %v681, 8
      %v755 = vpop.permute.xlu0 %754
      %756 = vrot.lane.b32.xlu0 %v683, 8
      %v757 = vpop.permute.xlu0 %756
      %758 = vrot.lane.b32.xlu0 %v686, 8
      %v759 = vpop.permute.xlu0 %758
      %760 = vrot.lane.b32.xlu0 %v688, 8
      %v761 = vpop.permute.xlu0 %760
      %762 = vrot.lane.b32.xlu0 %v691, 8
      %v763 = vpop.permute.xlu0 %762
      %764 = vrot.lane.b32.xlu0 %v693, 8
      %v765 = vpop.permute.xlu0 %764
      %766 = vrot.lane.b32.xlu0 %v696, 8
      %v767 = vpop.permute.xlu0 %766
      %768 = vrot.lane.b32.xlu0 %v698, 8
      %v769 = vpop.permute.xlu0 %768
      %770 = vrot.lane.b32.xlu0 %v701, 8
      %v771 = vpop.permute.xlu0 %770
      %772 = vrot.lane.b32.xlu0 %v703, 8
      %v773 = vpop.permute.xlu0 %772
      %774 = vrot.lane.b32.xlu0 %v706, 8
      %v775 = vpop.permute.xlu0 %774
      %776 = vrot.lane.b32.xlu0 %v708, 8
      %v777 = vpop.permute.xlu0 %776
      %778 = vrot.lane.b32.xlu0 %v711, 8
      %v779 = vpop.permute.xlu0 %778
      %780 = vrot.lane.b32.xlu0 %v713, 8
      %v781 = vpop.permute.xlu0 %780
      %782 = vrot.lane.b32.xlu0 %v716, 8
      %v783 = vpop.permute.xlu0 %782
      %784 = vrot.lane.b32.xlu0 %v718, 8
      %v785 = vpop.permute.xlu0 %784
      %786 = vrot.lane.b32.xlu0 %v721, 8
      %v787 = vpop.permute.xlu0 %786
      %788 = vrot.lane.b32.xlu0 %v723, 8
      %v789 = vpop.permute.xlu0 %788
      %790 = vrot.lane.b32.xlu0 %v726, 8
      %v791 = vpop.permute.xlu0 %790
      %792 = vrot.lane.b32.xlu0 %v728, 8
      %v793 = vpop.permute.xlu0 %792
      %794 = vrot.lane.b32.xlu0 %v731, 8
      %v795 = vpop.permute.xlu0 %794
      %796 = vrot.lane.b32.xlu0 %v733, 8
      %v797 = vpop.permute.xlu0 %796
      %798 = vrot.lane.b32.xlu0 %v736, 8
      %v799 = vpop.permute.xlu0 %798
      %800 = vrot.lane.b32.xlu0 %v738, 8
      %v801 = vpop.permute.xlu0 %800
      %802 = vrot.lane.b32.xlu0 %v741, 8
      %v803 = vpop.permute.xlu0 %802
      %804 = vrot.lane.b32.xlu0 %v743, 8
      %v805 = vpop.permute.xlu0 %804
      %806 = vrot.lane.b32.xlu0 %v746, 8
      %v807 = vpop.permute.xlu0 %806
      %808 = vrot.lane.b32.xlu0 %v748, 8
      %v809 = vpop.permute.xlu0 %808
      %810 = vrot.lane.b32.xlu0 %v751, 8
      %v811 = vpop.permute.xlu0 %810
      %812 = vrot.lane.b32.xlu0 %v753, 8
      %v813 = vpop.permute.xlu0 %812
      %845 = vrot.lane.b32.xlu0 %v451, 12
      %v846 = vpop.permute.xlu0 %845
      %847 = vrot.lane.b32.xlu0 %v328, 12
      %v848 = vpop.permute.xlu0 %847
      %849 = vrot.lane.b32.xlu0 %v450, 12
      %v850 = vpop.permute.xlu0 %849
      %851 = vrot.lane.b32.xlu0 %v325, 12
      %v852 = vpop.permute.xlu0 %851
      %853 = vrot.lane.b32.xlu0 %v452, 12
      %v854 = vpop.permute.xlu0 %853
      %855 = vrot.lane.b32.xlu0 %v331, 12
      %v856 = vpop.permute.xlu0 %855
      %857 = vrot.lane.b32.xlu0 %v453, 12
      %v858 = vpop.permute.xlu0 %857
      %859 = vrot.lane.b32.xlu0 %v334, 12
      %v860 = vpop.permute.xlu0 %859
      %861 = vrot.lane.b32.xlu0 %v454, 12
      %v862 = vpop.permute.xlu0 %861
      %863 = vrot.lane.b32.xlu0 %v337, 12
      %v864 = vpop.permute.xlu0 %863
      %865 = vrot.lane.b32.xlu0 %v455, 12
      %v866 = vpop.permute.xlu0 %865
      %867 = vrot.lane.b32.xlu0 %v340, 12
      %v868 = vpop.permute.xlu0 %867
      %869 = vrot.lane.b32.xlu0 %v456, 12
      %v870 = vpop.permute.xlu0 %869
      %871 = vrot.lane.b32.xlu0 %v343, 12
      %v872 = vpop.permute.xlu0 %871
      %873 = vrot.lane.b32.xlu0 %v457, 12
      %v874 = vpop.permute.xlu0 %873
      %875 = vrot.lane.b32.xlu0 %v346, 12
      %v876 = vpop.permute.xlu0 %875
      %877 = vrot.lane.b32.xlu0 %v458, 12
      %v878 = vpop.permute.xlu0 %877
      %879 = vrot.lane.b32.xlu0 %v349, 12
      %v880 = vpop.permute.xlu0 %879
      %881 = vrot.lane.b32.xlu0 %v459, 12
      %v882 = vpop.permute.xlu0 %881
      %883 = vrot.lane.b32.xlu0 %v352, 12
      %v884 = vpop.permute.xlu0 %883
      %885 = vrot.lane.b32.xlu0 %v460, 12
      %v886 = vpop.permute.xlu0 %885
      %887 = vrot.lane.b32.xlu0 %v355, 12
      %v888 = vpop.permute.xlu0 %887
      %889 = vrot.lane.b32.xlu0 %v461, 12
      %v890 = vpop.permute.xlu0 %889
      %891 = vrot.lane.b32.xlu0 %v358, 12
      %v892 = vpop.permute.xlu0 %891
      %893 = vrot.lane.b32.xlu0 %v462, 12
      %v894 = vpop.permute.xlu0 %893
      %895 = vrot.lane.b32.xlu0 %v361, 12
      %v896 = vpop.permute.xlu0 %895
      %897 = vrot.lane.b32.xlu0 %v463, 12
      %v898 = vpop.permute.xlu0 %897
      %899 = vrot.lane.b32.xlu0 %v364, 12
      %v900 = vpop.permute.xlu0 %899
      %901 = vrot.lane.b32.xlu0 %v464, 12
      %v902 = vpop.permute.xlu0 %901
      %903 = vrot.lane.b32.xlu0 %v367, 12
      %v904 = vpop.permute.xlu0 %903
      %905 = vrot.lane.b32.xlu0 %v465, 12
      %v906 = vpop.permute.xlu0 %905
      %907 = vrot.lane.b32.xlu0 %v370, 12
      %v908 = vpop.permute.xlu0 %907
      %v942 = vrot.slane %v465, 1
      %v943 = vrot.slane %v370, 1
      %v944 = vsel %vm512, %v942, %v943
      %v945 = vrot.slane %v481, 1
      %v946 = vsel %vm512, %v943, %v945
      %947 = vrot.lane.b32.xlu0 %v520, 16
      %v948 = vpop.permute.xlu0 %947
      %949 = vrot.lane.b32.xlu0 %v522, 16
      %v950 = vpop.permute.xlu0 %949
      %951 = vrot.lane.b32.xlu0 %v515, 16
      %v952 = vpop.permute.xlu0 %951
      %953 = vrot.lane.b32.xlu0 %v517, 16
      %v954 = vpop.permute.xlu0 %953
      %955 = vrot.lane.b32.xlu0 %v525, 16
      %v956 = vpop.permute.xlu0 %955
      %957 = vrot.lane.b32.xlu0 %v527, 16
      %v958 = vpop.permute.xlu0 %957
      %959 = vrot.lane.b32.xlu0 %v530, 16
      %v960 = vpop.permute.xlu0 %959
      %961 = vrot.lane.b32.xlu0 %v532, 16
      %v962 = vpop.permute.xlu0 %961
      %963 = vrot.lane.b32.xlu0 %v535, 16
      %v964 = vpop.permute.xlu0 %963
      %965 = vrot.lane.b32.xlu0 %v537, 16
      %v966 = vpop.permute.xlu0 %965
      %967 = vrot.lane.b32.xlu0 %v540, 16
      %v968 = vpop.permute.xlu0 %967
      %969 = vrot.lane.b32.xlu0 %v542, 16
      %v970 = vpop.permute.xlu0 %969
      %971 = vrot.lane.b32.xlu0 %v545, 16
      %v972 = vpop.permute.xlu0 %971
      %973 = vrot.lane.b32.xlu0 %v547, 16
      %v974 = vpop.permute.xlu0 %973
      %975 = vrot.lane.b32.xlu0 %v550, 16
      %v976 = vpop.permute.xlu0 %975
      %977 = vrot.lane.b32.xlu0 %v552, 16
      %v978 = vpop.permute.xlu0 %977
      %979 = vrot.lane.b32.xlu0 %v555, 16
      %v980 = vpop.permute.xlu0 %979
      %981 = vrot.lane.b32.xlu0 %v557, 16
      %v982 = vpop.permute.xlu0 %981
      %983 = vrot.lane.b32.xlu0 %v560, 16
      %v984 = vpop.permute.xlu0 %983
      %985 = vrot.lane.b32.xlu0 %v562, 16
      %v986 = vpop.permute.xlu0 %985
      %987 = vrot.lane.b32.xlu0 %v565, 16
      %v988 = vpop.permute.xlu0 %987
      %989 = vrot.lane.b32.xlu0 %v567, 16
      %v990 = vpop.permute.xlu0 %989
      %991 = vrot.lane.b32.xlu0 %v570, 16
      %v992 = vpop.permute.xlu0 %991
      %993 = vrot.lane.b32.xlu0 %v572, 16
      %v994 = vpop.permute.xlu0 %993
      %995 = vrot.lane.b32.xlu0 %v575, 16
      %v996 = vpop.permute.xlu0 %995
      %997 = vrot.lane.b32.xlu0 %v577, 16
      %v998 = vpop.permute.xlu0 %997
      %999 = vrot.lane.b32.xlu0 %v580, 16
      %v1000 = vpop.permute.xlu0 %999
      %1001 = vrot.lane.b32.xlu0 %v582, 16
      %v1002 = vpop.permute.xlu0 %1001
      %1003 = vrot.lane.b32.xlu0 %v585, 16
      %v1004 = vpop.permute.xlu0 %1003
      %1005 = vrot.lane.b32.xlu0 %v587, 16
      %v1006 = vpop.permute.xlu0 %1005
      %1007 = vrot.lane.b32.xlu0 %v944, 16
      %v1008 = vpop.permute.xlu0 %1007
      %1009 = vrot.lane.b32.xlu0 %v946, 16
      %v1010 = vpop.permute.xlu0 %1009
      %v1043 = vrot.slane %v465, 2
      %v1044 = vrot.slane %v370, 2
      %v1045 = vsel %vm678, %v1043, %v1044
      %v1046 = vrot.slane %v481, 2
      %v1047 = vsel %vm678, %v1044, %v1046
      %1048 = vrot.lane.b32.xlu0 %v686, 20
      %v1049 = vpop.permute.xlu0 %1048
      %1050 = vrot.lane.b32.xlu0 %v688, 20
      %v1051 = vpop.permute.xlu0 %1050
      %1052 = vrot.lane.b32.xlu0 %v681, 20
      %v1053 = vpop.permute.xlu0 %1052
      %1054 = vrot.lane.b32.xlu0 %v683, 20
      %v1055 = vpop.permute.xlu0 %1054
      %1056 = vrot.lane.b32.xlu0 %v691, 20
      %v1057 = vpop.permute.xlu0 %1056
      %1058 = vrot.lane.b32.xlu0 %v693, 20
      %v1059 = vpop.permute.xlu0 %1058
      %1060 = vrot.lane.b32.xlu0 %v696, 20
      %v1061 = vpop.permute.xlu0 %1060
      %1062 = vrot.lane.b32.xlu0 %v698, 20
      %v1063 = vpop.permute.xlu0 %1062
      %1064 = vrot.lane.b32.xlu0 %v701, 20
      %v1065 = vpop.permute.xlu0 %1064
      %1066 = vrot.lane.b32.xlu0 %v703, 20
      %v1067 = vpop.permute.xlu0 %1066
      %1068 = vrot.lane.b32.xlu0 %v706, 20
      %v1069 = vpop.permute.xlu0 %1068
      %1070 = vrot.lane.b32.xlu0 %v708, 20
      %v1071 = vpop.permute.xlu0 %1070
      %1072 = vrot.lane.b32.xlu0 %v711, 20
      %v1073 = vpop.permute.xlu0 %1072
      %1074 = vrot.lane.b32.xlu0 %v713, 20
      %v1075 = vpop.permute.xlu0 %1074
      %1076 = vrot.lane.b32.xlu0 %v716, 20
      %v1077 = vpop.permute.xlu0 %1076
      %1078 = vrot.lane.b32.xlu0 %v718, 20
      %v1079 = vpop.permute.xlu0 %1078
      %1080 = vrot.lane.b32.xlu0 %v721, 20
      %v1081 = vpop.permute.xlu0 %1080
      %1082 = vrot.lane.b32.xlu0 %v723, 20
      %v1083 = vpop.permute.xlu0 %1082
      %1084 = vrot.lane.b32.xlu0 %v726, 20
      %v1085 = vpop.permute.xlu0 %1084
      %1086 = vrot.lane.b32.xlu0 %v728, 20
      %v1087 = vpop.permute.xlu0 %1086
      %1088 = vrot.lane.b32.xlu0 %v731, 20
      %v1089 = vpop.permute.xlu0 %1088
      %1090 = vrot.lane.b32.xlu0 %v733, 20
      %v1091 = vpop.permute.xlu0 %1090
      %1092 = vrot.lane.b32.xlu0 %v736, 20
      %v1093 = vpop.permute.xlu0 %1092
      %1094 = vrot.lane.b32.xlu0 %v738, 20
      %v1095 = vpop.permute.xlu0 %1094
      %1096 = vrot.lane.b32.xlu0 %v741, 20
      %v1097 = vpop.permute.xlu0 %1096
      %1098 = vrot.lane.b32.xlu0 %v743, 20
      %v1099 = vpop.permute.xlu0 %1098
      %1100 = vrot.lane.b32.xlu0 %v746, 20
      %v1101 = vpop.permute.xlu0 %1100
      %1102 = vrot.lane.b32.xlu0 %v748, 20
      %v1103 = vpop.permute.xlu0 %1102
      %1104 = vrot.lane.b32.xlu0 %v751, 20
      %v1105 = vpop.permute.xlu0 %1104
      %1106 = vrot.lane.b32.xlu0 %v753, 20
      %v1107 = vpop.permute.xlu0 %1106
      %1108 = vrot.lane.b32.xlu0 %v1045, 20
      %v1109 = vpop.permute.xlu0 %1108
      %1110 = vrot.lane.b32.xlu0 %v1047, 20
      %v1111 = vpop.permute.xlu0 %1110
      %1144 = vrot.lane.b32.xlu0 %v450, 24
      %v1145 = vpop.permute.xlu0 %1144
      %1146 = vrot.lane.b32.xlu0 %v325, 24
      %v1147 = vpop.permute.xlu0 %1146
      %1148 = vrot.lane.b32.xlu0 %v452, 24
      %v1149 = vpop.permute.xlu0 %1148
      %1150 = vrot.lane.b32.xlu0 %v331, 24
      %v1151 = vpop.permute.xlu0 %1150
      %1152 = vrot.lane.b32.xlu0 %v453, 24
      %v1153 = vpop.permute.xlu0 %1152
      %1154 = vrot.lane.b32.xlu0 %v334, 24
      %v1155 = vpop.permute.xlu0 %1154
      %1156 = vrot.lane.b32.xlu0 %v454, 24
      %v1157 = vpop.permute.xlu0 %1156
      %1158 = vrot.lane.b32.xlu0 %v337, 24
      %v1159 = vpop.permute.xlu0 %1158
      %1160 = vrot.lane.b32.xlu0 %v455, 24
      %v1161 = vpop.permute.xlu0 %1160
      %1162 = vrot.lane.b32.xlu0 %v340, 24
      %v1163 = vpop.permute.xlu0 %1162
      %1164 = vrot.lane.b32.xlu0 %v456, 24
      %v1165 = vpop.permute.xlu0 %1164
      %1166 = vrot.lane.b32.xlu0 %v343, 24
      %v1167 = vpop.permute.xlu0 %1166
      %1168 = vrot.lane.b32.xlu0 %v457, 24
      %v1169 = vpop.permute.xlu0 %1168
      %1170 = vrot.lane.b32.xlu0 %v346, 24
      %v1171 = vpop.permute.xlu0 %1170
      %1172 = vrot.lane.b32.xlu0 %v458, 24
      %v1173 = vpop.permute.xlu0 %1172
      %1174 = vrot.lane.b32.xlu0 %v349, 24
      %v1175 = vpop.permute.xlu0 %1174
      %1176 = vrot.lane.b32.xlu0 %v459, 24
      %v1177 = vpop.permute.xlu0 %1176
      %1178 = vrot.lane.b32.xlu0 %v352, 24
      %v1179 = vpop.permute.xlu0 %1178
      %1180 = vrot.lane.b32.xlu0 %v460, 24
      %v1181 = vpop.permute.xlu0 %1180
      %1182 = vrot.lane.b32.xlu0 %v355, 24
      %v1183 = vpop.permute.xlu0 %1182
      %1184 = vrot.lane.b32.xlu0 %v461, 24
      %v1185 = vpop.permute.xlu0 %1184
      %1186 = vrot.lane.b32.xlu0 %v358, 24
      %v1187 = vpop.permute.xlu0 %1186
      %1188 = vrot.lane.b32.xlu0 %v462, 24
      %v1189 = vpop.permute.xlu0 %1188
      %1190 = vrot.lane.b32.xlu0 %v361, 24
      %v1191 = vpop.permute.xlu0 %1190
      %1192 = vrot.lane.b32.xlu0 %v463, 24
      %v1193 = vpop.permute.xlu0 %1192
      %1194 = vrot.lane.b32.xlu0 %v364, 24
      %v1195 = vpop.permute.xlu0 %1194
      %1196 = vrot.lane.b32.xlu0 %v464, 24
      %v1197 = vpop.permute.xlu0 %1196
      %1198 = vrot.lane.b32.xlu0 %v367, 24
      %v1199 = vpop.permute.xlu0 %1198
      %1200 = vrot.lane.b32.xlu0 %v465, 24
      %v1201 = vpop.permute.xlu0 %1200
      %1202 = vrot.lane.b32.xlu0 %v370, 24
      %v1203 = vpop.permute.xlu0 %1202
      %1234 = vrot.lane.b32.xlu0 %v515, 28
      %v1235 = vpop.permute.xlu0 %1234
      %1236 = vrot.lane.b32.xlu0 %v517, 28
      %v1237 = vpop.permute.xlu0 %1236
      %1238 = vrot.lane.b32.xlu0 %v525, 28
      %v1239 = vpop.permute.xlu0 %1238
      %1240 = vrot.lane.b32.xlu0 %v527, 28
      %v1241 = vpop.permute.xlu0 %1240
      %1242 = vrot.lane.b32.xlu0 %v530, 28
      %v1243 = vpop.permute.xlu0 %1242
      %1244 = vrot.lane.b32.xlu0 %v532, 28
      %v1245 = vpop.permute.xlu0 %1244
      %1246 = vrot.lane.b32.xlu0 %v535, 28
      %v1247 = vpop.permute.xlu0 %1246
      %1248 = vrot.lane.b32.xlu0 %v537, 28
      %v1249 = vpop.permute.xlu0 %1248
      %1250 = vrot.lane.b32.xlu0 %v540, 28
      %v1251 = vpop.permute.xlu0 %1250
      %1252 = vrot.lane.b32.xlu0 %v542, 28
      %v1253 = vpop.permute.xlu0 %1252
      %1254 = vrot.lane.b32.xlu0 %v545, 28
      %v1255 = vpop.permute.xlu0 %1254
      %1256 = vrot.lane.b32.xlu0 %v547, 28
      %v1257 = vpop.permute.xlu0 %1256
      %1258 = vrot.lane.b32.xlu0 %v550, 28
      %v1259 = vpop.permute.xlu0 %1258
      %1260 = vrot.lane.b32.xlu0 %v552, 28
      %v1261 = vpop.permute.xlu0 %1260
      %1262 = vrot.lane.b32.xlu0 %v555, 28
      %v1263 = vpop.permute.xlu0 %1262
      %1264 = vrot.lane.b32.xlu0 %v557, 28
      %v1265 = vpop.permute.xlu0 %1264
      %1266 = vrot.lane.b32.xlu0 %v560, 28
      %v1267 = vpop.permute.xlu0 %1266
      %1268 = vrot.lane.b32.xlu0 %v562, 28
      %v1269 = vpop.permute.xlu0 %1268
      %1270 = vrot.lane.b32.xlu0 %v565, 28
      %v1271 = vpop.permute.xlu0 %1270
      %1272 = vrot.lane.b32.xlu0 %v567, 28
      %v1273 = vpop.permute.xlu0 %1272
      %1274 = vrot.lane.b32.xlu0 %v570, 28
      %v1275 = vpop.permute.xlu0 %1274
      %1276 = vrot.lane.b32.xlu0 %v572, 28
      %v1277 = vpop.permute.xlu0 %1276
      %1278 = vrot.lane.b32.xlu0 %v575, 28
      %v1279 = vpop.permute.xlu0 %1278
      %1280 = vrot.lane.b32.xlu0 %v577, 28
      %v1281 = vpop.permute.xlu0 %1280
      %1282 = vrot.lane.b32.xlu0 %v580, 28
      %v1283 = vpop.permute.xlu0 %1282
      %1284 = vrot.lane.b32.xlu0 %v582, 28
      %v1285 = vpop.permute.xlu0 %1284
      %1286 = vrot.lane.b32.xlu0 %v585, 28
      %v1287 = vpop.permute.xlu0 %1286
      %1288 = vrot.lane.b32.xlu0 %v587, 28
      %v1289 = vpop.permute.xlu0 %1288
      %1290 = vrot.lane.b32.xlu0 %v944, 28
      %v1291 = vpop.permute.xlu0 %1290
      %1292 = vrot.lane.b32.xlu0 %v946, 28
      %v1293 = vpop.permute.xlu0 %1292
      %1324 = vrot.lane.b32.xlu0 %v681, 32
      %v1325 = vpop.permute.xlu0 %1324
      %1326 = vrot.lane.b32.xlu0 %v683, 32
      %v1327 = vpop.permute.xlu0 %1326
      %1328 = vrot.lane.b32.xlu0 %v691, 32
      %v1329 = vpop.permute.xlu0 %1328
      %1330 = vrot.lane.b32.xlu0 %v693, 32
      %v1331 = vpop.permute.xlu0 %1330
      %1332 = vrot.lane.b32.xlu0 %v696, 32
      %v1333 = vpop.permute.xlu0 %1332
      %1334 = vrot.lane.b32.xlu0 %v698, 32
      %v1335 = vpop.permute.xlu0 %1334
      %1336 = vrot.lane.b32.xlu0 %v701, 32
      %v1337 = vpop.permute.xlu0 %1336
      %1338 = vrot.lane.b32.xlu0 %v703, 32
      %v1339 = vpop.permute.xlu0 %1338
      %1340 = vrot.lane.b32.xlu0 %v706, 32
      %v1341 = vpop.permute.xlu0 %1340
      %1342 = vrot.lane.b32.xlu0 %v708, 32
      %v1343 = vpop.permute.xlu0 %1342
      %1344 = vrot.lane.b32.xlu0 %v711, 32
      %v1345 = vpop.permute.xlu0 %1344
      %1346 = vrot.lane.b32.xlu0 %v713, 32
      %v1347 = vpop.permute.xlu0 %1346
      %1348 = vrot.lane.b32.xlu0 %v716, 32
      %v1349 = vpop.permute.xlu0 %1348
      %1350 = vrot.lane.b32.xlu0 %v718, 32
      %v1351 = vpop.permute.xlu0 %1350
      %1352 = vrot.lane.b32.xlu0 %v721, 32
      %v1353 = vpop.permute.xlu0 %1352
      %1354 = vrot.lane.b32.xlu0 %v723, 32
      %v1355 = vpop.permute.xlu0 %1354
      %1356 = vrot.lane.b32.xlu0 %v726, 32
      %v1357 = vpop.permute.xlu0 %1356
      %1358 = vrot.lane.b32.xlu0 %v728, 32
      %v1359 = vpop.permute.xlu0 %1358
      %1360 = vrot.lane.b32.xlu0 %v731, 32
      %v1361 = vpop.permute.xlu0 %1360
      %1362 = vrot.lane.b32.xlu0 %v733, 32
      %v1363 = vpop.permute.xlu0 %1362
      %1364 = vrot.lane.b32.xlu0 %v736, 32
      %v1365 = vpop.permute.xlu0 %1364
      %1366 = vrot.lane.b32.xlu0 %v738, 32
      %v1367 = vpop.permute.xlu0 %1366
      %1368 = vrot.lane.b32.xlu0 %v741, 32
      %v1369 = vpop.permute.xlu0 %1368
      %1370 = vrot.lane.b32.xlu0 %v743, 32
      %v1371 = vpop.permute.xlu0 %1370
      %1372 = vrot.lane.b32.xlu0 %v746, 32
      %v1373 = vpop.permute.xlu0 %1372
      %1374 = vrot.lane.b32.xlu0 %v748, 32
      %v1375 = vpop.permute.xlu0 %1374
      %1376 = vrot.lane.b32.xlu0 %v751, 32
      %v1377 = vpop.permute.xlu0 %1376
      %1378 = vrot.lane.b32.xlu0 %v753, 32
      %v1379 = vpop.permute.xlu0 %1378
      %1380 = vrot.lane.b32.xlu0 %v1045, 32
      %v1381 = vpop.permute.xlu0 %1380
      %1382 = vrot.lane.b32.xlu0 %v1047, 32
      %v1383 = vpop.permute.xlu0 %1382
      %vm1414 = vcmask 31744
      %v1415 = vsel %vm1414, %v450, %v589
      %v1416 = vsel %vm1414, %v325, %v591
      %v1417 = vsel %vm1414, %v451, %v593
      %v1418 = vsel %vm1414, %v328, %v595
      %v1419 = vsel %vm1414, %v452, %v597
      %v1420 = vsel %vm1414, %v331, %v599
      %v1421 = vsel %vm1414, %v453, %v601
      %v1422 = vsel %vm1414, %v334, %v603
      %v1423 = vsel %vm1414, %v454, %v605
      %v1424 = vsel %vm1414, %v337, %v607
      %v1425 = vsel %vm1414, %v455, %v609
      %v1426 = vsel %vm1414, %v340, %v611
      %v1427 = vsel %vm1414, %v456, %v613
      %v1428 = vsel %vm1414, %v343, %v615
      %v1429 = vsel %vm1414, %v457, %v617
      %v1430 = vsel %vm1414, %v346, %v619
      %v1431 = vsel %vm1414, %v458, %v621
      %v1432 = vsel %vm1414, %v349, %v623
      %v1433 = vsel %vm1414, %v459, %v625
      %v1434 = vsel %vm1414, %v352, %v627
      %v1435 = vsel %vm1414, %v460, %v629
      %v1436 = vsel %vm1414, %v355, %v631
      %v1437 = vsel %vm1414, %v461, %v633
      %v1438 = vsel %vm1414, %v358, %v635
      %v1439 = vsel %vm1414, %v462, %v637
      %v1440 = vsel %vm1414, %v361, %v639
      %v1441 = vsel %vm1414, %v463, %v641
      %v1442 = vsel %vm1414, %v364, %v643
      %v1443 = vsel %vm1414, %v464, %v645
      %v1444 = vsel %vm1414, %v367, %v647
      %vm1445 = vcmask 64512
      %v1446 = vsel %vm1445, %v1415, %v755
      %v1447 = vsel %vm1445, %v1416, %v757
      %v1448 = vsel %vm1445, %v1417, %v759
      %v1449 = vsel %vm1445, %v1418, %v761
      %v1450 = vsel %vm1445, %v1419, %v763
      %v1451 = vsel %vm1445, %v1420, %v765
      %v1452 = vsel %vm1445, %v1421, %v767
      %v1453 = vsel %vm1445, %v1422, %v769
      %v1454 = vsel %vm1445, %v1423, %v771
      %v1455 = vsel %vm1445, %v1424, %v773
      %v1456 = vsel %vm1445, %v1425, %v775
      %v1457 = vsel %vm1445, %v1426, %v777
      %v1458 = vsel %vm1445, %v1427, %v779
      %v1459 = vsel %vm1445, %v1428, %v781
      %v1460 = vsel %vm1445, %v1429, %v783
      %v1461 = vsel %vm1445, %v1430, %v785
      %v1462 = vsel %vm1445, %v1431, %v787
      %v1463 = vsel %vm1445, %v1432, %v789
      %v1464 = vsel %vm1445, %v1433, %v791
      %v1465 = vsel %vm1445, %v1434, %v793
      %v1466 = vsel %vm1445, %v1435, %v795
      %v1467 = vsel %vm1445, %v1436, %v797
      %v1468 = vsel %vm1445, %v1437, %v799
      %v1469 = vsel %vm1445, %v1438, %v801
      %v1470 = vsel %vm1445, %v1439, %v803
      %v1471 = vsel %vm1445, %v1440, %v805
      %v1472 = vsel %vm1445, %v1441, %v807
      %v1473 = vsel %vm1445, %v1442, %v809
      %v1474 = vsel %vm1445, %v1443, %v811
      %v1475 = vsel %vm1445, %v1444, %v813
      %vm1476 = vcmask 97280
      %v1477 = vsel %vm1476, %v1446, %v846
      %v1478 = vsel %vm1476, %v1447, %v848
      %v1479 = vsel %vm1476, %v1448, %v850
      %v1480 = vsel %vm1476, %v1449, %v852
      %v1481 = vsel %vm1476, %v1446, %v854
      %v1482 = vsel %vm1476, %v1447, %v856
      %v1483 = vsel %vm1476, %v1450, %v858
      %v1484 = vsel %vm1476, %v1451, %v860
      %v1485 = vsel %vm1476, %v1452, %v862
      %v1486 = vsel %vm1476, %v1453, %v864
      %v1487 = vsel %vm1476, %v1454, %v866
      %v1488 = vsel %vm1476, %v1455, %v868
      %v1489 = vsel %vm1476, %v1456, %v870
      %v1490 = vsel %vm1476, %v1457, %v872
      %v1491 = vsel %vm1476, %v1458, %v874
      %v1492 = vsel %vm1476, %v1459, %v876
      %v1493 = vsel %vm1476, %v1460, %v878
      %v1494 = vsel %vm1476, %v1461, %v880
      %v1495 = vsel %vm1476, %v1462, %v882
      %v1496 = vsel %vm1476, %v1463, %v884
      %v1497 = vsel %vm1476, %v1464, %v886
      %v1498 = vsel %vm1476, %v1465, %v888
      %v1499 = vsel %vm1476, %v1466, %v890
      %v1500 = vsel %vm1476, %v1467, %v892
      %v1501 = vsel %vm1476, %v1468, %v894
      %v1502 = vsel %vm1476, %v1469, %v896
      %v1503 = vsel %vm1476, %v1470, %v898
      %v1504 = vsel %vm1476, %v1471, %v900
      %v1505 = vsel %vm1476, %v1472, %v902
      %v1506 = vsel %vm1476, %v1473, %v904
      %v1507 = vsel %vm1476, %v1474, %v906
      %v1508 = vsel %vm1476, %v1475, %v908
      %vm1509 = vcmask 130048
      %v1510 = vsel %vm1509, %v1477, %v948
      %v1511 = vsel %vm1509, %v1478, %v950
      %v1512 = vsel %vm1509, %v1479, %v952
      %v1513 = vsel %vm1509, %v1480, %v954
      %v1514 = vsel %vm1509, %v1481, %v956
      %v1515 = vsel %vm1509, %v1482, %v958
      %v1516 = vsel %vm1509, %v1483, %v960
      %v1517 = vsel %vm1509, %v1484, %v962
      %v1518 = vsel %vm1509, %v1485, %v964
      %v1519 = vsel %vm1509, %v1486, %v966
      %v1520 = vsel %vm1509, %v1487, %v968
      %v1521 = vsel %vm1509, %v1488, %v970
      %v1522 = vsel %vm1509, %v1489, %v972
      %v1523 = vsel %vm1509, %v1490, %v974
      %v1524 = vsel %vm1509, %v1491, %v976
      %v1525 = vsel %vm1509, %v1492, %v978
      %v1526 = vsel %vm1509, %v1493, %v980
      %v1527 = vsel %vm1509, %v1494, %v982
      %v1528 = vsel %vm1509, %v1495, %v984
      %v1529 = vsel %vm1509, %v1496, %v986
      %v1530 = vsel %vm1509, %v1497, %v988
      %v1531 = vsel %vm1509, %v1498, %v990
      %v1532 = vsel %vm1509, %v1499, %v992
      %v1533 = vsel %vm1509, %v1500, %v994
      %v1534 = vsel %vm1509, %v1501, %v996
      %v1535 = vsel %vm1509, %v1502, %v998
      %v1536 = vsel %vm1509, %v1503, %v1000
      %v1537 = vsel %vm1509, %v1504, %v1002
      %v1538 = vsel %vm1509, %v1505, %v1004
      %v1539 = vsel %vm1509, %v1506, %v1006
      %v1540 = vsel %vm1509, %v1507, %v1008
      %v1541 = vsel %vm1509, %v1508, %v1010
      %vm1542 = vcmask 162816
      %v1543 = vsel %vm1542, %v1510, %v1049
      %v1544 = vsel %vm1542, %v1511, %v1051
      %v1545 = vsel %vm1542, %v1512, %v1053
      %v1546 = vsel %vm1542, %v1513, %v1055
      %v1547 = vsel %vm1542, %v1514, %v1057
      %v1548 = vsel %vm1542, %v1515, %v1059
      %v1549 = vsel %vm1542, %v1516, %v1061
      %v1550 = vsel %vm1542, %v1517, %v1063
      %v1551 = vsel %vm1542, %v1518, %v1065
      %v1552 = vsel %vm1542, %v1519, %v1067
      %v1553 = vsel %vm1542, %v1520, %v1069
      %v1554 = vsel %vm1542, %v1521, %v1071
      %v1555 = vsel %vm1542, %v1522, %v1073
      %v1556 = vsel %vm1542, %v1523, %v1075
      %v1557 = vsel %vm1542, %v1524, %v1077
      %v1558 = vsel %vm1542, %v1525, %v1079
      %v1559 = vsel %vm1542, %v1526, %v1081
      %v1560 = vsel %vm1542, %v1527, %v1083
      %v1561 = vsel %vm1542, %v1528, %v1085
      %v1562 = vsel %vm1542, %v1529, %v1087
      %v1563 = vsel %vm1542, %v1530, %v1089
      %v1564 = vsel %vm1542, %v1531, %v1091
      %v1565 = vsel %vm1542, %v1532, %v1093
      %v1566 = vsel %vm1542, %v1533, %v1095
      %v1567 = vsel %vm1542, %v1534, %v1097
      %v1568 = vsel %vm1542, %v1535, %v1099
      %v1569 = vsel %vm1542, %v1536, %v1101
      %v1570 = vsel %vm1542, %v1537, %v1103
      %v1571 = vsel %vm1542, %v1538, %v1105
      %v1572 = vsel %vm1542, %v1539, %v1107
      %v1573 = vsel %vm1542, %v1540, %v1109
      %v1574 = vsel %vm1542, %v1541, %v1111
      %vm1575 = vcmask 195584
      %v1576 = vsel %vm1575, %v1543, %v1145
      %v1577 = vsel %vm1575, %v1544, %v1147
      %v1578 = vsel %vm1575, %v1545, %v1149
      %v1579 = vsel %vm1575, %v1546, %v1151
      %v1580 = vsel %vm1575, %v1547, %v1153
      %v1581 = vsel %vm1575, %v1548, %v1155
      %v1582 = vsel %vm1575, %v1549, %v1157
      %v1583 = vsel %vm1575, %v1550, %v1159
      %v1584 = vsel %vm1575, %v1551, %v1161
      %v1585 = vsel %vm1575, %v1552, %v1163
      %v1586 = vsel %vm1575, %v1553, %v1165
      %v1587 = vsel %vm1575, %v1554, %v1167
      %v1588 = vsel %vm1575, %v1555, %v1169
      %v1589 = vsel %vm1575, %v1556, %v1171
      %v1590 = vsel %vm1575, %v1557, %v1173
      %v1591 = vsel %vm1575, %v1558, %v1175
      %v1592 = vsel %vm1575, %v1559, %v1177
      %v1593 = vsel %vm1575, %v1560, %v1179
      %v1594 = vsel %vm1575, %v1561, %v1181
      %v1595 = vsel %vm1575, %v1562, %v1183
      %v1596 = vsel %vm1575, %v1563, %v1185
      %v1597 = vsel %vm1575, %v1564, %v1187
      %v1598 = vsel %vm1575, %v1565, %v1189
      %v1599 = vsel %vm1575, %v1566, %v1191
      %v1600 = vsel %vm1575, %v1567, %v1193
      %v1601 = vsel %vm1575, %v1568, %v1195
      %v1602 = vsel %vm1575, %v1569, %v1197
      %v1603 = vsel %vm1575, %v1570, %v1199
      %v1604 = vsel %vm1575, %v1571, %v1201
      %v1605 = vsel %vm1575, %v1572, %v1203
      %v1606 = vsel %vm1575, %v1573, %v1197
      %v1607 = vsel %vm1575, %v1574, %v1199
      %vm1608 = vcmask 228352
      %v1609 = vsel %vm1608, %v1576, %v1235
      %v1610 = vsel %vm1608, %v1577, %v1237
      %v1611 = vsel %vm1608, %v1578, %v1239
      %v1612 = vsel %vm1608, %v1579, %v1241
      %v1613 = vsel %vm1608, %v1580, %v1243
      %v1614 = vsel %vm1608, %v1581, %v1245
      %v1615 = vsel %vm1608, %v1582, %v1247
      %v1616 = vsel %vm1608, %v1583, %v1249
      %v1617 = vsel %vm1608, %v1584, %v1251
      %v1618 = vsel %vm1608, %v1585, %v1253
      %v1619 = vsel %vm1608, %v1586, %v1255
      %v1620 = vsel %vm1608, %v1587, %v1257
      %v1621 = vsel %vm1608, %v1588, %v1259
      %v1622 = vsel %vm1608, %v1589, %v1261
      %v1623 = vsel %vm1608, %v1590, %v1263
      %v1624 = vsel %vm1608, %v1591, %v1265
      %v1625 = vsel %vm1608, %v1592, %v1267
      %v1626 = vsel %vm1608, %v1593, %v1269
      %v1627 = vsel %vm1608, %v1594, %v1271
      %v1628 = vsel %vm1608, %v1595, %v1273
      %v1629 = vsel %vm1608, %v1596, %v1275
      %v1630 = vsel %vm1608, %v1597, %v1277
      %v1631 = vsel %vm1608, %v1598, %v1279
      %v1632 = vsel %vm1608, %v1599, %v1281
      %v1633 = vsel %vm1608, %v1600, %v1283
      %v1634 = vsel %vm1608, %v1601, %v1285
      %v1635 = vsel %vm1608, %v1602, %v1287
      %v1636 = vsel %vm1608, %v1603, %v1289
      %v1637 = vsel %vm1608, %v1604, %v1291
      %v1638 = vsel %vm1608, %v1605, %v1293
      %v1639 = vsel %vm1608, %v1606, %v1287
      %v1640 = vsel %vm1608, %v1607, %v1289
      %vm1641 = vcmask 261120
      %v1642 = vsel %vm1641, %v1609, %v1325
      %v1643 = vsel %vm1641, %v1610, %v1327
      %v1644 = vsel %vm1641, %v1611, %v1329
      %v1645 = vsel %vm1641, %v1612, %v1331
      %v1646 = vsel %vm1641, %v1613, %v1333
      %v1647 = vsel %vm1641, %v1614, %v1335
      %v1648 = vsel %vm1641, %v1615, %v1337
      %v1649 = vsel %vm1641, %v1616, %v1339
      %v1650 = vsel %vm1641, %v1617, %v1341
      %v1651 = vsel %vm1641, %v1618, %v1343
      %v1652 = vsel %vm1641, %v1619, %v1345
      %v1653 = vsel %vm1641, %v1620, %v1347
      %v1654 = vsel %vm1641, %v1621, %v1349
      %v1655 = vsel %vm1641, %v1622, %v1351
      %v1656 = vsel %vm1641, %v1623, %v1353
      %v1657 = vsel %vm1641, %v1624, %v1355
      %v1658 = vsel %vm1641, %v1625, %v1357
      %v1659 = vsel %vm1641, %v1626, %v1359
      %v1660 = vsel %vm1641, %v1627, %v1361
      %v1661 = vsel %vm1641, %v1628, %v1363
      %v1662 = vsel %vm1641, %v1629, %v1365
      %v1663 = vsel %vm1641, %v1630, %v1367
      %v1664 = vsel %vm1641, %v1631, %v1369
      %v1665 = vsel %vm1641, %v1632, %v1371
      %v1666 = vsel %vm1641, %v1633, %v1373
      %v1667 = vsel %vm1641, %v1634, %v1375
      %v1668 = vsel %vm1641, %v1635, %v1377
      %v1669 = vsel %vm1641, %v1636, %v1379
      %v1670 = vsel %vm1641, %v1637, %v1381
      %v1671 = vsel %vm1641, %v1638, %v1383
      %v1672 = vsel %vm1641, %v1639, %v1377
      %v1673 = vsel %vm1641, %v1640, %v1379
      %v1674 = vpack.c.bf16 %v1643, %v1642
      %v1675 = vpack.c.bf16 %v1645, %v1644
      %v1676 = vpack.c.bf16 %v1647, %v1646
      %v1677 = vpack.c.bf16 %v1649, %v1648
      %v1678 = vpack.c.bf16 %v1651, %v1650
      %v1679 = vpack.c.bf16 %v1653, %v1652
      %v1680 = vpack.c.bf16 %v1655, %v1654
      %v1681 = vpack.c.bf16 %v1657, %v1656
      %v1682 = vpack.c.bf16 %v1659, %v1658
      %v1683 = vpack.c.bf16 %v1661, %v1660
      %v1684 = vpack.c.bf16 %v1663, %v1662
      %v1685 = vpack.c.bf16 %v1665, %v1664
      %v1686 = vpack.c.bf16 %v1667, %v1666
      %v1687 = vpack.c.bf16 %v1669, %v1668
      %v1688 = vpack.c.bf16 %v1671, %v1670
      %v1689 = vpack.c.bf16 %v1673, %v1672
      %v1690 = vld [vmem:[%s1] sm:$0xf]
      %v1691 = vld [vmem:[%s1 + $0x4] sm:$0xf]
      %v1692 = vld [vmem:[%s1 + $0x8] sm:$0xf]
      %v1693 = vld [vmem:[%s1 + $0xc] sm:$0xf]
      %v1694 = vld [vmem:[%s1 + $0x10] sm:$0x3]
      %v1695 = vld [vmem:[%s2] sm:$0x1]
      %v1697 = vlaneseq
      %v1698 = vshrl.u32 %v1697, 7
      %v1699 = vsub.s32 0, %v1698
      %v1700 = vrot.slane %v1695, %v1699
      %v1707 = vunpack.c.l.b16 %v1690
      %v1708 = vunpack.c.l.b16 %v1691
      %v1709 = vunpack.c.l.b16 %v1692
      %v1710 = vunpack.c.l.b16 %v1693
      %v1711 = vunpack.c.l.b16 %v1694
      %v1712 = vpack.c.b16 %v1708, %v1707
      %v1713 = vpack.c.b16 %v1710, %v1709
      %v1714 = vpack.c.b16 %v1711, %v1711
      %vm1717 = vcmask 293888
      %v1719 = vsel %vm1717, %v1674, 0
      %v1722 = vsel %vm1717, %v1675, 0
      %v1725 = vsel %vm1717, %v1676, 0
      %v1728 = vsel %vm1717, %v1677, 0
      %v1731 = vsel %vm1717, %v1678, 0
      %v1734 = vsel %vm1717, %v1679, 0
      %v1737 = vsel %vm1717, %v1680, 0
      %v1740 = vsel %vm1717, %v1681, 0
      %v1743 = vsel %vm1717, %v1682, 0
      %v1746 = vsel %vm1717, %v1683, 0
      %v1749 = vsel %vm1717, %v1684, 0
      %v1752 = vsel %vm1717, %v1685, 0
      %v1755 = vsel %vm1717, %v1686, 0
      %v1758 = vsel %vm1717, %v1687, 0
      %v1761 = vsel %vm1717, %v1688, 0
      %v1764 = vsel %vm1717, %v1689, 0
      %vm1766 = vcmask 1041408
      %v1768 = vsel %vm1766, %v1714, 0
      %1770 = vmatprep.subr.bf16.mxu0 0
      %1771 = vmatpush1.bf16.msra.mxu0 %v1712
      %1772 = vmatprep.subr.bf16.mxu0 0
      %1773 = vmatpush1.bf16.msra.mxu0 %v1713
      %1774 = vmatprep.subr.bf16.mxu0 0
      %1775 = vmatpush1.bf16.msra.mxu0 %v1768
      %1776 = vmatprep.subr.bf16.mxu0 0
      %1777 = vmatpush1.bf16.msra.mxu0 0
      %1778 = vmatprep.subr.bf16.mxu0 0
      %1779 = vmatpush1.bf16.msra.mxu0 0
      %1780 = vmatprep.subr.bf16.mxu0 0
      %1781 = vmatpush1.bf16.msra.mxu0 0
      %1782 = vmatprep.subr.bf16.mxu0 0
      %1783 = vmatpush1.bf16.msra.mxu0 0
      %1784 = vmatprep.subr.bf16.mxu0 0
      %1785 = vmatpush1.bf16.msra.mxu0 0
      %1786 = vmatprep.subr.bf16.mxu0 0
      %1787 = vmatpush1.bf16.msra.mxu0 0
      %1788 = vmatprep.subr.bf16.mxu0 0
      %1789 = vmatpush1.bf16.msra.mxu0 0
      %1790 = vmatprep.subr.bf16.mxu0 0
      %1791 = vmatpush1.bf16.msra.mxu0 0
      %1792 = vmatprep.subr.bf16.mxu0 0
      %1793 = vmatpush1.bf16.msra.mxu0 0
      %1794 = vmatprep.subr.bf16.mxu0 0
      %1795 = vmatpush1.bf16.msra.mxu0 0
      %1796 = vmatprep.subr.bf16.mxu0 0
      %1797 = vmatpush1.bf16.msra.mxu0 0
      %1798 = vmatprep.subr.bf16.mxu0 0
      %1799 = vmatpush1.bf16.msra.mxu0 0
      %1800 = vmatprep.subr.bf16.mxu0 0
      %1801 = vmatpush1.bf16.msra.mxu0 0
      %1802 = vmatprep.mubr.bf16.mxu0 0
      %1803 = vmatmul.mubr.bf16.gmra.mrb[0].mxu0 %v1719
      %v1804 = vpop.f32.mrb[0].mxu0
      %v1805 = vadd.f32 %v1700, %v1804
      %v1806 = vpop.f32.mrb[0].mxu0
      %v1807 = vpop.f32.mrb[0].mxu0
      %v1808 = vadd.f32 %v1700, %v1807
      %v1809 = vpop.f32.mrb[0].mxu0
      %1810 = vmatprep.mubr.bf16.mxu0 0
      %1811 = vmatmul.mubr.bf16.gmra.mrb[0].mxu0 %v1722
      %v1812 = vpop.f32.mrb[0].mxu0
      %v1813 = vadd.f32 %v1700, %v1812
      %v1814 = vpop.f32.mrb[0].mxu0
      %v1815 = vpop.f32.mrb[0].mxu0
      %v1816 = vadd.f32 %v1700, %v1815
      %v1817 = vpop.f32.mrb[0].mxu0
      %1818 = vmatprep.mubr.bf16.mxu0 0
      %1819 = vmatmul.mubr.bf16.gmra.mrb[0].mxu0 %v1725
      %v1820 = vpop.f32.mrb[0].mxu0
      %v1821 = vadd.f32 %v1700, %v1820
      %v1822 = vpop.f32.mrb[0].mxu0
      %v1823 = vpop.f32.mrb[0].mxu0
      %v1824 = vadd.f32 %v1700, %v1823
      %v1825 = vpop.f32.mrb[0].mxu0
      %1826 = vmatprep.mubr.bf16.mxu0 0
      %1827 = vmatmul.mubr.bf16.gmra.mrb[0].mxu0 %v1728
      %v1828 = vpop.f32.mrb[0].mxu0
      %v1829 = vadd.f32 %v1700, %v1828
      %v1830 = vpop.f32.mrb[0].mxu0
      %v1831 = vpop.f32.mrb[0].mxu0
      %v1832 = vadd.f32 %v1700, %v1831
      %v1833 = vpop.f32.mrb[0].mxu0
      %1834 = vmatprep.mubr.bf16.mxu0 0
      %1835 = vmatmul.mubr.bf16.gmra.mrb[0].mxu0 %v1731
      %v1836 = vpop.f32.mrb[0].mxu0
      %v1837 = vadd.f32 %v1700, %v1836
      %v1838 = vpop.f32.mrb[0].mxu0
      %v1839 = vpop.f32.mrb[0].mxu0
      %v1840 = vadd.f32 %v1700, %v1839
      %v1841 = vpop.f32.mrb[0].mxu0
      %1842 = vmatprep.mubr.bf16.mxu0 0
      %1843 = vmatmul.mubr.bf16.gmra.mrb[0].mxu0 %v1734
      %v1844 = vpop.f32.mrb[0].mxu0
      %v1845 = vadd.f32 %v1700, %v1844
      %v1846 = vpop.f32.mrb[0].mxu0
      %v1847 = vpop.f32.mrb[0].mxu0
      %v1848 = vadd.f32 %v1700, %v1847
      %v1849 = vpop.f32.mrb[0].mxu0
      %1850 = vmatprep.mubr.bf16.mxu0 0
      %1851 = vmatmul.mubr.bf16.gmra.mrb[0].mxu0 %v1737
      %v1852 = vpop.f32.mrb[0].mxu0
      %v1853 = vadd.f32 %v1700, %v1852
      %v1854 = vpop.f32.mrb[0].mxu0
      %v1855 = vpop.f32.mrb[0].mxu0
      %v1856 = vadd.f32 %v1700, %v1855
      %v1857 = vpop.f32.mrb[0].mxu0
      %1858 = vmatprep.mubr.bf16.mxu0 0
      %1859 = vmatmul.mubr.bf16.gmra.mrb[0].mxu0 %v1740
      %v1860 = vpop.f32.mrb[0].mxu0
      %v1861 = vadd.f32 %v1700, %v1860
      %v1862 = vpop.f32.mrb[0].mxu0
      %v1863 = vpop.f32.mrb[0].mxu0
      %v1864 = vadd.f32 %v1700, %v1863
      %v1865 = vpop.f32.mrb[0].mxu0
      %1866 = vmatprep.mubr.bf16.mxu0 0
      %1867 = vmatmul.mubr.bf16.gmra.mrb[0].mxu0 %v1743
      %v1868 = vpop.f32.mrb[0].mxu0
      %v1869 = vadd.f32 %v1700, %v1868
      %v1870 = vpop.f32.mrb[0].mxu0
      %v1871 = vpop.f32.mrb[0].mxu0
      %v1872 = vadd.f32 %v1700, %v1871
      %v1873 = vpop.f32.mrb[0].mxu0
      %1874 = vmatprep.mubr.bf16.mxu0 0
      %1875 = vmatmul.mubr.bf16.gmra.mrb[0].mxu0 %v1746
      %v1876 = vpop.f32.mrb[0].mxu0
      %v1877 = vadd.f32 %v1700, %v1876
      %v1878 = vpop.f32.mrb[0].mxu0
      %v1879 = vpop.f32.mrb[0].mxu0
      %v1880 = vadd.f32 %v1700, %v1879
      %v1881 = vpop.f32.mrb[0].mxu0
      %1882 = vmatprep.mubr.bf16.mxu0 0
      %1883 = vmatmul.mubr.bf16.gmra.mrb[0].mxu0 %v1749
      %v1884 = vpop.f32.mrb[0].mxu0
      %v1885 = vadd.f32 %v1700, %v1884
      %v1886 = vpop.f32.mrb[0].mxu0
      %v1887 = vpop.f32.mrb[0].mxu0
      %v1888 = vadd.f32 %v1700, %v1887
      %v1889 = vpop.f32.mrb[0].mxu0
      %1890 = vmatprep.mubr.bf16.mxu0 0
      %1891 = vmatmul.mubr.bf16.gmra.mrb[0].mxu0 %v1752
      %v1892 = vpop.f32.mrb[0].mxu0
      %v1893 = vadd.f32 %v1700, %v1892
      %v1894 = vpop.f32.mrb[0].mxu0
      %v1895 = vpop.f32.mrb[0].mxu0
      %v1896 = vadd.f32 %v1700, %v1895
      %v1897 = vpop.f32.mrb[0].mxu0
      %1898 = vmatprep.mubr.bf16.mxu0 0
      %1899 = vmatmul.mubr.bf16.gmra.mrb[0].mxu0 %v1755
      %v1900 = vpop.f32.mrb[0].mxu0
      %v1901 = vadd.f32 %v1700, %v1900
      %v1902 = vpop.f32.mrb[0].mxu0
      %v1903 = vpop.f32.mrb[0].mxu0
      %v1904 = vadd.f32 %v1700, %v1903
      %v1905 = vpop.f32.mrb[0].mxu0
      %1906 = vmatprep.mubr.bf16.mxu0 0
      %1907 = vmatmul.mubr.bf16.gmra.mrb[0].mxu0 %v1758
      %v1908 = vpop.f32.mrb[0].mxu0
      %v1909 = vadd.f32 %v1700, %v1908
      %v1910 = vpop.f32.mrb[0].mxu0
      %v1911 = vpop.f32.mrb[0].mxu0
      %v1912 = vadd.f32 %v1700, %v1911
      %v1913 = vpop.f32.mrb[0].mxu0
      %1914 = vmatprep.mubr.bf16.mxu0 0
      %1915 = vmatmul.mubr.bf16.gmra.mrb[0].mxu0 %v1761
      %v1916 = vpop.f32.mrb[0].mxu0
      %v1917 = vadd.f32 %v1700, %v1916
      %v1918 = vpop.f32.mrb[0].mxu0
      %v1919 = vpop.f32.mrb[0].mxu0
      %v1920 = vadd.f32 %v1700, %v1919
      %v1921 = vpop.f32.mrb[0].mxu0
      %1922 = vmatprep.mubr.bf16.mxu0 0
      %1923 = vmatmul.mubr.bf16.gmra.mrb[0].mxu0 %v1764
      %v1924 = vpop.f32.mrb[0].mxu0
      %v1925 = vadd.f32 %v1700, %v1924
      %v1926 = vpop.f32.mrb[0].mxu0
      %v1927 = vpop.f32.mrb[0].mxu0
      %v1928 = vadd.f32 %v1700, %v1927
      %v1929 = vpop.f32.mrb[0].mxu0
      %1930 = vdwg.mxu0
      %v1931 = vsel %vm1414, %v1805, 0.0
      %v1932 = vsel %vm1414, %v1808, 0.0
      %v1933 = vadd.f32 %v1931, %v1932
      %v1934 = vsel %vm1414, %v1813, 0.0
      %v1935 = vadd.f32 %v1933, %v1934
      %v1936 = vsel %vm1414, %v1816, 0.0
      %v1937 = vadd.f32 %v1935, %v1936
      %v1938 = vsel %vm1414, %v1821, 0.0
      %v1939 = vadd.f32 %v1937, %v1938
      %v1940 = vsel %vm1414, %v1824, 0.0
      %v1941 = vadd.f32 %v1939, %v1940
      %v1942 = vsel %vm1414, %v1829, 0.0
      %v1943 = vadd.f32 %v1941, %v1942
      %v1944 = vsel %vm1414, %v1832, 0.0
      %v1945 = vadd.f32 %v1943, %v1944
      %v1946 = vsel %vm1414, %v1837, 0.0
      %v1947 = vadd.f32 %v1945, %v1946
      %v1948 = vsel %vm1414, %v1840, 0.0
      %v1949 = vadd.f32 %v1947, %v1948
      %v1950 = vsel %vm1414, %v1845, 0.0
      %v1951 = vadd.f32 %v1949, %v1950
      %v1952 = vsel %vm1414, %v1848, 0.0
      %v1953 = vadd.f32 %v1951, %v1952
      %v1954 = vsel %vm1414, %v1853, 0.0
      %v1955 = vadd.f32 %v1953, %v1954
      %v1956 = vsel %vm1414, %v1856, 0.0
      %v1957 = vadd.f32 %v1955, %v1956
      %v1958 = vsel %vm1414, %v1861, 0.0
      %v1959 = vadd.f32 %v1957, %v1958
      %v1960 = vsel %vm1414, %v1864, 0.0
      %v1961 = vadd.f32 %v1959, %v1960
      %v1962 = vsel %vm1414, %v1869, 0.0
      %v1963 = vadd.f32 %v1961, %v1962
      %v1964 = vsel %vm1414, %v1872, 0.0
      %v1965 = vadd.f32 %v1963, %v1964
      %v1966 = vsel %vm1414, %v1877, 0.0
      %v1967 = vadd.f32 %v1965, %v1966
      %v1968 = vsel %vm1414, %v1880, 0.0
      %v1969 = vadd.f32 %v1967, %v1968
      %v1970 = vsel %vm1414, %v1885, 0.0
      %v1971 = vadd.f32 %v1969, %v1970
      %v1972 = vsel %vm1414, %v1888, 0.0
      %v1973 = vadd.f32 %v1971, %v1972
      %v1974 = vsel %vm1414, %v1893, 0.0
      %v1975 = vadd.f32 %v1973, %v1974
      %v1976 = vsel %vm1414, %v1896, 0.0
      %v1977 = vadd.f32 %v1975, %v1976
      %v1978 = vsel %vm1414, %v1901, 0.0
      %v1979 = vadd.f32 %v1977, %v1978
      %v1980 = vsel %vm1414, %v1904, 0.0
      %v1981 = vadd.f32 %v1979, %v1980
      %v1982 = vsel %vm1414, %v1909, 0.0
      %v1983 = vadd.f32 %v1981, %v1982
      %v1984 = vsel %vm1414, %v1912, 0.0
      %v1985 = vadd.f32 %v1983, %v1984
      %v1986 = vsel %vm1414, %v1917, 0.0
      %v1987 = vadd.f32 %v1985, %v1986
      %v1988 = vsel %vm1414, %v1920, 0.0
      %v1989 = vadd.f32 %v1987, %v1988
      %v1990 = vsel %vm1414, %v1925, 0.0
      %v1991 = vadd.f32 %v1989, %v1990
      %v1992 = vsel %vm1414, %v1928, 0.0
      %v1993 = vadd.f32 %v1991, %v1992
      %v1994 = vrot.slane %v1993, 4
      %v1995 = vadd.f32 %v1993, %v1994
      %v1996 = vrot.slane %v1995, 2
      %v1997 = vadd.f32 %v1995, %v1996
      %v1998 = vrot.slane %v1997, 1
      %v1999 = vadd.f32 %v1997, %v1998
      %v2000 = vrcp.pop 256.0
      %v2001 = vmul.f32 %v1999, %v2000
      %v2002 = vsub.f32 %v1805, %v2001
      %v2003 = vsub.f32 %v1808, %v2001
      %v2004 = vsub.f32 %v1813, %v2001
      %v2005 = vsub.f32 %v1816, %v2001
      %v2006 = vsub.f32 %v1821, %v2001
      %v2007 = vsub.f32 %v1824, %v2001
      %v2008 = vsub.f32 %v1829, %v2001
      %v2009 = vsub.f32 %v1832, %v2001
      %v2010 = vsub.f32 %v1837, %v2001
      %v2011 = vsub.f32 %v1840, %v2001
      %v2012 = vsub.f32 %v1845, %v2001
      %v2013 = vsub.f32 %v1848, %v2001
      %v2014 = vsub.f32 %v1853, %v2001
      %v2015 = vsub.f32 %v1856, %v2001
      %v2016 = vsub.f32 %v1861, %v2001
      %v2017 = vsub.f32 %v1864, %v2001
      %v2018 = vsub.f32 %v1869, %v2001
      %v2019 = vsub.f32 %v1872, %v2001
      %v2020 = vsub.f32 %v1877, %v2001
      %v2021 = vsub.f32 %v1880, %v2001
      %v2022 = vsub.f32 %v1885, %v2001
      %v2023 = vsub.f32 %v1888, %v2001
      %v2024 = vsub.f32 %v1893, %v2001
      %v2025 = vsub.f32 %v1896, %v2001
      %v2026 = vsub.f32 %v1901, %v2001
      %v2027 = vsub.f32 %v1904, %v2001
      %v2028 = vsub.f32 %v1909, %v2001
      %v2029 = vsub.f32 %v1912, %v2001
      %v2030 = vsub.f32 %v1917, %v2001
      %v2031 = vsub.f32 %v1920, %v2001
      %v2032 = vsub.f32 %v1925, %v2001
      %v2033 = vsub.f32 %v1928, %v2001
      %v2034 = vmul.f32 %v2002, %v2002
      %v2035 = vmul.f32 %v2003, %v2003
      %v2036 = vmul.f32 %v2004, %v2004
      %v2037 = vmul.f32 %v2005, %v2005
      %v2038 = vmul.f32 %v2006, %v2006
      %v2039 = vmul.f32 %v2007, %v2007
      %v2040 = vmul.f32 %v2008, %v2008
      %v2041 = vmul.f32 %v2009, %v2009
      %v2042 = vmul.f32 %v2010, %v2010
      %v2043 = vmul.f32 %v2011, %v2011
      %v2044 = vmul.f32 %v2012, %v2012
      %v2045 = vmul.f32 %v2013, %v2013
      %v2046 = vmul.f32 %v2014, %v2014
      %v2047 = vmul.f32 %v2015, %v2015
      %v2048 = vmul.f32 %v2016, %v2016
      %v2049 = vmul.f32 %v2017, %v2017
      %v2050 = vmul.f32 %v2018, %v2018
      %v2051 = vmul.f32 %v2019, %v2019
      %v2052 = vmul.f32 %v2020, %v2020
      %v2053 = vmul.f32 %v2021, %v2021
      %v2054 = vmul.f32 %v2022, %v2022
      %v2055 = vmul.f32 %v2023, %v2023
      %v2056 = vmul.f32 %v2024, %v2024
      %v2057 = vmul.f32 %v2025, %v2025
      %v2058 = vmul.f32 %v2026, %v2026
      %v2059 = vmul.f32 %v2027, %v2027
      %v2060 = vmul.f32 %v2028, %v2028
      %v2061 = vmul.f32 %v2029, %v2029
      %v2062 = vmul.f32 %v2030, %v2030
      %v2063 = vmul.f32 %v2031, %v2031
      %v2064 = vmul.f32 %v2032, %v2032
      %v2065 = vmul.f32 %v2033, %v2033
      %v2066 = vsel %vm1414, %v2034, 0.0
      %v2067 = vsel %vm1414, %v2035, 0.0
      %v2068 = vadd.f32 %v2066, %v2067
      %v2069 = vsel %vm1414, %v2036, 0.0
      %v2070 = vadd.f32 %v2068, %v2069
      %v2071 = vsel %vm1414, %v2037, 0.0
      %v2072 = vadd.f32 %v2070, %v2071
      %v2073 = vsel %vm1414, %v2038, 0.0
      %v2074 = vadd.f32 %v2072, %v2073
      %v2075 = vsel %vm1414, %v2039, 0.0
      %v2076 = vadd.f32 %v2074, %v2075
      %v2077 = vsel %vm1414, %v2040, 0.0
      %v2078 = vadd.f32 %v2076, %v2077
      %v2079 = vsel %vm1414, %v2041, 0.0
      %v2080 = vadd.f32 %v2078, %v2079
      %v2081 = vsel %vm1414, %v2042, 0.0
      %v2082 = vadd.f32 %v2080, %v2081
      %v2083 = vsel %vm1414, %v2043, 0.0
      %v2084 = vadd.f32 %v2082, %v2083
      %v2085 = vsel %vm1414, %v2044, 0.0
      %v2086 = vadd.f32 %v2084, %v2085
      %v2087 = vsel %vm1414, %v2045, 0.0
      %v2088 = vadd.f32 %v2086, %v2087
      %v2089 = vsel %vm1414, %v2046, 0.0
      %v2090 = vadd.f32 %v2088, %v2089
      %v2091 = vsel %vm1414, %v2047, 0.0
      %v2092 = vadd.f32 %v2090, %v2091
      %v2093 = vsel %vm1414, %v2048, 0.0
      %v2094 = vadd.f32 %v2092, %v2093
      %v2095 = vsel %vm1414, %v2049, 0.0
      %v2096 = vadd.f32 %v2094, %v2095
      %v2097 = vsel %vm1414, %v2050, 0.0
      %v2098 = vadd.f32 %v2096, %v2097
      %v2099 = vsel %vm1414, %v2051, 0.0
      %v2100 = vadd.f32 %v2098, %v2099
      %v2101 = vsel %vm1414, %v2052, 0.0
      %v2102 = vadd.f32 %v2100, %v2101
      %v2103 = vsel %vm1414, %v2053, 0.0
      %v2104 = vadd.f32 %v2102, %v2103
      %v2105 = vsel %vm1414, %v2054, 0.0
      %v2106 = vadd.f32 %v2104, %v2105
      %v2107 = vsel %vm1414, %v2055, 0.0
      %v2108 = vadd.f32 %v2106, %v2107
      %v2109 = vsel %vm1414, %v2056, 0.0
      %v2110 = vadd.f32 %v2108, %v2109
      %v2111 = vsel %vm1414, %v2057, 0.0
      %v2112 = vadd.f32 %v2110, %v2111
      %v2113 = vsel %vm1414, %v2058, 0.0
      %v2114 = vadd.f32 %v2112, %v2113
      %v2115 = vsel %vm1414, %v2059, 0.0
      %v2116 = vadd.f32 %v2114, %v2115
      %v2117 = vsel %vm1414, %v2060, 0.0
      %v2118 = vadd.f32 %v2116, %v2117
      %v2119 = vsel %vm1414, %v2061, 0.0
      %v2120 = vadd.f32 %v2118, %v2119
      %v2121 = vsel %vm1414, %v2062, 0.0
      %v2122 = vadd.f32 %v2120, %v2121
      %v2123 = vsel %vm1414, %v2063, 0.0
      %v2124 = vadd.f32 %v2122, %v2123
      %v2125 = vsel %vm1414, %v2064, 0.0
      %v2126 = vadd.f32 %v2124, %v2125
      %v2127 = vsel %vm1414, %v2065, 0.0
      %v2128 = vadd.f32 %v2126, %v2127
      %v2129 = vrot.slane %v2128, 4
      %v2130 = vadd.f32 %v2128, %v2129
      %v2131 = vrot.slane %v2130, 2
      %v2132 = vadd.f32 %v2130, %v2131
      %v2133 = vrot.slane %v2132, 1
      %v2134 = vadd.f32 %v2132, %v2133
      %v2135 = vmul.f32 %v2134, %v2000
      %v2136 = vadd.f32 %v2135, 1e-05
      %v2137 = vrsqrt.pop %v2136
      %v2138 = vmul.f32 %v2002, %v2137
      %v2139 = vmul.f32 %v2003, %v2137
      %v2140 = vmul.f32 %v2004, %v2137
      %v2141 = vmul.f32 %v2005, %v2137
      %v2142 = vmul.f32 %v2006, %v2137
      %v2143 = vmul.f32 %v2007, %v2137
      %v2144 = vmul.f32 %v2008, %v2137
      %v2145 = vmul.f32 %v2009, %v2137
      %v2146 = vmul.f32 %v2010, %v2137
      %v2147 = vmul.f32 %v2011, %v2137
      %v2148 = vmul.f32 %v2012, %v2137
      %v2149 = vmul.f32 %v2013, %v2137
      %v2150 = vmul.f32 %v2014, %v2137
      %v2151 = vmul.f32 %v2015, %v2137
      %v2152 = vmul.f32 %v2016, %v2137
      %v2153 = vmul.f32 %v2017, %v2137
      %v2154 = vmul.f32 %v2018, %v2137
      %v2155 = vmul.f32 %v2019, %v2137
      %v2156 = vmul.f32 %v2020, %v2137
      %v2157 = vmul.f32 %v2021, %v2137
      %v2158 = vmul.f32 %v2022, %v2137
      %v2159 = vmul.f32 %v2023, %v2137
      %v2160 = vmul.f32 %v2024, %v2137
      %v2161 = vmul.f32 %v2025, %v2137
      %v2162 = vmul.f32 %v2026, %v2137
      %v2163 = vmul.f32 %v2027, %v2137
      %v2164 = vmul.f32 %v2028, %v2137
      %v2165 = vmul.f32 %v2029, %v2137
      %v2166 = vmul.f32 %v2030, %v2137
      %v2167 = vmul.f32 %v2031, %v2137
      %v2168 = vmul.f32 %v2032, %v2137
      %v2169 = vmul.f32 %v2033, %v2137
      %v2170 = vmax.f32 %v2138, 0.0
      %v2171 = vmax.f32 %v2139, 0.0
      %v2172 = vmax.f32 %v2140, 0.0
      %v2173 = vmax.f32 %v2141, 0.0
      %v2174 = vmax.f32 %v2142, 0.0
      %v2175 = vmax.f32 %v2143, 0.0
      %v2176 = vmax.f32 %v2144, 0.0
      %v2177 = vmax.f32 %v2145, 0.0
      %v2178 = vmax.f32 %v2146, 0.0
      %v2179 = vmax.f32 %v2147, 0.0
      %v2180 = vmax.f32 %v2148, 0.0
      %v2181 = vmax.f32 %v2149, 0.0
      %v2182 = vmax.f32 %v2150, 0.0
      %v2183 = vmax.f32 %v2151, 0.0
      %v2184 = vmax.f32 %v2152, 0.0
      %v2185 = vmax.f32 %v2153, 0.0
      %v2186 = vmax.f32 %v2154, 0.0
      %v2187 = vmax.f32 %v2155, 0.0
      %v2188 = vmax.f32 %v2156, 0.0
      %v2189 = vmax.f32 %v2157, 0.0
      %v2190 = vmax.f32 %v2158, 0.0
      %v2191 = vmax.f32 %v2159, 0.0
      %v2192 = vmax.f32 %v2160, 0.0
      %v2193 = vmax.f32 %v2161, 0.0
      %v2194 = vmax.f32 %v2162, 0.0
      %v2195 = vmax.f32 %v2163, 0.0
      %v2196 = vmax.f32 %v2164, 0.0
      %v2197 = vmax.f32 %v2165, 0.0
      %v2198 = vmax.f32 %v2166, 0.0
      %v2199 = vmax.f32 %v2167, 0.0
      %v2200 = vmax.f32 %v2168, 0.0
      %v2201 = vmax.f32 %v2169, 0.0
      %v2218 = vrot.slane %v2172, 1
      %v2219 = vrot.slane %v2170, 1
      %v2220 = vrot.slane %v2174, 1
      %v2221 = vrot.slane %v2176, 1
      %v2222 = vrot.slane %v2178, 1
      %v2223 = vrot.slane %v2180, 1
      %v2224 = vrot.slane %v2182, 1
      %v2225 = vrot.slane %v2184, 1
      %v2226 = vrot.slane %v2186, 1
      %v2227 = vrot.slane %v2188, 1
      %v2228 = vrot.slane %v2190, 1
      %v2229 = vrot.slane %v2192, 1
      %v2230 = vrot.slane %v2194, 1
      %v2231 = vrot.slane %v2196, 1
      %v2232 = vrot.slane %v2198, 1
      %v2233 = vrot.slane %v2200, 1
      %v2266 = vrot.slane %v2172, 7
      %v2267 = vrot.slane %v2173, 7
      %v2268 = vsel %vm322, %v2266, %v2267
      %v2269 = vrot.slane %v2170, 7
      %v2270 = vrot.slane %v2171, 7
      %v2271 = vsel %vm322, %v2269, %v2270
      %v2272 = vrot.slane %v2174, 7
      %v2273 = vrot.slane %v2175, 7
      %v2274 = vsel %vm322, %v2272, %v2273
      %v2275 = vrot.slane %v2176, 7
      %v2276 = vrot.slane %v2177, 7
      %v2277 = vsel %vm322, %v2275, %v2276
      %v2278 = vrot.slane %v2178, 7
      %v2279 = vrot.slane %v2179, 7
      %v2280 = vsel %vm322, %v2278, %v2279
      %v2281 = vrot.slane %v2180, 7
      %v2282 = vrot.slane %v2181, 7
      %v2283 = vsel %vm322, %v2281, %v2282
      %v2284 = vrot.slane %v2182, 7
      %v2285 = vrot.slane %v2183, 7
      %v2286 = vsel %vm322, %v2284, %v2285
      %v2287 = vrot.slane %v2184, 7
      %v2288 = vrot.slane %v2185, 7
      %v2289 = vsel %vm322, %v2287, %v2288
      %v2290 = vrot.slane %v2186, 7
      %v2291 = vrot.slane %v2187, 7
      %v2292 = vsel %vm322, %v2290, %v2291
      %v2293 = vrot.slane %v2188, 7
      %v2294 = vrot.slane %v2189, 7
      %v2295 = vsel %vm322, %v2293, %v2294
      %v2296 = vrot.slane %v2190, 7
      %v2297 = vrot.slane %v2191, 7
      %v2298 = vsel %vm322, %v2296, %v2297
      %v2299 = vrot.slane %v2192, 7
      %v2300 = vrot.slane %v2193, 7
      %v2301 = vsel %vm322, %v2299, %v2300
      %v2302 = vrot.slane %v2194, 7
      %v2303 = vrot.slane %v2195, 7
      %v2304 = vsel %vm322, %v2302, %v2303
      %v2305 = vrot.slane %v2196, 7
      %v2306 = vrot.slane %v2197, 7
      %v2307 = vsel %vm322, %v2305, %v2306
      %v2308 = vrot.slane %v2198, 7
      %v2309 = vrot.slane %v2199, 7
      %v2310 = vsel %vm322, %v2308, %v2309
      %v2311 = vrot.slane %v2200, 7
      %v2312 = vrot.slane %v2201, 7
      %v2313 = vsel %vm322, %v2311, %v2312
      %v2361 = vrot.slane %v2173, 5
      %v2362 = vrot.slane %v2171, 5
      %v2363 = vrot.slane %v2175, 5
      %v2364 = vrot.slane %v2177, 5
      %v2365 = vrot.slane %v2179, 5
      %v2366 = vrot.slane %v2181, 5
      %v2367 = vrot.slane %v2183, 5
      %v2368 = vrot.slane %v2185, 5
      %v2369 = vrot.slane %v2187, 5
      %v2370 = vrot.slane %v2189, 5
      %v2371 = vrot.slane %v2191, 5
      %v2372 = vrot.slane %v2193, 5
      %v2373 = vrot.slane %v2195, 5
      %v2374 = vrot.slane %v2197, 5
      %v2375 = vrot.slane %v2199, 5
      %v2376 = vrot.slane %v2201, 5
      %v2393 = vsel %vm322, %v2218, %v2266
      %v2394 = vsel %vm322, %v2219, %v2269
      %v2395 = vsel %vm322, %v2220, %v2272
      %v2396 = vsel %vm322, %v2221, %v2275
      %v2397 = vsel %vm322, %v2222, %v2278
      %v2398 = vsel %vm322, %v2223, %v2281
      %v2399 = vsel %vm322, %v2224, %v2284
      %v2400 = vsel %vm322, %v2225, %v2287
      %v2401 = vsel %vm322, %v2226, %v2290
      %v2402 = vsel %vm322, %v2227, %v2293
      %v2403 = vsel %vm322, %v2228, %v2296
      %v2404 = vsel %vm322, %v2229, %v2299
      %v2405 = vsel %vm322, %v2230, %v2302
      %v2406 = vsel %vm322, %v2231, %v2305
      %v2407 = vsel %vm322, %v2232, %v2308
      %v2408 = vsel %vm322, %v2233, %v2311
      %v2409 = vsel %vm322, %v2267, %v2361
      %v2410 = vsel %vm322, %v2270, %v2362
      %v2411 = vsel %vm322, %v2273, %v2363
      %v2412 = vsel %vm322, %v2276, %v2364
      %v2413 = vsel %vm322, %v2279, %v2365
      %v2414 = vsel %vm322, %v2282, %v2366
      %v2415 = vsel %vm322, %v2285, %v2367
      %v2416 = vsel %vm322, %v2288, %v2368
      %v2417 = vsel %vm322, %v2291, %v2369
      %v2418 = vsel %vm322, %v2294, %v2370
      %v2419 = vsel %vm322, %v2297, %v2371
      %v2420 = vsel %vm322, %v2300, %v2372
      %v2421 = vsel %vm322, %v2303, %v2373
      %v2422 = vsel %vm322, %v2306, %v2374
      %v2423 = vsel %vm322, %v2309, %v2375
      %v2424 = vsel %vm322, %v2312, %v2376
      %v2455 = vrot.slane %v2393, 1
      %v2456 = vrot.slane %v2268, 1
      %v2457 = vsel %vm512, %v2455, %v2456
      %v2458 = vrot.slane %v2409, 1
      %v2459 = vsel %vm512, %v2456, %v2458
      %v2460 = vrot.slane %v2394, 1
      %v2461 = vrot.slane %v2271, 1
      %v2462 = vsel %vm512, %v2460, %v2461
      %v2463 = vrot.slane %v2410, 1
      %v2464 = vsel %vm512, %v2461, %v2463
      %v2465 = vrot.slane %v2395, 1
      %v2466 = vrot.slane %v2274, 1
      %v2467 = vsel %vm512, %v2465, %v2466
      %v2468 = vrot.slane %v2411, 1
      %v2469 = vsel %vm512, %v2466, %v2468
      %v2470 = vrot.slane %v2396, 1
      %v2471 = vrot.slane %v2277, 1
      %v2472 = vsel %vm512, %v2470, %v2471
      %v2473 = vrot.slane %v2412, 1
      %v2474 = vsel %vm512, %v2471, %v2473
      %v2475 = vrot.slane %v2397, 1
      %v2476 = vrot.slane %v2280, 1
      %v2477 = vsel %vm512, %v2475, %v2476
      %v2478 = vrot.slane %v2413, 1
      %v2479 = vsel %vm512, %v2476, %v2478
      %v2480 = vrot.slane %v2398, 1
      %v2481 = vrot.slane %v2283, 1
      %v2482 = vsel %vm512, %v2480, %v2481
      %v2483 = vrot.slane %v2414, 1
      %v2484 = vsel %vm512, %v2481, %v2483
      %v2485 = vrot.slane %v2399, 1
      %v2486 = vrot.slane %v2286, 1
      %v2487 = vsel %vm512, %v2485, %v2486
      %v2488 = vrot.slane %v2415, 1
      %v2489 = vsel %vm512, %v2486, %v2488
      %v2490 = vrot.slane %v2400, 1
      %v2491 = vrot.slane %v2289, 1
      %v2492 = vsel %vm512, %v2490, %v2491
      %v2493 = vrot.slane %v2416, 1
      %v2494 = vsel %vm512, %v2491, %v2493
      %v2495 = vrot.slane %v2401, 1
      %v2496 = vrot.slane %v2292, 1
      %v2497 = vsel %vm512, %v2495, %v2496
      %v2498 = vrot.slane %v2417, 1
      %v2499 = vsel %vm512, %v2496, %v2498
      %v2500 = vrot.slane %v2402, 1
      %v2501 = vrot.slane %v2295, 1
      %v2502 = vsel %vm512, %v2500, %v2501
      %v2503 = vrot.slane %v2418, 1
      %v2504 = vsel %vm512, %v2501, %v2503
      %v2505 = vrot.slane %v2403, 1
      %v2506 = vrot.slane %v2298, 1
      %v2507 = vsel %vm512, %v2505, %v2506
      %v2508 = vrot.slane %v2419, 1
      %v2509 = vsel %vm512, %v2506, %v2508
      %v2510 = vrot.slane %v2404, 1
      %v2511 = vrot.slane %v2301, 1
      %v2512 = vsel %vm512, %v2510, %v2511
      %v2513 = vrot.slane %v2420, 1
      %v2514 = vsel %vm512, %v2511, %v2513
      %v2515 = vrot.slane %v2405, 1
      %v2516 = vrot.slane %v2304, 1
      %v2517 = vsel %vm512, %v2515, %v2516
      %v2518 = vrot.slane %v2421, 1
      %v2519 = vsel %vm512, %v2516, %v2518
      %v2520 = vrot.slane %v2406, 1
      %v2521 = vrot.slane %v2307, 1
      %v2522 = vsel %vm512, %v2520, %v2521
      %v2523 = vrot.slane %v2422, 1
      %v2524 = vsel %vm512, %v2521, %v2523
      %v2525 = vrot.slane %v2407, 1
      %v2526 = vrot.slane %v2310, 1
      %v2527 = vsel %vm512, %v2525, %v2526
      %v2528 = vrot.slane %v2423, 1
      %v2529 = vsel %vm512, %v2526, %v2528
      %2530 = vrot.lane.b32.xlu0 %v2457, 4
      %v2531 = vpop.permute.xlu0 %2530
      %2532 = vrot.lane.b32.xlu0 %v2459, 4
      %v2533 = vpop.permute.xlu0 %2532
      %2534 = vrot.lane.b32.xlu0 %v2462, 4
      %v2535 = vpop.permute.xlu0 %2534
      %2536 = vrot.lane.b32.xlu0 %v2464, 4
      %v2537 = vpop.permute.xlu0 %2536
      %2538 = vrot.lane.b32.xlu0 %v2467, 4
      %v2539 = vpop.permute.xlu0 %2538
      %2540 = vrot.lane.b32.xlu0 %v2469, 4
      %v2541 = vpop.permute.xlu0 %2540
      %2542 = vrot.lane.b32.xlu0 %v2472, 4
      %v2543 = vpop.permute.xlu0 %2542
      %2544 = vrot.lane.b32.xlu0 %v2474, 4
      %v2545 = vpop.permute.xlu0 %2544
      %2546 = vrot.lane.b32.xlu0 %v2477, 4
      %v2547 = vpop.permute.xlu0 %2546
      %2548 = vrot.lane.b32.xlu0 %v2479, 4
      %v2549 = vpop.permute.xlu0 %2548
      %2550 = vrot.lane.b32.xlu0 %v2482, 4
      %v2551 = vpop.permute.xlu0 %2550
      %2552 = vrot.lane.b32.xlu0 %v2484, 4
      %v2553 = vpop.permute.xlu0 %2552
      %2554 = vrot.lane.b32.xlu0 %v2487, 4
      %v2555 = vpop.permute.xlu0 %2554
      %2556 = vrot.lane.b32.xlu0 %v2489, 4
      %v2557 = vpop.permute.xlu0 %2556
      %2558 = vrot.lane.b32.xlu0 %v2492, 4
      %v2559 = vpop.permute.xlu0 %2558
      %2560 = vrot.lane.b32.xlu0 %v2494, 4
      %v2561 = vpop.permute.xlu0 %2560
      %2562 = vrot.lane.b32.xlu0 %v2497, 4
      %v2563 = vpop.permute.xlu0 %2562
      %2564 = vrot.lane.b32.xlu0 %v2499, 4
      %v2565 = vpop.permute.xlu0 %2564
      %2566 = vrot.lane.b32.xlu0 %v2502, 4
      %v2567 = vpop.permute.xlu0 %2566
      %2568 = vrot.lane.b32.xlu0 %v2504, 4
      %v2569 = vpop.permute.xlu0 %2568
      %2570 = vrot.lane.b32.xlu0 %v2507, 4
      %v2571 = vpop.permute.xlu0 %2570
      %2572 = vrot.lane.b32.xlu0 %v2509, 4
      %v2573 = vpop.permute.xlu0 %2572
      %2574 = vrot.lane.b32.xlu0 %v2512, 4
      %v2575 = vpop.permute.xlu0 %2574
      %2576 = vrot.lane.b32.xlu0 %v2514, 4
      %v2577 = vpop.permute.xlu0 %2576
      %2578 = vrot.lane.b32.xlu0 %v2517, 4
      %v2579 = vpop.permute.xlu0 %2578
      %2580 = vrot.lane.b32.xlu0 %v2519, 4
      %v2581 = vpop.permute.xlu0 %2580
      %2582 = vrot.lane.b32.xlu0 %v2522, 4
      %v2583 = vpop.permute.xlu0 %2582
      %2584 = vrot.lane.b32.xlu0 %v2524, 4
      %v2585 = vpop.permute.xlu0 %2584
      %2586 = vrot.lane.b32.xlu0 %v2527, 4
      %v2587 = vpop.permute.xlu0 %2586
      %2588 = vrot.lane.b32.xlu0 %v2529, 4
      %v2589 = vpop.permute.xlu0 %2588
      %v2620 = vrot.slane %v2393, 2
      %v2621 = vrot.slane %v2268, 2
      %v2622 = vsel %vm678, %v2620, %v2621
      %v2623 = vrot.slane %v2409, 2
      %v2624 = vsel %vm678, %v2621, %v2623
      %v2625 = vrot.slane %v2394, 2
      %v2626 = vrot.slane %v2271, 2
      %v2627 = vsel %vm678, %v2625, %v2626
      %v2628 = vrot.slane %v2410, 2
      %v2629 = vsel %vm678, %v2626, %v2628
      %v2630 = vrot.slane %v2395, 2
      %v2631 = vrot.slane %v2274, 2
      %v2632 = vsel %vm678, %v2630, %v2631
      %v2633 = vrot.slane %v2411, 2
      %v2634 = vsel %vm678, %v2631, %v2633
      %v2635 = vrot.slane %v2396, 2
      %v2636 = vrot.slane %v2277, 2
      %v2637 = vsel %vm678, %v2635, %v2636
      %v2638 = vrot.slane %v2412, 2
      %v2639 = vsel %vm678, %v2636, %v2638
      %v2640 = vrot.slane %v2397, 2
      %v2641 = vrot.slane %v2280, 2
      %v2642 = vsel %vm678, %v2640, %v2641
      %v2643 = vrot.slane %v2413, 2
      %v2644 = vsel %vm678, %v2641, %v2643
      %v2645 = vrot.slane %v2398, 2
      %v2646 = vrot.slane %v2283, 2
      %v2647 = vsel %vm678, %v2645, %v2646
      %v2648 = vrot.slane %v2414, 2
      %v2649 = vsel %vm678, %v2646, %v2648
      %v2650 = vrot.slane %v2399, 2
      %v2651 = vrot.slane %v2286, 2
      %v2652 = vsel %vm678, %v2650, %v2651
      %v2653 = vrot.slane %v2415, 2
      %v2654 = vsel %vm678, %v2651, %v2653
      %v2655 = vrot.slane %v2400, 2
      %v2656 = vrot.slane %v2289, 2
      %v2657 = vsel %vm678, %v2655, %v2656
      %v2658 = vrot.slane %v2416, 2
      %v2659 = vsel %vm678, %v2656, %v2658
      %v2660 = vrot.slane %v2401, 2
      %v2661 = vrot.slane %v2292, 2
      %v2662 = vsel %vm678, %v2660, %v2661
      %v2663 = vrot.slane %v2417, 2
      %v2664 = vsel %vm678, %v2661, %v2663
      %v2665 = vrot.slane %v2402, 2
      %v2666 = vrot.slane %v2295, 2
      %v2667 = vsel %vm678, %v2665, %v2666
      %v2668 = vrot.slane %v2418, 2
      %v2669 = vsel %vm678, %v2666, %v2668
      %v2670 = vrot.slane %v2403, 2
      %v2671 = vrot.slane %v2298, 2
      %v2672 = vsel %vm678, %v2670, %v2671
      %v2673 = vrot.slane %v2419, 2
      %v2674 = vsel %vm678, %v2671, %v2673
      %v2675 = vrot.slane %v2404, 2
      %v2676 = vrot.slane %v2301, 2
      %v2677 = vsel %vm678, %v2675, %v2676
      %v2678 = vrot.slane %v2420, 2
      %v2679 = vsel %vm678, %v2676, %v2678
      %v2680 = vrot.slane %v2405, 2
      %v2681 = vrot.slane %v2304, 2
      %v2682 = vsel %vm678, %v2680, %v2681
      %v2683 = vrot.slane %v2421, 2
      %v2684 = vsel %vm678, %v2681, %v2683
      %v2685 = vrot.slane %v2406, 2
      %v2686 = vrot.slane %v2307, 2
      %v2687 = vsel %vm678, %v2685, %v2686
      %v2688 = vrot.slane %v2422, 2
      %v2689 = vsel %vm678, %v2686, %v2688
      %v2690 = vrot.slane %v2407, 2
      %v2691 = vrot.slane %v2310, 2
      %v2692 = vsel %vm678, %v2690, %v2691
      %v2693 = vrot.slane %v2423, 2
      %v2694 = vsel %vm678, %v2691, %v2693
      %2695 = vrot.lane.b32.xlu0 %v2622, 8
      %v2696 = vpop.permute.xlu0 %2695
      %2697 = vrot.lane.b32.xlu0 %v2624, 8
      %v2698 = vpop.permute.xlu0 %2697
      %2699 = vrot.lane.b32.xlu0 %v2627, 8
      %v2700 = vpop.permute.xlu0 %2699
      %2701 = vrot.lane.b32.xlu0 %v2629, 8
      %v2702 = vpop.permute.xlu0 %2701
      %2703 = vrot.lane.b32.xlu0 %v2632, 8
      %v2704 = vpop.permute.xlu0 %2703
      %2705 = vrot.lane.b32.xlu0 %v2634, 8
      %v2706 = vpop.permute.xlu0 %2705
      %2707 = vrot.lane.b32.xlu0 %v2637, 8
      %v2708 = vpop.permute.xlu0 %2707
      %2709 = vrot.lane.b32.xlu0 %v2639, 8
      %v2710 = vpop.permute.xlu0 %2709
      %2711 = vrot.lane.b32.xlu0 %v2642, 8
      %v2712 = vpop.permute.xlu0 %2711
      %2713 = vrot.lane.b32.xlu0 %v2644, 8
      %v2714 = vpop.permute.xlu0 %2713
      %2715 = vrot.lane.b32.xlu0 %v2647, 8
      %v2716 = vpop.permute.xlu0 %2715
      %2717 = vrot.lane.b32.xlu0 %v2649, 8
      %v2718 = vpop.permute.xlu0 %2717
      %2719 = vrot.lane.b32.xlu0 %v2652, 8
      %v2720 = vpop.permute.xlu0 %2719
      %2721 = vrot.lane.b32.xlu0 %v2654, 8
      %v2722 = vpop.permute.xlu0 %2721
      %2723 = vrot.lane.b32.xlu0 %v2657, 8
      %v2724 = vpop.permute.xlu0 %2723
      %2725 = vrot.lane.b32.xlu0 %v2659, 8
      %v2726 = vpop.permute.xlu0 %2725
      %2727 = vrot.lane.b32.xlu0 %v2662, 8
      %v2728 = vpop.permute.xlu0 %2727
      %2729 = vrot.lane.b32.xlu0 %v2664, 8
      %v2730 = vpop.permute.xlu0 %2729
      %2731 = vrot.lane.b32.xlu0 %v2667, 8
      %v2732 = vpop.permute.xlu0 %2731
      %2733 = vrot.lane.b32.xlu0 %v2669, 8
      %v2734 = vpop.permute.xlu0 %2733
      %2735 = vrot.lane.b32.xlu0 %v2672, 8
      %v2736 = vpop.permute.xlu0 %2735
      %2737 = vrot.lane.b32.xlu0 %v2674, 8
      %v2738 = vpop.permute.xlu0 %2737
      %2739 = vrot.lane.b32.xlu0 %v2677, 8
      %v2740 = vpop.permute.xlu0 %2739
      %2741 = vrot.lane.b32.xlu0 %v2679, 8
      %v2742 = vpop.permute.xlu0 %2741
      %2743 = vrot.lane.b32.xlu0 %v2682, 8
      %v2744 = vpop.permute.xlu0 %2743
      %2745 = vrot.lane.b32.xlu0 %v2684, 8
      %v2746 = vpop.permute.xlu0 %2745
      %2747 = vrot.lane.b32.xlu0 %v2687, 8
      %v2748 = vpop.permute.xlu0 %2747
      %2749 = vrot.lane.b32.xlu0 %v2689, 8
      %v2750 = vpop.permute.xlu0 %2749
      %2751 = vrot.lane.b32.xlu0 %v2692, 8
      %v2752 = vpop.permute.xlu0 %2751
      %2753 = vrot.lane.b32.xlu0 %v2694, 8
      %v2754 = vpop.permute.xlu0 %2753
      %2786 = vrot.lane.b32.xlu0 %v2394, 12
      %v2787 = vpop.permute.xlu0 %2786
      %2788 = vrot.lane.b32.xlu0 %v2271, 12
      %v2789 = vpop.permute.xlu0 %2788
      %2790 = vrot.lane.b32.xlu0 %v2393, 12
      %v2791 = vpop.permute.xlu0 %2790
      %2792 = vrot.lane.b32.xlu0 %v2268, 12
      %v2793 = vpop.permute.xlu0 %2792
      %2794 = vrot.lane.b32.xlu0 %v2395, 12
      %v2795 = vpop.permute.xlu0 %2794
      %2796 = vrot.lane.b32.xlu0 %v2274, 12
      %v2797 = vpop.permute.xlu0 %2796
      %2798 = vrot.lane.b32.xlu0 %v2396, 12
      %v2799 = vpop.permute.xlu0 %2798
      %2800 = vrot.lane.b32.xlu0 %v2277, 12
      %v2801 = vpop.permute.xlu0 %2800
      %2802 = vrot.lane.b32.xlu0 %v2397, 12
      %v2803 = vpop.permute.xlu0 %2802
      %2804 = vrot.lane.b32.xlu0 %v2280, 12
      %v2805 = vpop.permute.xlu0 %2804
      %2806 = vrot.lane.b32.xlu0 %v2398, 12
      %v2807 = vpop.permute.xlu0 %2806
      %2808 = vrot.lane.b32.xlu0 %v2283, 12
      %v2809 = vpop.permute.xlu0 %2808
      %2810 = vrot.lane.b32.xlu0 %v2399, 12
      %v2811 = vpop.permute.xlu0 %2810
      %2812 = vrot.lane.b32.xlu0 %v2286, 12
      %v2813 = vpop.permute.xlu0 %2812
      %2814 = vrot.lane.b32.xlu0 %v2400, 12
      %v2815 = vpop.permute.xlu0 %2814
      %2816 = vrot.lane.b32.xlu0 %v2289, 12
      %v2817 = vpop.permute.xlu0 %2816
      %2818 = vrot.lane.b32.xlu0 %v2401, 12
      %v2819 = vpop.permute.xlu0 %2818
      %2820 = vrot.lane.b32.xlu0 %v2292, 12
      %v2821 = vpop.permute.xlu0 %2820
      %2822 = vrot.lane.b32.xlu0 %v2402, 12
      %v2823 = vpop.permute.xlu0 %2822
      %2824 = vrot.lane.b32.xlu0 %v2295, 12
      %v2825 = vpop.permute.xlu0 %2824
      %2826 = vrot.lane.b32.xlu0 %v2403, 12
      %v2827 = vpop.permute.xlu0 %2826
      %2828 = vrot.lane.b32.xlu0 %v2298, 12
      %v2829 = vpop.permute.xlu0 %2828
      %2830 = vrot.lane.b32.xlu0 %v2404, 12
      %v2831 = vpop.permute.xlu0 %2830
      %2832 = vrot.lane.b32.xlu0 %v2301, 12
      %v2833 = vpop.permute.xlu0 %2832
      %2834 = vrot.lane.b32.xlu0 %v2405, 12
      %v2835 = vpop.permute.xlu0 %2834
      %2836 = vrot.lane.b32.xlu0 %v2304, 12
      %v2837 = vpop.permute.xlu0 %2836
      %2838 = vrot.lane.b32.xlu0 %v2406, 12
      %v2839 = vpop.permute.xlu0 %2838
      %2840 = vrot.lane.b32.xlu0 %v2307, 12
      %v2841 = vpop.permute.xlu0 %2840
      %2842 = vrot.lane.b32.xlu0 %v2407, 12
      %v2843 = vpop.permute.xlu0 %2842
      %2844 = vrot.lane.b32.xlu0 %v2310, 12
      %v2845 = vpop.permute.xlu0 %2844
      %2846 = vrot.lane.b32.xlu0 %v2408, 12
      %v2847 = vpop.permute.xlu0 %2846
      %2848 = vrot.lane.b32.xlu0 %v2313, 12
      %v2849 = vpop.permute.xlu0 %2848
      %v2883 = vrot.slane %v2408, 1
      %v2884 = vrot.slane %v2313, 1
      %v2885 = vsel %vm512, %v2883, %v2884
      %v2886 = vrot.slane %v2424, 1
      %v2887 = vsel %vm512, %v2884, %v2886
      %2888 = vrot.lane.b32.xlu0 %v2462, 16
      %v2889 = vpop.permute.xlu0 %2888
      %2890 = vrot.lane.b32.xlu0 %v2464, 16
      %v2891 = vpop.permute.xlu0 %2890
      %2892 = vrot.lane.b32.xlu0 %v2457, 16
      %v2893 = vpop.permute.xlu0 %2892
      %2894 = vrot.lane.b32.xlu0 %v2459, 16
      %v2895 = vpop.permute.xlu0 %2894
      %2896 = vrot.lane.b32.xlu0 %v2467, 16
      %v2897 = vpop.permute.xlu0 %2896
      %2898 = vrot.lane.b32.xlu0 %v2469, 16
      %v2899 = vpop.permute.xlu0 %2898
      %2900 = vrot.lane.b32.xlu0 %v2472, 16
      %v2901 = vpop.permute.xlu0 %2900
      %2902 = vrot.lane.b32.xlu0 %v2474, 16
      %v2903 = vpop.permute.xlu0 %2902
      %2904 = vrot.lane.b32.xlu0 %v2477, 16
      %v2905 = vpop.permute.xlu0 %2904
      %2906 = vrot.lane.b32.xlu0 %v2479, 16
      %v2907 = vpop.permute.xlu0 %2906
      %2908 = vrot.lane.b32.xlu0 %v2482, 16
      %v2909 = vpop.permute.xlu0 %2908
      %2910 = vrot.lane.b32.xlu0 %v2484, 16
      %v2911 = vpop.permute.xlu0 %2910
      %2912 = vrot.lane.b32.xlu0 %v2487, 16
      %v2913 = vpop.permute.xlu0 %2912
      %2914 = vrot.lane.b32.xlu0 %v2489, 16
      %v2915 = vpop.permute.xlu0 %2914
      %2916 = vrot.lane.b32.xlu0 %v2492, 16
      %v2917 = vpop.permute.xlu0 %2916
      %2918 = vrot.lane.b32.xlu0 %v2494, 16
      %v2919 = vpop.permute.xlu0 %2918
      %2920 = vrot.lane.b32.xlu0 %v2497, 16
      %v2921 = vpop.permute.xlu0 %2920
      %2922 = vrot.lane.b32.xlu0 %v2499, 16
      %v2923 = vpop.permute.xlu0 %2922
      %2924 = vrot.lane.b32.xlu0 %v2502, 16
      %v2925 = vpop.permute.xlu0 %2924
      %2926 = vrot.lane.b32.xlu0 %v2504, 16
      %v2927 = vpop.permute.xlu0 %2926
      %2928 = vrot.lane.b32.xlu0 %v2507, 16
      %v2929 = vpop.permute.xlu0 %2928
      %2930 = vrot.lane.b32.xlu0 %v2509, 16
      %v2931 = vpop.permute.xlu0 %2930
      %2932 = vrot.lane.b32.xlu0 %v2512, 16
      %v2933 = vpop.permute.xlu0 %2932
      %2934 = vrot.lane.b32.xlu0 %v2514, 16
      %v2935 = vpop.permute.xlu0 %2934
      %2936 = vrot.lane.b32.xlu0 %v2517, 16
      %v2937 = vpop.permute.xlu0 %2936
      %2938 = vrot.lane.b32.xlu0 %v2519, 16
      %v2939 = vpop.permute.xlu0 %2938
      %2940 = vrot.lane.b32.xlu0 %v2522, 16
      %v2941 = vpop.permute.xlu0 %2940
      %2942 = vrot.lane.b32.xlu0 %v2524, 16
      %v2943 = vpop.permute.xlu0 %2942
      %2944 = vrot.lane.b32.xlu0 %v2527, 16
      %v2945 = vpop.permute.xlu0 %2944
      %2946 = vrot.lane.b32.xlu0 %v2529, 16
      %v2947 = vpop.permute.xlu0 %2946
      %2948 = vrot.lane.b32.xlu0 %v2885, 16
      %v2949 = vpop.permute.xlu0 %2948
      %2950 = vrot.lane.b32.xlu0 %v2887, 16
      %v2951 = vpop.permute.xlu0 %2950
      %v2984 = vrot.slane %v2408, 2
      %v2985 = vrot.slane %v2313, 2
      %v2986 = vsel %vm678, %v2984, %v2985
      %v2987 = vrot.slane %v2424, 2
      %v2988 = vsel %vm678, %v2985, %v2987
      %2989 = vrot.lane.b32.xlu0 %v2627, 20
      %v2990 = vpop.permute.xlu0 %2989
      %2991 = vrot.lane.b32.xlu0 %v2629, 20
      %v2992 = vpop.permute.xlu0 %2991
      %2993 = vrot.lane.b32.xlu0 %v2622, 20
      %v2994 = vpop.permute.xlu0 %2993
      %2995 = vrot.lane.b32.xlu0 %v2624, 20
      %v2996 = vpop.permute.xlu0 %2995
      %2997 = vrot.lane.b32.xlu0 %v2632, 20
      %v2998 = vpop.permute.xlu0 %2997
      %2999 = vrot.lane.b32.xlu0 %v2634, 20
      %v3000 = vpop.permute.xlu0 %2999
      %3001 = vrot.lane.b32.xlu0 %v2637, 20
      %v3002 = vpop.permute.xlu0 %3001
      %3003 = vrot.lane.b32.xlu0 %v2639, 20
      %v3004 = vpop.permute.xlu0 %3003
      %3005 = vrot.lane.b32.xlu0 %v2642, 20
      %v3006 = vpop.permute.xlu0 %3005
      %3007 = vrot.lane.b32.xlu0 %v2644, 20
      %v3008 = vpop.permute.xlu0 %3007
      %3009 = vrot.lane.b32.xlu0 %v2647, 20
      %v3010 = vpop.permute.xlu0 %3009
      %3011 = vrot.lane.b32.xlu0 %v2649, 20
      %v3012 = vpop.permute.xlu0 %3011
      %3013 = vrot.lane.b32.xlu0 %v2652, 20
      %v3014 = vpop.permute.xlu0 %3013
      %3015 = vrot.lane.b32.xlu0 %v2654, 20
      %v3016 = vpop.permute.xlu0 %3015
      %3017 = vrot.lane.b32.xlu0 %v2657, 20
      %v3018 = vpop.permute.xlu0 %3017
      %3019 = vrot.lane.b32.xlu0 %v2659, 20
      %v3020 = vpop.permute.xlu0 %3019
      %3021 = vrot.lane.b32.xlu0 %v2662, 20
      %v3022 = vpop.permute.xlu0 %3021
      %3023 = vrot.lane.b32.xlu0 %v2664, 20
      %v3024 = vpop.permute.xlu0 %3023
      %3025 = vrot.lane.b32.xlu0 %v2667, 20
      %v3026 = vpop.permute.xlu0 %3025
      %3027 = vrot.lane.b32.xlu0 %v2669, 20
      %v3028 = vpop.permute.xlu0 %3027
      %3029 = vrot.lane.b32.xlu0 %v2672, 20
      %v3030 = vpop.permute.xlu0 %3029
      %3031 = vrot.lane.b32.xlu0 %v2674, 20
      %v3032 = vpop.permute.xlu0 %3031
      %3033 = vrot.lane.b32.xlu0 %v2677, 20
      %v3034 = vpop.permute.xlu0 %3033
      %3035 = vrot.lane.b32.xlu0 %v2679, 20
      %v3036 = vpop.permute.xlu0 %3035
      %3037 = vrot.lane.b32.xlu0 %v2682, 20
      %v3038 = vpop.permute.xlu0 %3037
      %3039 = vrot.lane.b32.xlu0 %v2684, 20
      %v3040 = vpop.permute.xlu0 %3039
      %3041 = vrot.lane.b32.xlu0 %v2687, 20
      %v3042 = vpop.permute.xlu0 %3041
      %3043 = vrot.lane.b32.xlu0 %v2689, 20
      %v3044 = vpop.permute.xlu0 %3043
      %3045 = vrot.lane.b32.xlu0 %v2692, 20
      %v3046 = vpop.permute.xlu0 %3045
      %3047 = vrot.lane.b32.xlu0 %v2694, 20
      %v3048 = vpop.permute.xlu0 %3047
      %3049 = vrot.lane.b32.xlu0 %v2986, 20
      %v3050 = vpop.permute.xlu0 %3049
      %3051 = vrot.lane.b32.xlu0 %v2988, 20
      %v3052 = vpop.permute.xlu0 %3051
      %3085 = vrot.lane.b32.xlu0 %v2393, 24
      %v3086 = vpop.permute.xlu0 %3085
      %3087 = vrot.lane.b32.xlu0 %v2268, 24
      %v3088 = vpop.permute.xlu0 %3087
      %3089 = vrot.lane.b32.xlu0 %v2395, 24
      %v3090 = vpop.permute.xlu0 %3089
      %3091 = vrot.lane.b32.xlu0 %v2274, 24
      %v3092 = vpop.permute.xlu0 %3091
      %3093 = vrot.lane.b32.xlu0 %v2396, 24
      %v3094 = vpop.permute.xlu0 %3093
      %3095 = vrot.lane.b32.xlu0 %v2277, 24
      %v3096 = vpop.permute.xlu0 %3095
      %3097 = vrot.lane.b32.xlu0 %v2397, 24
      %v3098 = vpop.permute.xlu0 %3097
      %3099 = vrot.lane.b32.xlu0 %v2280, 24
      %v3100 = vpop.permute.xlu0 %3099
      %3101 = vrot.lane.b32.xlu0 %v2398, 24
      %v3102 = vpop.permute.xlu0 %3101
      %3103 = vrot.lane.b32.xlu0 %v2283, 24
      %v3104 = vpop.permute.xlu0 %3103
      %3105 = vrot.lane.b32.xlu0 %v2399, 24
      %v3106 = vpop.permute.xlu0 %3105
      %3107 = vrot.lane.b32.xlu0 %v2286, 24
      %v3108 = vpop.permute.xlu0 %3107
      %3109 = vrot.lane.b32.xlu0 %v2400, 24
      %v3110 = vpop.permute.xlu0 %3109
      %3111 = vrot.lane.b32.xlu0 %v2289, 24
      %v3112 = vpop.permute.xlu0 %3111
      %3113 = vrot.lane.b32.xlu0 %v2401, 24
      %v3114 = vpop.permute.xlu0 %3113
      %3115 = vrot.lane.b32.xlu0 %v2292, 24
      %v3116 = vpop.permute.xlu0 %3115
      %3117 = vrot.lane.b32.xlu0 %v2402, 24
      %v3118 = vpop.permute.xlu0 %3117
      %3119 = vrot.lane.b32.xlu0 %v2295, 24
      %v3120 = vpop.permute.xlu0 %3119
      %3121 = vrot.lane.b32.xlu0 %v2403, 24
      %v3122 = vpop.permute.xlu0 %3121
      %3123 = vrot.lane.b32.xlu0 %v2298, 24
      %v3124 = vpop.permute.xlu0 %3123
      %3125 = vrot.lane.b32.xlu0 %v2404, 24
      %v3126 = vpop.permute.xlu0 %3125
      %3127 = vrot.lane.b32.xlu0 %v2301, 24
      %v3128 = vpop.permute.xlu0 %3127
      %3129 = vrot.lane.b32.xlu0 %v2405, 24
      %v3130 = vpop.permute.xlu0 %3129
      %3131 = vrot.lane.b32.xlu0 %v2304, 24
      %v3132 = vpop.permute.xlu0 %3131
      %3133 = vrot.lane.b32.xlu0 %v2406, 24
      %v3134 = vpop.permute.xlu0 %3133
      %3135 = vrot.lane.b32.xlu0 %v2307, 24
      %v3136 = vpop.permute.xlu0 %3135
      %3137 = vrot.lane.b32.xlu0 %v2407, 24
      %v3138 = vpop.permute.xlu0 %3137
      %3139 = vrot.lane.b32.xlu0 %v2310, 24
      %v3140 = vpop.permute.xlu0 %3139
      %3141 = vrot.lane.b32.xlu0 %v2408, 24
      %v3142 = vpop.permute.xlu0 %3141
      %3143 = vrot.lane.b32.xlu0 %v2313, 24
      %v3144 = vpop.permute.xlu0 %3143
      %3175 = vrot.lane.b32.xlu0 %v2457, 28
      %v3176 = vpop.permute.xlu0 %3175
      %3177 = vrot.lane.b32.xlu0 %v2459, 28
      %v3178 = vpop.permute.xlu0 %3177
      %3179 = vrot.lane.b32.xlu0 %v2467, 28
      %v3180 = vpop.permute.xlu0 %3179
      %3181 = vrot.lane.b32.xlu0 %v2469, 28
      %v3182 = vpop.permute.xlu0 %3181
      %3183 = vrot.lane.b32.xlu0 %v2472, 28
      %v3184 = vpop.permute.xlu0 %3183
      %3185 = vrot.lane.b32.xlu0 %v2474, 28
      %v3186 = vpop.permute.xlu0 %3185
      %3187 = vrot.lane.b32.xlu0 %v2477, 28
      %v3188 = vpop.permute.xlu0 %3187
      %3189 = vrot.lane.b32.xlu0 %v2479, 28
      %v3190 = vpop.permute.xlu0 %3189
      %3191 = vrot.lane.b32.xlu0 %v2482, 28
      %v3192 = vpop.permute.xlu0 %3191
      %3193 = vrot.lane.b32.xlu0 %v2484, 28
      %v3194 = vpop.permute.xlu0 %3193
      %3195 = vrot.lane.b32.xlu0 %v2487, 28
      %v3196 = vpop.permute.xlu0 %3195
      %3197 = vrot.lane.b32.xlu0 %v2489, 28
      %v3198 = vpop.permute.xlu0 %3197
      %3199 = vrot.lane.b32.xlu0 %v2492, 28
      %v3200 = vpop.permute.xlu0 %3199
      %3201 = vrot.lane.b32.xlu0 %v2494, 28
      %v3202 = vpop.permute.xlu0 %3201
      %3203 = vrot.lane.b32.xlu0 %v2497, 28
      %v3204 = vpop.permute.xlu0 %3203
      %3205 = vrot.lane.b32.xlu0 %v2499, 28
      %v3206 = vpop.permute.xlu0 %3205
      %3207 = vrot.lane.b32.xlu0 %v2502, 28
      %v3208 = vpop.permute.xlu0 %3207
      %3209 = vrot.lane.b32.xlu0 %v2504, 28
      %v3210 = vpop.permute.xlu0 %3209
      %3211 = vrot.lane.b32.xlu0 %v2507, 28
      %v3212 = vpop.permute.xlu0 %3211
      %3213 = vrot.lane.b32.xlu0 %v2509, 28
      %v3214 = vpop.permute.xlu0 %3213
      %3215 = vrot.lane.b32.xlu0 %v2512, 28
      %v3216 = vpop.permute.xlu0 %3215
      %3217 = vrot.lane.b32.xlu0 %v2514, 28
      %v3218 = vpop.permute.xlu0 %3217
      %3219 = vrot.lane.b32.xlu0 %v2517, 28
      %v3220 = vpop.permute.xlu0 %3219
      %3221 = vrot.lane.b32.xlu0 %v2519, 28
      %v3222 = vpop.permute.xlu0 %3221
      %3223 = vrot.lane.b32.xlu0 %v2522, 28
      %v3224 = vpop.permute.xlu0 %3223
      %3225 = vrot.lane.b32.xlu0 %v2524, 28
      %v3226 = vpop.permute.xlu0 %3225
      %3227 = vrot.lane.b32.xlu0 %v2527, 28
      %v3228 = vpop.permute.xlu0 %3227
      %3229 = vrot.lane.b32.xlu0 %v2529, 28
      %v3230 = vpop.permute.xlu0 %3229
      %3231 = vrot.lane.b32.xlu0 %v2885, 28
      %v3232 = vpop.permute.xlu0 %3231
      %3233 = vrot.lane.b32.xlu0 %v2887, 28
      %v3234 = vpop.permute.xlu0 %3233
      %3265 = vrot.lane.b32.xlu0 %v2622, 32
      %v3266 = vpop.permute.xlu0 %3265
      %3267 = vrot.lane.b32.xlu0 %v2624, 32
      %v3268 = vpop.permute.xlu0 %3267
      %3269 = vrot.lane.b32.xlu0 %v2632, 32
      %v3270 = vpop.permute.xlu0 %3269
      %3271 = vrot.lane.b32.xlu0 %v2634, 32
      %v3272 = vpop.permute.xlu0 %3271
      %3273 = vrot.lane.b32.xlu0 %v2637, 32
      %v3274 = vpop.permute.xlu0 %3273
      %3275 = vrot.lane.b32.xlu0 %v2639, 32
      %v3276 = vpop.permute.xlu0 %3275
      %3277 = vrot.lane.b32.xlu0 %v2642, 32
      %v3278 = vpop.permute.xlu0 %3277
      %3279 = vrot.lane.b32.xlu0 %v2644, 32
      %v3280 = vpop.permute.xlu0 %3279
      %3281 = vrot.lane.b32.xlu0 %v2647, 32
      %v3282 = vpop.permute.xlu0 %3281
      %3283 = vrot.lane.b32.xlu0 %v2649, 32
      %v3284 = vpop.permute.xlu0 %3283
      %3285 = vrot.lane.b32.xlu0 %v2652, 32
      %v3286 = vpop.permute.xlu0 %3285
      %3287 = vrot.lane.b32.xlu0 %v2654, 32
      %v3288 = vpop.permute.xlu0 %3287
      %3289 = vrot.lane.b32.xlu0 %v2657, 32
      %v3290 = vpop.permute.xlu0 %3289
      %3291 = vrot.lane.b32.xlu0 %v2659, 32
      %v3292 = vpop.permute.xlu0 %3291
      %3293 = vrot.lane.b32.xlu0 %v2662, 32
      %v3294 = vpop.permute.xlu0 %3293
      %3295 = vrot.lane.b32.xlu0 %v2664, 32
      %v3296 = vpop.permute.xlu0 %3295
      %3297 = vrot.lane.b32.xlu0 %v2667, 32
      %v3298 = vpop.permute.xlu0 %3297
      %3299 = vrot.lane.b32.xlu0 %v2669, 32
      %v3300 = vpop.permute.xlu0 %3299
      %3301 = vrot.lane.b32.xlu0 %v2672, 32
      %v3302 = vpop.permute.xlu0 %3301
      %3303 = vrot.lane.b32.xlu0 %v2674, 32
      %v3304 = vpop.permute.xlu0 %3303
      %3305 = vrot.lane.b32.xlu0 %v2677, 32
      %v3306 = vpop.permute.xlu0 %3305
      %3307 = vrot.lane.b32.xlu0 %v2679, 32
      %v3308 = vpop.permute.xlu0 %3307
      %3309 = vrot.lane.b32.xlu0 %v2682, 32
      %v3310 = vpop.permute.xlu0 %3309
      %3311 = vrot.lane.b32.xlu0 %v2684, 32
      %v3312 = vpop.permute.xlu0 %3311
      %3313 = vrot.lane.b32.xlu0 %v2687, 32
      %v3314 = vpop.permute.xlu0 %3313
      %3315 = vrot.lane.b32.xlu0 %v2689, 32
      %v3316 = vpop.permute.xlu0 %3315
      %3317 = vrot.lane.b32.xlu0 %v2692, 32
      %v3318 = vpop.permute.xlu0 %3317
      %3319 = vrot.lane.b32.xlu0 %v2694, 32
      %v3320 = vpop.permute.xlu0 %3319
      %3321 = vrot.lane.b32.xlu0 %v2986, 32
      %v3322 = vpop.permute.xlu0 %3321
      %3323 = vrot.lane.b32.xlu0 %v2988, 32
      %v3324 = vpop.permute.xlu0 %3323
      %v3355 = vsel %vm1414, %v2393, %v2531
      %v3356 = vsel %vm1414, %v2268, %v2533
      %v3357 = vsel %vm1414, %v2394, %v2535
      %v3358 = vsel %vm1414, %v2271, %v2537
      %v3359 = vsel %vm1414, %v2395, %v2539
      %v3360 = vsel %vm1414, %v2274, %v2541
      %v3361 = vsel %vm1414, %v2396, %v2543
      %v3362 = vsel %vm1414, %v2277, %v2545
      %v3363 = vsel %vm1414, %v2397, %v2547
      %v3364 = vsel %vm1414, %v2280, %v2549
      %v3365 = vsel %vm1414, %v2398, %v2551
      %v3366 = vsel %vm1414, %v2283, %v2553
      %v3367 = vsel %vm1414, %v2399, %v2555
      %v3368 = vsel %vm1414, %v2286, %v2557
      %v3369 = vsel %vm1414, %v2400, %v2559
      %v3370 = vsel %vm1414, %v2289, %v2561
      %v3371 = vsel %vm1414, %v2401, %v2563
      %v3372 = vsel %vm1414, %v2292, %v2565
      %v3373 = vsel %vm1414, %v2402, %v2567
      %v3374 = vsel %vm1414, %v2295, %v2569
      %v3375 = vsel %vm1414, %v2403, %v2571
      %v3376 = vsel %vm1414, %v2298, %v2573
      %v3377 = vsel %vm1414, %v2404, %v2575
      %v3378 = vsel %vm1414, %v2301, %v2577
      %v3379 = vsel %vm1414, %v2405, %v2579
      %v3380 = vsel %vm1414, %v2304, %v2581
      %v3381 = vsel %vm1414, %v2406, %v2583
      %v3382 = vsel %vm1414, %v2307, %v2585
      %v3383 = vsel %vm1414, %v2407, %v2587
      %v3384 = vsel %vm1414, %v2310, %v2589
      %v3385 = vsel %vm1445, %v3355, %v2696
      %v3386 = vsel %vm1445, %v3356, %v2698
      %v3387 = vsel %vm1445, %v3357, %v2700
      %v3388 = vsel %vm1445, %v3358, %v2702
      %v3389 = vsel %vm1445, %v3359, %v2704
      %v3390 = vsel %vm1445, %v3360, %v2706
      %v3391 = vsel %vm1445, %v3361, %v2708
      %v3392 = vsel %vm1445, %v3362, %v2710
      %v3393 = vsel %vm1445, %v3363, %v2712
      %v3394 = vsel %vm1445, %v3364, %v2714
      %v3395 = vsel %vm1445, %v3365, %v2716
      %v3396 = vsel %vm1445, %v3366, %v2718
      %v3397 = vsel %vm1445, %v3367, %v2720
      %v3398 = vsel %vm1445, %v3368, %v2722
      %v3399 = vsel %vm1445, %v3369, %v2724
      %v3400 = vsel %vm1445, %v3370, %v2726
      %v3401 = vsel %vm1445, %v3371, %v2728
      %v3402 = vsel %vm1445, %v3372, %v2730
      %v3403 = vsel %vm1445, %v3373, %v2732
      %v3404 = vsel %vm1445, %v3374, %v2734
      %v3405 = vsel %vm1445, %v3375, %v2736
      %v3406 = vsel %vm1445, %v3376, %v2738
      %v3407 = vsel %vm1445, %v3377, %v2740
      %v3408 = vsel %vm1445, %v3378, %v2742
      %v3409 = vsel %vm1445, %v3379, %v2744
      %v3410 = vsel %vm1445, %v3380, %v2746
      %v3411 = vsel %vm1445, %v3381, %v2748
      %v3412 = vsel %vm1445, %v3382, %v2750
      %v3413 = vsel %vm1445, %v3383, %v2752
      %v3414 = vsel %vm1445, %v3384, %v2754
      %v3415 = vsel %vm1476, %v3385, %v2787
      %v3416 = vsel %vm1476, %v3386, %v2789
      %v3417 = vsel %vm1476, %v3387, %v2791
      %v3418 = vsel %vm1476, %v3388, %v2793
      %v3419 = vsel %vm1476, %v3385, %v2795
      %v3420 = vsel %vm1476, %v3386, %v2797
      %v3421 = vsel %vm1476, %v3389, %v2799
      %v3422 = vsel %vm1476, %v3390, %v2801
      %v3423 = vsel %vm1476, %v3391, %v2803
      %v3424 = vsel %vm1476, %v3392, %v2805
      %v3425 = vsel %vm1476, %v3393, %v2807
      %v3426 = vsel %vm1476, %v3394, %v2809
      %v3427 = vsel %vm1476, %v3395, %v2811
      %v3428 = vsel %vm1476, %v3396, %v2813
      %v3429 = vsel %vm1476, %v3397, %v2815
      %v3430 = vsel %vm1476, %v3398, %v2817
      %v3431 = vsel %vm1476, %v3399, %v2819
      %v3432 = vsel %vm1476, %v3400, %v2821
      %v3433 = vsel %vm1476, %v3401, %v2823
      %v3434 = vsel %vm1476, %v3402, %v2825
      %v3435 = vsel %vm1476, %v3403, %v2827
      %v3436 = vsel %vm1476, %v3404, %v2829
      %v3437 = vsel %vm1476, %v3405, %v2831
      %v3438 = vsel %vm1476, %v3406, %v2833
      %v3439 = vsel %vm1476, %v3407, %v2835
      %v3440 = vsel %vm1476, %v3408, %v2837
      %v3441 = vsel %vm1476, %v3409, %v2839
      %v3442 = vsel %vm1476, %v3410, %v2841
      %v3443 = vsel %vm1476, %v3411, %v2843
      %v3444 = vsel %vm1476, %v3412, %v2845
      %v3445 = vsel %vm1476, %v3413, %v2847
      %v3446 = vsel %vm1476, %v3414, %v2849
      %v3447 = vsel %vm1509, %v3415, %v2889
      %v3448 = vsel %vm1509, %v3416, %v2891
      %v3449 = vsel %vm1509, %v3417, %v2893
      %v3450 = vsel %vm1509, %v3418, %v2895
      %v3451 = vsel %vm1509, %v3419, %v2897
      %v3452 = vsel %vm1509, %v3420, %v2899
      %v3453 = vsel %vm1509, %v3421, %v2901
      %v3454 = vsel %vm1509, %v3422, %v2903
      %v3455 = vsel %vm1509, %v3423, %v2905
      %v3456 = vsel %vm1509, %v3424, %v2907
      %v3457 = vsel %vm1509, %v3425, %v2909
      %v3458 = vsel %vm1509, %v3426, %v2911
      %v3459 = vsel %vm1509, %v3427, %v2913
      %v3460 = vsel %vm1509, %v3428, %v2915
      %v3461 = vsel %vm1509, %v3429, %v2917
      %v3462 = vsel %vm1509, %v3430, %v2919
      %v3463 = vsel %vm1509, %v3431, %v2921
      %v3464 = vsel %vm1509, %v3432, %v2923
      %v3465 = vsel %vm1509, %v3433, %v2925
      %v3466 = vsel %vm1509, %v3434, %v2927
      %v3467 = vsel %vm1509, %v3435, %v2929
      %v3468 = vsel %vm1509, %v3436, %v2931
      %v3469 = vsel %vm1509, %v3437, %v2933
      %v3470 = vsel %vm1509, %v3438, %v2935
      %v3471 = vsel %vm1509, %v3439, %v2937
      %v3472 = vsel %vm1509, %v3440, %v2939
      %v3473 = vsel %vm1509, %v3441, %v2941
      %v3474 = vsel %vm1509, %v3442, %v2943
      %v3475 = vsel %vm1509, %v3443, %v2945
      %v3476 = vsel %vm1509, %v3444, %v2947
      %v3477 = vsel %vm1509, %v3445, %v2949
      %v3478 = vsel %vm1509, %v3446, %v2951
      %v3479 = vsel %vm1542, %v3447, %v2990
      %v3480 = vsel %vm1542, %v3448, %v2992
      %v3481 = vsel %vm1542, %v3449, %v2994
      %v3482 = vsel %vm1542, %v3450, %v2996
      %v3483 = vsel %vm1542, %v3451, %v2998
      %v3484 = vsel %vm1542, %v3452, %v3000
      %v3485 = vsel %vm1542, %v3453, %v3002
      %v3486 = vsel %vm1542, %v3454, %v3004
      %v3487 = vsel %vm1542, %v3455, %v3006
      %v3488 = vsel %vm1542, %v3456, %v3008
      %v3489 = vsel %vm1542, %v3457, %v3010
      %v3490 = vsel %vm1542, %v3458, %v3012
      %v3491 = vsel %vm1542, %v3459, %v3014
      %v3492 = vsel %vm1542, %v3460, %v3016
      %v3493 = vsel %vm1542, %v3461, %v3018
      %v3494 = vsel %vm1542, %v3462, %v3020
      %v3495 = vsel %vm1542, %v3463, %v3022
      %v3496 = vsel %vm1542, %v3464, %v3024
      %v3497 = vsel %vm1542, %v3465, %v3026
      %v3498 = vsel %vm1542, %v3466, %v3028
      %v3499 = vsel %vm1542, %v3467, %v3030
      %v3500 = vsel %vm1542, %v3468, %v3032
      %v3501 = vsel %vm1542, %v3469, %v3034
      %v3502 = vsel %vm1542, %v3470, %v3036
      %v3503 = vsel %vm1542, %v3471, %v3038
      %v3504 = vsel %vm1542, %v3472, %v3040
      %v3505 = vsel %vm1542, %v3473, %v3042
      %v3506 = vsel %vm1542, %v3474, %v3044
      %v3507 = vsel %vm1542, %v3475, %v3046
      %v3508 = vsel %vm1542, %v3476, %v3048
      %v3509 = vsel %vm1542, %v3477, %v3050
      %v3510 = vsel %vm1542, %v3478, %v3052
      %v3511 = vsel %vm1575, %v3479, %v3086
      %v3512 = vsel %vm1575, %v3480, %v3088
      %v3513 = vsel %vm1575, %v3481, %v3090
      %v3514 = vsel %vm1575, %v3482, %v3092
      %v3515 = vsel %vm1575, %v3483, %v3094
      %v3516 = vsel %vm1575, %v3484, %v3096
      %v3517 = vsel %vm1575, %v3485, %v3098
      %v3518 = vsel %vm1575, %v3486, %v3100
      %v3519 = vsel %vm1575, %v3487, %v3102
      %v3520 = vsel %vm1575, %v3488, %v3104
      %v3521 = vsel %vm1575, %v3489, %v3106
      %v3522 = vsel %vm1575, %v3490, %v3108
      %v3523 = vsel %vm1575, %v3491, %v3110
      %v3524 = vsel %vm1575, %v3492, %v3112
      %v3525 = vsel %vm1575, %v3493, %v3114
      %v3526 = vsel %vm1575, %v3494, %v3116
      %v3527 = vsel %vm1575, %v3495, %v3118
      %v3528 = vsel %vm1575, %v3496, %v3120
      %v3529 = vsel %vm1575, %v3497, %v3122
      %v3530 = vsel %vm1575, %v3498, %v3124
      %v3531 = vsel %vm1575, %v3499, %v3126
      %v3532 = vsel %vm1575, %v3500, %v3128
      %v3533 = vsel %vm1575, %v3501, %v3130
      %v3534 = vsel %vm1575, %v3502, %v3132
      %v3535 = vsel %vm1575, %v3503, %v3134
      %v3536 = vsel %vm1575, %v3504, %v3136
      %v3537 = vsel %vm1575, %v3505, %v3138
      %v3538 = vsel %vm1575, %v3506, %v3140
      %v3539 = vsel %vm1575, %v3507, %v3142
      %v3540 = vsel %vm1575, %v3508, %v3144
      %v3541 = vsel %vm1575, %v3509, %v3138
      %v3542 = vsel %vm1575, %v3510, %v3140
      %v3543 = vsel %vm1608, %v3511, %v3176
      %v3544 = vsel %vm1608, %v3512, %v3178
      %v3545 = vsel %vm1608, %v3513, %v3180
      %v3546 = vsel %vm1608, %v3514, %v3182
      %v3547 = vsel %vm1608, %v3515, %v3184
      %v3548 = vsel %vm1608, %v3516, %v3186
      %v3549 = vsel %vm1608, %v3517, %v3188
      %v3550 = vsel %vm1608, %v3518, %v3190
      %v3551 = vsel %vm1608, %v3519, %v3192
      %v3552 = vsel %vm1608, %v3520, %v3194
      %v3553 = vsel %vm1608, %v3521, %v3196
      %v3554 = vsel %vm1608, %v3522, %v3198
      %v3555 = vsel %vm1608, %v3523, %v3200
      %v3556 = vsel %vm1608, %v3524, %v3202
      %v3557 = vsel %vm1608, %v3525, %v3204
      %v3558 = vsel %vm1608, %v3526, %v3206
      %v3559 = vsel %vm1608, %v3527, %v3208
      %v3560 = vsel %vm1608, %v3528, %v3210
      %v3561 = vsel %vm1608, %v3529, %v3212
      %v3562 = vsel %vm1608, %v3530, %v3214
      %v3563 = vsel %vm1608, %v3531, %v3216
      %v3564 = vsel %vm1608, %v3532, %v3218
      %v3565 = vsel %vm1608, %v3533, %v3220
      %v3566 = vsel %vm1608, %v3534, %v3222
      %v3567 = vsel %vm1608, %v3535, %v3224
      %v3568 = vsel %vm1608, %v3536, %v3226
      %v3569 = vsel %vm1608, %v3537, %v3228
      %v3570 = vsel %vm1608, %v3538, %v3230
      %v3571 = vsel %vm1608, %v3539, %v3232
      %v3572 = vsel %vm1608, %v3540, %v3234
      %v3573 = vsel %vm1608, %v3541, %v3228
      %v3574 = vsel %vm1608, %v3542, %v3230
      %v3575 = vsel %vm1641, %v3543, %v3266
      %v3576 = vsel %vm1641, %v3544, %v3268
      %v3577 = vsel %vm1641, %v3545, %v3270
      %v3578 = vsel %vm1641, %v3546, %v3272
      %v3579 = vsel %vm1641, %v3547, %v3274
      %v3580 = vsel %vm1641, %v3548, %v3276
      %v3581 = vsel %vm1641, %v3549, %v3278
      %v3582 = vsel %vm1641, %v3550, %v3280
      %v3583 = vsel %vm1641, %v3551, %v3282
      %v3584 = vsel %vm1641, %v3552, %v3284
      %v3585 = vsel %vm1641, %v3553, %v3286
      %v3586 = vsel %vm1641, %v3554, %v3288
      %v3587 = vsel %vm1641, %v3555, %v3290
      %v3588 = vsel %vm1641, %v3556, %v3292
      %v3589 = vsel %vm1641, %v3557, %v3294
      %v3590 = vsel %vm1641, %v3558, %v3296
      %v3591 = vsel %vm1641, %v3559, %v3298
      %v3592 = vsel %vm1641, %v3560, %v3300
      %v3593 = vsel %vm1641, %v3561, %v3302
      %v3594 = vsel %vm1641, %v3562, %v3304
      %v3595 = vsel %vm1641, %v3563, %v3306
      %v3596 = vsel %vm1641, %v3564, %v3308
      %v3597 = vsel %vm1641, %v3565, %v3310
      %v3598 = vsel %vm1641, %v3566, %v3312
      %v3599 = vsel %vm1641, %v3567, %v3314
      %v3600 = vsel %vm1641, %v3568, %v3316
      %v3601 = vsel %vm1641, %v3569, %v3318
      %v3602 = vsel %vm1641, %v3570, %v3320
      %v3603 = vsel %vm1641, %v3571, %v3322
      %v3604 = vsel %vm1641, %v3572, %v3324
      %v3605 = vsel %vm1641, %v3573, %v3318
      %v3606 = vsel %vm1641, %v3574, %v3320
      %v3607 = vpack.c.bf16 %v3576, %v3575
      %v3608 = vpack.c.bf16 %v3578, %v3577
      %v3609 = vpack.c.bf16 %v3580, %v3579
      %v3610 = vpack.c.bf16 %v3582, %v3581
      %v3611 = vpack.c.bf16 %v3584, %v3583
      %v3612 = vpack.c.bf16 %v3586, %v3585
      %v3613 = vpack.c.bf16 %v3588, %v3587
      %v3614 = vpack.c.bf16 %v3590, %v3589
      %v3615 = vpack.c.bf16 %v3592, %v3591
      %v3616 = vpack.c.bf16 %v3594, %v3593
      %v3617 = vpack.c.bf16 %v3596, %v3595
      %v3618 = vpack.c.bf16 %v3598, %v3597
      %v3619 = vpack.c.bf16 %v3600, %v3599
      %v3620 = vpack.c.bf16 %v3602, %v3601
      %v3621 = vpack.c.bf16 %v3604, %v3603
      %v3622 = vpack.c.bf16 %v3606, %v3605
      %v3623 = vld [vmem:[%s3] sm:$0xf]
      %v3624 = vld [vmem:[%s3 + $0x4] sm:$0xf]
      %v3625 = vld [vmem:[%s3 + $0x8] sm:$0xf]
      %v3626 = vld [vmem:[%s3 + $0xc] sm:$0xf]
      %v3627 = vld [vmem:[%s3 + $0x10] sm:$0x3]
      %v3628 = vld [vmem:[%s4] sm:$0x1]
      %v3630 = vlaneseq
      %v3631 = vshrl.u32 %v3630, 7
      %v3632 = vsub.s32 0, %v3631
      %v3633 = vrot.slane %v3628, %v3632
      %v3640 = vunpack.c.l.b16 %v3623
      %v3641 = vunpack.c.l.b16 %v3624
      %v3642 = vunpack.c.l.b16 %v3625
      %v3643 = vunpack.c.l.b16 %v3626
      %v3644 = vunpack.c.l.b16 %v3627
      %v3645 = vpack.c.b16 %v3641, %v3640
      %v3646 = vpack.c.b16 %v3643, %v3642
      %v3647 = vpack.c.b16 %v3644, %v3644
      %v3651 = vsel %vm1717, %v3607, 0
      %v3654 = vsel %vm1717, %v3608, 0
      %v3657 = vsel %vm1717, %v3609, 0
      %v3660 = vsel %vm1717, %v3610, 0
      %v3663 = vsel %vm1717, %v3611, 0
      %v3666 = vsel %vm1717, %v3612, 0
      %v3669 = vsel %vm1717, %v3613, 0
      %v3672 = vsel %vm1717, %v3614, 0
      %v3675 = vsel %vm1717, %v3615, 0
      %v3678 = vsel %vm1717, %v3616, 0
      %v3681 = vsel %vm1717, %v3617, 0
      %v3684 = vsel %vm1717, %v3618, 0
      %v3687 = vsel %vm1717, %v3619, 0
      %v3690 = vsel %vm1717, %v3620, 0
      %v3693 = vsel %vm1717, %v3621, 0
      %v3696 = vsel %vm1717, %v3622, 0
      %v3699 = vsel %vm1766, %v3647, 0
      %3701 = vmatprep.subr.bf16.mxu0 0
      %3702 = vmatpush1.bf16.msra.mxu0 %v3645
      %3703 = vmatprep.subr.bf16.mxu0 0
      %3704 = vmatpush1.bf16.msra.mxu0 %v3646
      %3705 = vmatprep.subr.bf16.mxu0 0
      %3706 = vmatpush1.bf16.msra.mxu0 %v3699
      %3707 = vmatprep.subr.bf16.mxu0 0
      %3708 = vmatpush1.bf16.msra.mxu0 0
      %3709 = vmatprep.subr.bf16.mxu0 0
      %3710 = vmatpush1.bf16.msra.mxu0 0
      %3711 = vmatprep.subr.bf16.mxu0 0
      %3712 = vmatpush1.bf16.msra.mxu0 0
      %3713 = vmatprep.subr.bf16.mxu0 0
      %3714 = vmatpush1.bf16.msra.mxu0 0
      %3715 = vmatprep.subr.bf16.mxu0 0
      %3716 = vmatpush1.bf16.msra.mxu0 0
      %3717 = vmatprep.subr.bf16.mxu0 0
      %3718 = vmatpush1.bf16.msra.mxu0 0
      %3719 = vmatprep.subr.bf16.mxu0 0
      %3720 = vmatpush1.bf16.msra.mxu0 0
      %3721 = vmatprep.subr.bf16.mxu0 0
      %3722 = vmatpush1.bf16.msra.mxu0 0
      %3723 = vmatprep.subr.bf16.mxu0 0
      %3724 = vmatpush1.bf16.msra.mxu0 0
      %3725 = vmatprep.subr.bf16.mxu0 0
      %3726 = vmatpush1.bf16.msra.mxu0 0
      %3727 = vmatprep.subr.bf16.mxu0 0
      %3728 = vmatpush1.bf16.msra.mxu0 0
      %3729 = vmatprep.subr.bf16.mxu0 0
      %3730 = vmatpush1.bf16.msra.mxu0 0
      %3731 = vmatprep.subr.bf16.mxu0 0
      %3732 = vmatpush1.bf16.msra.mxu0 0
      %3733 = vmatprep.mubr.bf16.mxu0 0
      %3734 = vmatmul.mubr.bf16.gmra.mrb[0].mxu0 %v3651
      %v3735 = vpop.f32.mrb[0].mxu0
      %v3736 = vadd.f32 %v3633, %v3735
      %v3737 = vpop.f32.mrb[0].mxu0
      %v3738 = vpop.f32.mrb[0].mxu0
      %v3739 = vadd.f32 %v3633, %v3738
      %v3740 = vpop.f32.mrb[0].mxu0
      %3741 = vmatprep.mubr.bf16.mxu0 0
      %3742 = vmatmul.mubr.bf16.gmra.mrb[0].mxu0 %v3654
      %v3743 = vpop.f32.mrb[0].mxu0
      %v3744 = vadd.f32 %v3633, %v3743
      %v3745 = vpop.f32.mrb[0].mxu0
      %v3746 = vpop.f32.mrb[0].mxu0
      %v3747 = vadd.f32 %v3633, %v3746
      %v3748 = vpop.f32.mrb[0].mxu0
      %3749 = vmatprep.mubr.bf16.mxu0 0
      %3750 = vmatmul.mubr.bf16.gmra.mrb[0].mxu0 %v3657
      %v3751 = vpop.f32.mrb[0].mxu0
      %v3752 = vadd.f32 %v3633, %v3751
      %v3753 = vpop.f32.mrb[0].mxu0
      %v3754 = vpop.f32.mrb[0].mxu0
      %v3755 = vadd.f32 %v3633, %v3754
      %v3756 = vpop.f32.mrb[0].mxu0
      %3757 = vmatprep.mubr.bf16.mxu0 0
      %3758 = vmatmul.mubr.bf16.gmra.mrb[0].mxu0 %v3660
      %v3759 = vpop.f32.mrb[0].mxu0
      %v3760 = vadd.f32 %v3633, %v3759
      %v3761 = vpop.f32.mrb[0].mxu0
      %v3762 = vpop.f32.mrb[0].mxu0
      %v3763 = vadd.f32 %v3633, %v3762
      %v3764 = vpop.f32.mrb[0].mxu0
      %3765 = vmatprep.mubr.bf16.mxu0 0
      %3766 = vmatmul.mubr.bf16.gmra.mrb[0].mxu0 %v3663
      %v3767 = vpop.f32.mrb[0].mxu0
      %v3768 = vadd.f32 %v3633, %v3767
      %v3769 = vpop.f32.mrb[0].mxu0
      %v3770 = vpop.f32.mrb[0].mxu0
      %v3771 = vadd.f32 %v3633, %v3770
      %v3772 = vpop.f32.mrb[0].mxu0
      %3773 = vmatprep.mubr.bf16.mxu0 0
      %3774 = vmatmul.mubr.bf16.gmra.mrb[0].mxu0 %v3666
      %v3775 = vpop.f32.mrb[0].mxu0
      %v3776 = vadd.f32 %v3633, %v3775
      %v3777 = vpop.f32.mrb[0].mxu0
      %v3778 = vpop.f32.mrb[0].mxu0
      %v3779 = vadd.f32 %v3633, %v3778
      %v3780 = vpop.f32.mrb[0].mxu0
      %3781 = vmatprep.mubr.bf16.mxu0 0
      %3782 = vmatmul.mubr.bf16.gmra.mrb[0].mxu0 %v3669
      %v3783 = vpop.f32.mrb[0].mxu0
      %v3784 = vadd.f32 %v3633, %v3783
      %v3785 = vpop.f32.mrb[0].mxu0
      %v3786 = vpop.f32.mrb[0].mxu0
      %v3787 = vadd.f32 %v3633, %v3786
      %v3788 = vpop.f32.mrb[0].mxu0
      %3789 = vmatprep.mubr.bf16.mxu0 0
      %3790 = vmatmul.mubr.bf16.gmra.mrb[0].mxu0 %v3672
      %v3791 = vpop.f32.mrb[0].mxu0
      %v3792 = vadd.f32 %v3633, %v3791
      %v3793 = vpop.f32.mrb[0].mxu0
      %v3794 = vpop.f32.mrb[0].mxu0
      %v3795 = vadd.f32 %v3633, %v3794
      %v3796 = vpop.f32.mrb[0].mxu0
      %3797 = vmatprep.mubr.bf16.mxu0 0
      %3798 = vmatmul.mubr.bf16.gmra.mrb[0].mxu0 %v3675
      %v3799 = vpop.f32.mrb[0].mxu0
      %v3800 = vadd.f32 %v3633, %v3799
      %v3801 = vpop.f32.mrb[0].mxu0
      %v3802 = vpop.f32.mrb[0].mxu0
      %v3803 = vadd.f32 %v3633, %v3802
      %v3804 = vpop.f32.mrb[0].mxu0
      %3805 = vmatprep.mubr.bf16.mxu0 0
      %3806 = vmatmul.mubr.bf16.gmra.mrb[0].mxu0 %v3678
      %v3807 = vpop.f32.mrb[0].mxu0
      %v3808 = vadd.f32 %v3633, %v3807
      %v3809 = vpop.f32.mrb[0].mxu0
      %v3810 = vpop.f32.mrb[0].mxu0
      %v3811 = vadd.f32 %v3633, %v3810
      %v3812 = vpop.f32.mrb[0].mxu0
      %3813 = vmatprep.mubr.bf16.mxu0 0
      %3814 = vmatmul.mubr.bf16.gmra.mrb[0].mxu0 %v3681
      %v3815 = vpop.f32.mrb[0].mxu0
      %v3816 = vadd.f32 %v3633, %v3815
      %v3817 = vpop.f32.mrb[0].mxu0
      %v3818 = vpop.f32.mrb[0].mxu0
      %v3819 = vadd.f32 %v3633, %v3818
      %v3820 = vpop.f32.mrb[0].mxu0
      %3821 = vmatprep.mubr.bf16.mxu0 0
      %3822 = vmatmul.mubr.bf16.gmra.mrb[0].mxu0 %v3684
      %v3823 = vpop.f32.mrb[0].mxu0
      %v3824 = vadd.f32 %v3633, %v3823
      %v3825 = vpop.f32.mrb[0].mxu0
      %v3826 = vpop.f32.mrb[0].mxu0
      %v3827 = vadd.f32 %v3633, %v3826
      %v3828 = vpop.f32.mrb[0].mxu0
      %3829 = vmatprep.mubr.bf16.mxu0 0
      %3830 = vmatmul.mubr.bf16.gmra.mrb[0].mxu0 %v3687
      %v3831 = vpop.f32.mrb[0].mxu0
      %v3832 = vadd.f32 %v3633, %v3831
      %v3833 = vpop.f32.mrb[0].mxu0
      %v3834 = vpop.f32.mrb[0].mxu0
      %v3835 = vadd.f32 %v3633, %v3834
      %v3836 = vpop.f32.mrb[0].mxu0
      %3837 = vmatprep.mubr.bf16.mxu0 0
      %3838 = vmatmul.mubr.bf16.gmra.mrb[0].mxu0 %v3690
      %v3839 = vpop.f32.mrb[0].mxu0
      %v3840 = vadd.f32 %v3633, %v3839
      %v3841 = vpop.f32.mrb[0].mxu0
      %v3842 = vpop.f32.mrb[0].mxu0
      %v3843 = vadd.f32 %v3633, %v3842
      %v3844 = vpop.f32.mrb[0].mxu0
      %3845 = vmatprep.mubr.bf16.mxu0 0
      %3846 = vmatmul.mubr.bf16.gmra.mrb[0].mxu0 %v3693
      %v3847 = vpop.f32.mrb[0].mxu0
      %v3848 = vadd.f32 %v3633, %v3847
      %v3849 = vpop.f32.mrb[0].mxu0
      %v3850 = vpop.f32.mrb[0].mxu0
      %v3851 = vadd.f32 %v3633, %v3850
      %v3852 = vpop.f32.mrb[0].mxu0
      %3853 = vmatprep.mubr.bf16.mxu0 0
      %3854 = vmatmul.mubr.bf16.gmra.mrb[0].mxu0 %v3696
      %v3855 = vpop.f32.mrb[0].mxu0
      %v3856 = vadd.f32 %v3633, %v3855
      %v3857 = vpop.f32.mrb[0].mxu0
      %v3858 = vpop.f32.mrb[0].mxu0
      %v3859 = vadd.f32 %v3633, %v3858
      %v3860 = vpop.f32.mrb[0].mxu0
      %3861 = vdwg.mxu0
      %v3862 = vsel %vm1414, %v3736, 0.0
      %v3863 = vsel %vm1414, %v3739, 0.0
      %v3864 = vadd.f32 %v3862, %v3863
      %v3865 = vsel %vm1414, %v3744, 0.0
      %v3866 = vadd.f32 %v3864, %v3865
      %v3867 = vsel %vm1414, %v3747, 0.0
      %v3868 = vadd.f32 %v3866, %v3867
      %v3869 = vsel %vm1414, %v3752, 0.0
      %v3870 = vadd.f32 %v3868, %v3869
      %v3871 = vsel %vm1414, %v3755, 0.0
      %v3872 = vadd.f32 %v3870, %v3871
      %v3873 = vsel %vm1414, %v3760, 0.0
      %v3874 = vadd.f32 %v3872, %v3873
      %v3875 = vsel %vm1414, %v3763, 0.0
      %v3876 = vadd.f32 %v3874, %v3875
      %v3877 = vsel %vm1414, %v3768, 0.0
      %v3878 = vadd.f32 %v3876, %v3877
      %v3879 = vsel %vm1414, %v3771, 0.0
      %v3880 = vadd.f32 %v3878, %v3879
      %v3881 = vsel %vm1414, %v3776, 0.0
      %v3882 = vadd.f32 %v3880, %v3881
      %v3883 = vsel %vm1414, %v3779, 0.0
      %v3884 = vadd.f32 %v3882, %v3883
      %v3885 = vsel %vm1414, %v3784, 0.0
      %v3886 = vadd.f32 %v3884, %v3885
      %v3887 = vsel %vm1414, %v3787, 0.0
      %v3888 = vadd.f32 %v3886, %v3887
      %v3889 = vsel %vm1414, %v3792, 0.0
      %v3890 = vadd.f32 %v3888, %v3889
      %v3891 = vsel %vm1414, %v3795, 0.0
      %v3892 = vadd.f32 %v3890, %v3891
      %v3893 = vsel %vm1414, %v3800, 0.0
      %v3894 = vadd.f32 %v3892, %v3893
      %v3895 = vsel %vm1414, %v3803, 0.0
      %v3896 = vadd.f32 %v3894, %v3895
      %v3897 = vsel %vm1414, %v3808, 0.0
      %v3898 = vadd.f32 %v3896, %v3897
      %v3899 = vsel %vm1414, %v3811, 0.0
      %v3900 = vadd.f32 %v3898, %v3899
      %v3901 = vsel %vm1414, %v3816, 0.0
      %v3902 = vadd.f32 %v3900, %v3901
      %v3903 = vsel %vm1414, %v3819, 0.0
      %v3904 = vadd.f32 %v3902, %v3903
      %v3905 = vsel %vm1414, %v3824, 0.0
      %v3906 = vadd.f32 %v3904, %v3905
      %v3907 = vsel %vm1414, %v3827, 0.0
      %v3908 = vadd.f32 %v3906, %v3907
      %v3909 = vsel %vm1414, %v3832, 0.0
      %v3910 = vadd.f32 %v3908, %v3909
      %v3911 = vsel %vm1414, %v3835, 0.0
      %v3912 = vadd.f32 %v3910, %v3911
      %v3913 = vsel %vm1414, %v3840, 0.0
      %v3914 = vadd.f32 %v3912, %v3913
      %v3915 = vsel %vm1414, %v3843, 0.0
      %v3916 = vadd.f32 %v3914, %v3915
      %v3917 = vsel %vm1414, %v3848, 0.0
      %v3918 = vadd.f32 %v3916, %v3917
      %v3919 = vsel %vm1414, %v3851, 0.0
      %v3920 = vadd.f32 %v3918, %v3919
      %v3921 = vsel %vm1414, %v3856, 0.0
      %v3922 = vadd.f32 %v3920, %v3921
      %v3923 = vsel %vm1414, %v3859, 0.0
      %v3924 = vadd.f32 %v3922, %v3923
      %v3925 = vrot.slane %v3924, 4
      %v3926 = vadd.f32 %v3924, %v3925
      %v3927 = vrot.slane %v3926, 2
      %v3928 = vadd.f32 %v3926, %v3927
      %v3929 = vrot.slane %v3928, 1
      %v3930 = vadd.f32 %v3928, %v3929
      %v3931 = vmul.f32 %v3930, %v2000
      %v3932 = vsub.f32 %v3736, %v3931
      %v3933 = vsub.f32 %v3739, %v3931
      %v3934 = vsub.f32 %v3744, %v3931
      %v3935 = vsub.f32 %v3747, %v3931
      %v3936 = vsub.f32 %v3752, %v3931
      %v3937 = vsub.f32 %v3755, %v3931
      %v3938 = vsub.f32 %v3760, %v3931
      %v3939 = vsub.f32 %v3763, %v3931
      %v3940 = vsub.f32 %v3768, %v3931
      %v3941 = vsub.f32 %v3771, %v3931
      %v3942 = vsub.f32 %v3776, %v3931
      %v3943 = vsub.f32 %v3779, %v3931
      %v3944 = vsub.f32 %v3784, %v3931
      %v3945 = vsub.f32 %v3787, %v3931
      %v3946 = vsub.f32 %v3792, %v3931
      %v3947 = vsub.f32 %v3795, %v3931
      %v3948 = vsub.f32 %v3800, %v3931
      %v3949 = vsub.f32 %v3803, %v3931
      %v3950 = vsub.f32 %v3808, %v3931
      %v3951 = vsub.f32 %v3811, %v3931
      %v3952 = vsub.f32 %v3816, %v3931
      %v3953 = vsub.f32 %v3819, %v3931
      %v3954 = vsub.f32 %v3824, %v3931
      %v3955 = vsub.f32 %v3827, %v3931
      %v3956 = vsub.f32 %v3832, %v3931
      %v3957 = vsub.f32 %v3835, %v3931
      %v3958 = vsub.f32 %v3840, %v3931
      %v3959 = vsub.f32 %v3843, %v3931
      %v3960 = vsub.f32 %v3848, %v3931
      %v3961 = vsub.f32 %v3851, %v3931
      %v3962 = vsub.f32 %v3856, %v3931
      %v3963 = vsub.f32 %v3859, %v3931
      %v3964 = vmul.f32 %v3932, %v3932
      %v3965 = vmul.f32 %v3933, %v3933
      %v3966 = vmul.f32 %v3934, %v3934
      %v3967 = vmul.f32 %v3935, %v3935
      %v3968 = vmul.f32 %v3936, %v3936
      %v3969 = vmul.f32 %v3937, %v3937
      %v3970 = vmul.f32 %v3938, %v3938
      %v3971 = vmul.f32 %v3939, %v3939
      %v3972 = vmul.f32 %v3940, %v3940
      %v3973 = vmul.f32 %v3941, %v3941
      %v3974 = vmul.f32 %v3942, %v3942
      %v3975 = vmul.f32 %v3943, %v3943
      %v3976 = vmul.f32 %v3944, %v3944
      %v3977 = vmul.f32 %v3945, %v3945
      %v3978 = vmul.f32 %v3946, %v3946
      %v3979 = vmul.f32 %v3947, %v3947
      %v3980 = vmul.f32 %v3948, %v3948
      %v3981 = vmul.f32 %v3949, %v3949
      %v3982 = vmul.f32 %v3950, %v3950
      %v3983 = vmul.f32 %v3951, %v3951
      %v3984 = vmul.f32 %v3952, %v3952
      %v3985 = vmul.f32 %v3953, %v3953
      %v3986 = vmul.f32 %v3954, %v3954
      %v3987 = vmul.f32 %v3955, %v3955
      %v3988 = vmul.f32 %v3956, %v3956
      %v3989 = vmul.f32 %v3957, %v3957
      %v3990 = vmul.f32 %v3958, %v3958
      %v3991 = vmul.f32 %v3959, %v3959
      %v3992 = vmul.f32 %v3960, %v3960
      %v3993 = vmul.f32 %v3961, %v3961
      %v3994 = vmul.f32 %v3962, %v3962
      %v3995 = vmul.f32 %v3963, %v3963
      %v3996 = vsel %vm1414, %v3964, 0.0
      %v3997 = vsel %vm1414, %v3965, 0.0
      %v3998 = vadd.f32 %v3996, %v3997
      %v3999 = vsel %vm1414, %v3966, 0.0
      %v4000 = vadd.f32 %v3998, %v3999
      %v4001 = vsel %vm1414, %v3967, 0.0
      %v4002 = vadd.f32 %v4000, %v4001
      %v4003 = vsel %vm1414, %v3968, 0.0
      %v4004 = vadd.f32 %v4002, %v4003
      %v4005 = vsel %vm1414, %v3969, 0.0
      %v4006 = vadd.f32 %v4004, %v4005
      %v4007 = vsel %vm1414, %v3970, 0.0
      %v4008 = vadd.f32 %v4006, %v4007
      %v4009 = vsel %vm1414, %v3971, 0.0
      %v4010 = vadd.f32 %v4008, %v4009
      %v4011 = vsel %vm1414, %v3972, 0.0
      %v4012 = vadd.f32 %v4010, %v4011
      %v4013 = vsel %vm1414, %v3973, 0.0
      %v4014 = vadd.f32 %v4012, %v4013
      %v4015 = vsel %vm1414, %v3974, 0.0
      %v4016 = vadd.f32 %v4014, %v4015
      %v4017 = vsel %vm1414, %v3975, 0.0
      %v4018 = vadd.f32 %v4016, %v4017
      %v4019 = vsel %vm1414, %v3976, 0.0
      %v4020 = vadd.f32 %v4018, %v4019
      %v4021 = vsel %vm1414, %v3977, 0.0
      %v4022 = vadd.f32 %v4020, %v4021
      %v4023 = vsel %vm1414, %v3978, 0.0
      %v4024 = vadd.f32 %v4022, %v4023
      %v4025 = vsel %vm1414, %v3979, 0.0
      %v4026 = vadd.f32 %v4024, %v4025
      %v4027 = vsel %vm1414, %v3980, 0.0
      %v4028 = vadd.f32 %v4026, %v4027
      %v4029 = vsel %vm1414, %v3981, 0.0
      %v4030 = vadd.f32 %v4028, %v4029
      %v4031 = vsel %vm1414, %v3982, 0.0
      %v4032 = vadd.f32 %v4030, %v4031
      %v4033 = vsel %vm1414, %v3983, 0.0
      %v4034 = vadd.f32 %v4032, %v4033
      %v4035 = vsel %vm1414, %v3984, 0.0
      %v4036 = vadd.f32 %v4034, %v4035
      %v4037 = vsel %vm1414, %v3985, 0.0
      %v4038 = vadd.f32 %v4036, %v4037
      %v4039 = vsel %vm1414, %v3986, 0.0
      %v4040 = vadd.f32 %v4038, %v4039
      %v4041 = vsel %vm1414, %v3987, 0.0
      %v4042 = vadd.f32 %v4040, %v4041
      %v4043 = vsel %vm1414, %v3988, 0.0
      %v4044 = vadd.f32 %v4042, %v4043
      %v4045 = vsel %vm1414, %v3989, 0.0
      %v4046 = vadd.f32 %v4044, %v4045
      %v4047 = vsel %vm1414, %v3990, 0.0
      %v4048 = vadd.f32 %v4046, %v4047
      %v4049 = vsel %vm1414, %v3991, 0.0
      %v4050 = vadd.f32 %v4048, %v4049
      %v4051 = vsel %vm1414, %v3992, 0.0
      %v4052 = vadd.f32 %v4050, %v4051
      %v4053 = vsel %vm1414, %v3993, 0.0
      %v4054 = vadd.f32 %v4052, %v4053
      %v4055 = vsel %vm1414, %v3994, 0.0
      %v4056 = vadd.f32 %v4054, %v4055
      %v4057 = vsel %vm1414, %v3995, 0.0
      %v4058 = vadd.f32 %v4056, %v4057
      %v4059 = vrot.slane %v4058, 4
      %v4060 = vadd.f32 %v4058, %v4059
      %v4061 = vrot.slane %v4060, 2
      %v4062 = vadd.f32 %v4060, %v4061
      %v4063 = vrot.slane %v4062, 1
      %v4064 = vadd.f32 %v4062, %v4063
      %v4065 = vmul.f32 %v4064, %v2000
      %v4066 = vadd.f32 %v4065, 1e-05
      %v4067 = vrsqrt.pop %v4066
      %v4068 = vmul.f32 %v3932, %v4067
      %v4069 = vmul.f32 %v3933, %v4067
      %v4070 = vmul.f32 %v3934, %v4067
      %v4071 = vmul.f32 %v3935, %v4067
      %v4072 = vmul.f32 %v3936, %v4067
      %v4073 = vmul.f32 %v3937, %v4067
      %v4074 = vmul.f32 %v3938, %v4067
      %v4075 = vmul.f32 %v3939, %v4067
      %v4076 = vmul.f32 %v3940, %v4067
      %v4077 = vmul.f32 %v3941, %v4067
      %v4078 = vmul.f32 %v3942, %v4067
      %v4079 = vmul.f32 %v3943, %v4067
      %v4080 = vmul.f32 %v3944, %v4067
      %v4081 = vmul.f32 %v3945, %v4067
      %v4082 = vmul.f32 %v3946, %v4067
      %v4083 = vmul.f32 %v3947, %v4067
      %v4084 = vmul.f32 %v3948, %v4067
      %v4085 = vmul.f32 %v3949, %v4067
      %v4086 = vmul.f32 %v3950, %v4067
      %v4087 = vmul.f32 %v3951, %v4067
      %v4088 = vmul.f32 %v3952, %v4067
      %v4089 = vmul.f32 %v3953, %v4067
      %v4090 = vmul.f32 %v3954, %v4067
      %v4091 = vmul.f32 %v3955, %v4067
      %v4092 = vmul.f32 %v3956, %v4067
      %v4093 = vmul.f32 %v3957, %v4067
      %v4094 = vmul.f32 %v3958, %v4067
      %v4095 = vmul.f32 %v3959, %v4067
      %v4096 = vmul.f32 %v3960, %v4067
      %v4097 = vmul.f32 %v3961, %v4067
      %v4098 = vmul.f32 %v3962, %v4067
      %v4099 = vmul.f32 %v3963, %v4067
      %v4100 = vadd.f32 %v226, %v4068
      %v4101 = vadd.f32 %v227, %v4069
      %v4102 = vadd.f32 %v228, %v4070
      %v4103 = vadd.f32 %v229, %v4071
      %v4104 = vadd.f32 %v230, %v4072
      %v4105 = vadd.f32 %v231, %v4073
      %v4106 = vadd.f32 %v232, %v4074
      %v4107 = vadd.f32 %v233, %v4075
      %v4108 = vadd.f32 %v234, %v4076
      %v4109 = vadd.f32 %v235, %v4077
      %v4110 = vadd.f32 %v236, %v4078
      %v4111 = vadd.f32 %v237, %v4079
      %v4112 = vadd.f32 %v238, %v4080
      %v4113 = vadd.f32 %v239, %v4081
      %v4114 = vadd.f32 %v240, %v4082
      %v4115 = vadd.f32 %v241, %v4083
      %v4116 = vadd.f32 %v242, %v4084
      %v4117 = vadd.f32 %v243, %v4085
      %v4118 = vadd.f32 %v244, %v4086
      %v4119 = vadd.f32 %v245, %v4087
      %v4120 = vadd.f32 %v246, %v4088
      %v4121 = vadd.f32 %v247, %v4089
      %v4122 = vadd.f32 %v248, %v4090
      %v4123 = vadd.f32 %v249, %v4091
      %v4124 = vadd.f32 %v250, %v4092
      %v4125 = vadd.f32 %v251, %v4093
      %v4126 = vadd.f32 %v252, %v4094
      %v4127 = vadd.f32 %v253, %v4095
      %v4128 = vadd.f32 %v254, %v4096
      %v4129 = vadd.f32 %v255, %v4097
      %v4130 = vadd.f32 %v256, %v4098
      %v4131 = vadd.f32 %v257, %v4099
      %4132 = vst.msk [vmem:[%s224] sm:$0xff] %vm1414, %v4100
      %4133 = vst.msk [vmem:[%s224 + $0x8] sm:$0xff] %vm1414, %v4101
      %4134 = vst.msk [vmem:[%s224 + $0x10] sm:$0xff] %vm1414, %v4102
      %4135 = vst.msk [vmem:[%s224 + $0x18] sm:$0xff] %vm1414, %v4103
      %4136 = vst.msk [vmem:[%s224 + $0x20] sm:$0xff] %vm1414, %v4104
      %4137 = vst.msk [vmem:[%s224 + $0x28] sm:$0xff] %vm1414, %v4105
      %4138 = vst.msk [vmem:[%s224 + $0x30] sm:$0xff] %vm1414, %v4106
      %4139 = vst.msk [vmem:[%s224 + $0x38] sm:$0xff] %vm1414, %v4107
      %4140 = vst.msk [vmem:[%s224 + $0x40] sm:$0xff] %vm1414, %v4108
      %4141 = vst.msk [vmem:[%s224 + $0x48] sm:$0xff] %vm1414, %v4109
      %4142 = vst.msk [vmem:[%s224 + $0x50] sm:$0xff] %vm1414, %v4110
      %4143 = vst.msk [vmem:[%s224 + $0x58] sm:$0xff] %vm1414, %v4111
      %4144 = vst.msk [vmem:[%s224 + $0x60] sm:$0xff] %vm1414, %v4112
      %4145 = vst.msk [vmem:[%s224 + $0x68] sm:$0xff] %vm1414, %v4113
      %4146 = vst.msk [vmem:[%s224 + $0x70] sm:$0xff] %vm1414, %v4114
      %4147 = vst.msk [vmem:[%s224 + $0x78] sm:$0xff] %vm1414, %v4115
      %4148 = vst.msk [vmem:[%s224 + $0x80] sm:$0xff] %vm1414, %v4116
      %4149 = vst.msk [vmem:[%s224 + $0x88] sm:$0xff] %vm1414, %v4117
      %4150 = vst.msk [vmem:[%s224 + $0x90] sm:$0xff] %vm1414, %v4118
      %4151 = vst.msk [vmem:[%s224 + $0x98] sm:$0xff] %vm1414, %v4119
      %4152 = vst.msk [vmem:[%s224 + $0xa0] sm:$0xff] %vm1414, %v4120
      %4153 = vst.msk [vmem:[%s224 + $0xa8] sm:$0xff] %vm1414, %v4121
      %4154 = vst.msk [vmem:[%s224 + $0xb0] sm:$0xff] %vm1414, %v4122
      %4155 = vst.msk [vmem:[%s224 + $0xb8] sm:$0xff] %vm1414, %v4123
      %4156 = vst.msk [vmem:[%s224 + $0xc0] sm:$0xff] %vm1414, %v4124
      %4157 = vst.msk [vmem:[%s224 + $0xc8] sm:$0xff] %vm1414, %v4125
      %4158 = vst.msk [vmem:[%s224 + $0xd0] sm:$0xff] %vm1414, %v4126
      %4159 = vst.msk [vmem:[%s224 + $0xd8] sm:$0xff] %vm1414, %v4127
      %4160 = vst.msk [vmem:[%s224 + $0xe0] sm:$0xff] %vm1414, %v4128
      %4161 = vst.msk [vmem:[%s224 + $0xe8] sm:$0xff] %vm1414, %v4129
      %4162 = vst.msk [vmem:[%s224 + $0xf0] sm:$0xff] %vm1414, %v4130
      %4163 = vst.msk [vmem:[%s224 + $0xf8] sm:$0xff] %vm1414, %v4131
      %p4164 = scmp.lt.s32.totalorder %s16, 1
      %s4165 = scalar_select %p4164, %s16, 1
      %s4166 = smul.addr %s4165, 32
      %s4167 = smul.addr %s4166, 8
      %s4168 = scalar_lea.vmem %s5, %s4167
      // Predicated region
      $region41: #{tpu_custom_call.1} parent=39 // pred_check
        %p4169 = pneg %p144
      $region42: #{tpu_custom_call.1} parent=39 // pred_check_branch
        %4171 = sbr.rel (%p4169) target = $region44
      $region43: #{tpu_custom_call.1} parent=39 // pred_region
        _
      $region44: #{tpu_custom_call.1} parent=39 // pred_fallthru
        _
    $region40: #{tpu_custom_call.1} parent=5 // pred_fallthru
      _
    %p4172 = scmp.le.s32.totalorder 2, %s11
    // Predicated region
    $region45: #{tpu_custom_call.1} parent=5 // pred_check
      %p4173 = pneg %p4172
    $region46: #{tpu_custom_call.1} parent=5 // pred_check_branch
      %4175 = sbr.rel (%p4173) target = $region48
    $region47: #{tpu_custom_call.1} parent=5 // pred_region
      %s4176 = ssub.s32 %s11, 2
      // Predicated region
      $region49: #{tpu_custom_call.1} parent=47 // pred_check
        %p4177 = pneg %p150
      $region50: #{tpu_custom_call.1} parent=47 // pred_check_branch
        %4179 = sbr.rel (%p4177) target = $region52
      $region51: #{tpu_custom_call.1} parent=47 // pred_region
        %p4180 = scmp.lt.s32.totalorder %s17, 1
        %s4181 = scalar_select %p4180, %s17, 1
        %s4182 = smul.addr %s4181, 32
        %s4183 = smul.addr %s4182, 8
        %s4184 = scalar_lea.vmem %s5, %s4183
      $region52: #{tpu_custom_call.1} parent=47 // pred_fallthru
        _
    $region48: #{tpu_custom_call.1} parent=5 // pred_fallthru
      _
  $region6: #{tpu_custom_call.1} parent=0 // loop_footer
    %s15 = sadd.s32 1, %s11
  $region7: #{tpu_custom_call.1} parent=0 // loop_footer_branch
    %10 = sbr.rel target = $region3
  $region8: #{tpu_custom_call.1} parent=0 // loop_exit
    _

</llo_original>
